<compile_context>
chip_gen: v7x
topology: tpu7x:2x2x1
jax: 0.10.0
libtpu: 0.0.40
codegen_flags: <defaults>
</compile_context>

<pallas_src>
import jax
import jax.numpy as jnp
from jax.experimental import pallas as pl

# ----------------------------- config (small) --------------------------------
B, C, H, W = 2, 3, 16, 16
PATCH = 4
NP = (H // PATCH) * (W // PATCH)        # 16 patches
N = NP + 1                              # +1 cls token = 17
BN = B * N                              # 34 folded rows
BNP = B * NP                            # 32 folded patch rows
D = 32                                  # embed dim
HEADS = 4
DH = D // HEADS
DEPTH = 2
MLP = 4 * D                             # 128
NUM_CLASSES = 3
HEAD_PAD = 128                          # lane-dense padded head output width
KDIM = C * PATCH * PATCH                # 48
EPS = 1e-6
NEG = -1e30


# ------------------------------ kernel ----------------------------------------
def _layernorm(t, w, b):
    mu = jnp.mean(t, axis=-1, keepdims=True)
    var = jnp.mean(jnp.square(t - mu), axis=-1, keepdims=True)
    return (t - mu) * jax.lax.rsqrt(var + EPS) * w + b


def vit_kernel(p_ref, clspos_ref, pw_ref, wqkv_ref, wproj_ref, wf1_ref, wf2_ref,
               vecs_ref, hw_ref, misc_ref, out_ref):
    # ---- cross-batch attention mask (built once, reused by both blocks) ----
    ri = jax.lax.broadcasted_iota(jnp.int32, (BN, BN), 0)
    ci = jax.lax.broadcasted_iota(jnp.int32, (BN, BN), 1)
    mask = jnp.where((ri >= N) == (ci >= N), 0.0, NEG).astype(jnp.float32)   # (BN, BN)
    mask_stack = jnp.concatenate([mask] * HEADS, axis=0)                     # (HEADS*BN, BN)

    # ---- patch embedding + cls token + positional embedding (pre-combined) ----
    tok = jnp.dot(p_ref[...].astype(jnp.bfloat16), pw_ref[...],
                  preferred_element_type=jnp.float32)                        # (BNP, D)
    zero = jnp.zeros((1, D), jnp.float32)
    x = jnp.concatenate([zero, tok[:NP], zero, tok[NP:]], axis=0) + clspos_ref[...]  # (BN, D)

    # ---- transformer blocks (DEPTH=2, unrolled) ----
    for blk in range(DEPTH):
        vblk = vecs_ref[blk]                               # (8, 128) param slab
        ln1w = vblk[0:1, :D]; ln1b = vblk[1:2, :D]
        bqkv = vblk[2:3, :3 * D]
        bpr = vblk[3:4, :D]
        ln2w = vblk[4:5, :D]; ln2b = vblk[5:6, :D]
        bf1 = vblk[6:7, :MLP]
        bf2 = vblk[7:8, :D]

        # ---- multi-head self-attention ----
        h1 = _layernorm(x, ln1w, ln1b)                                        # (BN, D)
        qkv = jnp.dot(h1.astype(jnp.bfloat16), wqkv_ref[blk],
                      preferred_element_type=jnp.float32) + bqkv              # (BN, 3D)
        q = qkv[:, 0:D]
        k = qkv[:, D:2 * D]
        v = qkv[:, 2 * D:3 * D]

        # per-head scores, sublane-stacked; one batched softmax over all heads
        s_parts = []
        for hd in range(HEADS):
            qh = q[:, hd * DH:(hd + 1) * DH]
            kh = k[:, hd * DH:(hd + 1) * DH]
            s_parts.append(jax.lax.dot_general(
                qh, kh, (((1,), (1,)), ((), ())),
                preferred_element_type=jnp.float32))                          # (BN, BN)
        s = jnp.concatenate(s_parts, axis=0) + mask_stack                     # (HEADS*BN, BN)
        s = s - jnp.max(s, axis=-1, keepdims=True)
        e = jnp.exp(s)
        a = e * pl.reciprocal(jnp.sum(e, axis=-1, keepdims=True), approx=True)

        # per-head attention output, lane-concat, single output projection
        o_parts = []
        for hd in range(HEADS):
            ah = a[hd * BN:(hd + 1) * BN, :]
            vh = v[:, hd * DH:(hd + 1) * DH]
            o_parts.append(jnp.dot(ah.astype(jnp.bfloat16), vh.astype(jnp.bfloat16),
                                   preferred_element_type=jnp.float32))       # (BN, DH)
        o = jnp.concatenate(o_parts, axis=1)                                  # (BN, D)
        x = x + jnp.dot(o.astype(jnp.bfloat16), wproj_ref[blk],
                        preferred_element_type=jnp.float32) + bpr

        # ---- MLP ----
        h2 = _layernorm(x, ln2w, ln2b)
        h2 = jnp.dot(h2.astype(jnp.bfloat16), wf1_ref[blk],
                     preferred_element_type=jnp.float32) + bf1
        h2 = jax.nn.gelu(h2, approximate=True)   # TODO(synk): timm convit uses exact erf GELU
        h2 = jnp.dot(h2.astype(jnp.bfloat16), wf2_ref[blk],
                     preferred_element_type=jnp.float32) + bf2
        x = x + h2

    # ---- head: final LayerNorm on cls tokens + Linear(D -> NUM_CLASSES, lane-padded) ----
    lnfw = misc_ref[0:1, :D]
    lnfb = misc_ref[1:2, :D]
    head_b = misc_ref[2:3, :]
    cls_tok = jnp.concatenate([x[0:1, :], x[N:N + 1, :]], axis=0)             # (B, D)
    cls_tok = _layernorm(cls_tok, lnfw, lnfb)
    out_ref[...] = jnp.dot(cls_tok.astype(jnp.bfloat16), hw_ref[...],
                           preferred_element_type=jnp.float32) + head_b       # (B, HEAD_PAD)


# ------------------------------ wrapper ----------------------------------------
@jax.jit
def vit_forward(x, kp):
    # x: NCHW float32 [B, C, H, W]
    hp, wp_ = H // PATCH, W // PATCH
    # non-overlapping patches, flattened in (C, ph, pw) order (matches Conv2d weight layout)
    p = x.reshape(B, C, hp, PATCH, wp_, PATCH)
    p = p.transpose(0, 2, 4, 1, 3, 5).reshape(BNP, KDIM)

    out = pl.pallas_call(
        vit_kernel,
        out_shape=jax.ShapeDtypeStruct((B, HEAD_PAD), jnp.float32),
    )(p, kp["cls_pos"], kp["patch_w"], kp["wqkv"], kp["wproj"],
      kp["wf1"], kp["wf2"], kp["vecs"], kp["head_w"], kp["misc"])
    return out[:, :NUM_CLASSES]


# ------------------------------ params ----------------------------------------
def init_params(key):
    def nrm(k, shape, std=0.02):
        return (std * jax.random.normal(k, shape)).astype(jnp.float32)

    keys = iter(jax.random.split(key, 64))
    params = {
        "patch_w": nrm(next(keys), (KDIM, D)),      # conv weight, reshaped (D,C,p,p)->(K,D)
        "patch_b": jnp.zeros((1, D), jnp.float32),
        "cls": nrm(next(keys), (1, D)),
        "pos": nrm(next(keys), (N, D)),
        "ln_w": jnp.ones((1, D), jnp.float32),
        "ln_b": jnp.zeros((1, D), jnp.float32),
        "head_w": nrm(next(keys), (D, NUM_CLASSES)),
        "head_b": jnp.zeros((1, NUM_CLASSES), jnp.float32),
        "blocks": [],
    }
    for _ in range(DEPTH):
        blk = (
            jnp.ones((1, D), jnp.float32),            # ln1 w
            jnp.zeros((1, D), jnp.float32),           # ln1 b
            nrm(next(keys), (D, 3 * D)),              # qkv w  [q | k | v]
            jnp.zeros((1, 3 * D), jnp.float32),       # qkv b
            nrm(next(keys), (D, D)),                  # proj w
            jnp.zeros((1, D), jnp.float32),           # proj b
            jnp.ones((1, D), jnp.float32),            # ln2 w
            jnp.zeros((1, D), jnp.float32),           # ln2 b
            nrm(next(keys), (D, MLP)),                # fc1 w
            jnp.zeros((1, MLP), jnp.float32),         # fc1 b
            nrm(next(keys), (MLP, D)),                # fc2 w
            jnp.zeros((1, D), jnp.float32),           # fc2 b
        )
        params["blocks"].append(blk)
    return params


def prepare_kernel_params(p):
    """Reorganize standard ViT params into the fused-kernel layout:
    DEPTH-stacked bf16 weight slabs, the attention scale folded into the q
    columns of wqkv, all LN weights / biases packed into one (DEPTH, 8, 128)
    f32 slab, cls + pos + patch-bias pre-combined into one (B*N, D) additive
    slab, and lane-padded head weights.  Done once, outside the kernel."""
    scale = 1.0 / (DH ** 0.5)
    wqkv_l, wproj_l, wf1_l, wf2_l, vecs_l = [], [], [], [], []
    for blk in p["blocks"]:
        (l1w, l1b, wqkv, bqkv, wp, bp, l2w, l2b, f1w, f1b, f2w, f2b) = blk
        # fold 1/sqrt(DH) into the q columns (exact; softmax is shift-invariant otherwise)
        wqkv = wqkv.at[:, :D].multiply(scale)
        bqkv = bqkv.at[:, :D].multiply(scale)
        wqkv_l.append(wqkv.astype(jnp.bfloat16))
        wproj_l.append(wp.astype(jnp.bfloat16))
        wf1_l.append(f1w.astype(jnp.bfloat16))
        wf2_l.append(f2w.astype(jnp.bfloat16))
        vec = jnp.zeros((8, 128), jnp.float32)
        vec = vec.at[0, :D].set(l1w[0])
        vec = vec.at[1, :D].set(l1b[0])
        vec = vec.at[2, :3 * D].set(bqkv[0])
        vec = vec.at[3, :D].set(bp[0])
        vec = vec.at[4, :D].set(l2w[0])
        vec = vec.at[5, :D].set(l2b[0])
        vec = vec.at[6, :MLP].set(f1b[0])
        vec = vec.at[7, :D].set(f2b[0])
        vecs_l.append(vec)

    # cls token + positional embedding + patch-embed bias, pre-combined per folded row
    pos_b = jnp.tile(p["pos"], (B, 1))                                            # (BN, D)
    cls_rows = jnp.tile(jnp.concatenate([p["cls"], jnp.zeros((NP, D), jnp.float32)], 0), (B, 1))
    pbias_rows = jnp.tile(jnp.concatenate(
        [jnp.zeros((1, D), jnp.float32), jnp.tile(p["patch_b"], (NP, 1))], 0), (B, 1))
    cls_pos = (pos_b + cls_rows + pbias_rows).astype(jnp.float32)                 # (BN, D)

    head_w = jnp.zeros((D, HEAD_PAD), jnp.float32).at[:, :NUM_CLASSES].set(p["head_w"])
    misc = jnp.zeros((3, HEAD_PAD), jnp.float32)
    misc = misc.at[0, :D].set(p["ln_w"][0])
    misc = misc.at[1, :D].set(p["ln_b"][0])
    misc = misc.at[2, :NUM_CLASSES].set(p["head_b"][0])

    return dict(
        cls_pos=cls_pos,
        patch_w=p["patch_w"].astype(jnp.bfloat16),
        wqkv=jnp.stack(wqkv_l), wproj=jnp.stack(wproj_l),
        wf1=jnp.stack(wf1_l), wf2=jnp.stack(wf2_l),
        vecs=jnp.stack(vecs_l),
        head_w=head_w.astype(jnp.bfloat16),
        misc=misc)


if __name__ == "__main__":
    key = jax.random.PRNGKey(0)
    kx, kp = jax.random.split(key)
    x = jax.random.normal(kx, (B, C, H, W), dtype=jnp.float32)
    params = init_params(kp)
    kparams = prepare_kernel_params(params)

    out = vit_forward(x, kparams)
    out = jax.block_until_ready(out)

    assert out.shape == (B, NUM_CLASSES), out.shape
    assert bool(jnp.all(jnp.isfinite(out)))
    print("KERNEL_OK")
</pallas_src>

<mosaic_0001>
module attributes {stable_mosaic.version = 11 : i64} {
  func.func @vit_kernel(%arg0: memref<32x48xf32, #tpu.memory_space<vmem>>, %arg1: memref<34x32xf32, #tpu.memory_space<vmem>>, %arg2: memref<48x32xbf16, #tpu.memory_space<vmem>>, %arg3: memref<2x32x96xbf16, #tpu.memory_space<vmem>>, %arg4: memref<2x32x32xbf16, #tpu.memory_space<vmem>>, %arg5: memref<2x32x128xbf16, #tpu.memory_space<vmem>>, %arg6: memref<2x128x32xbf16, #tpu.memory_space<vmem>>, %arg7: memref<2x8x128xf32, #tpu.memory_space<vmem>>, %arg8: memref<32x128xbf16, #tpu.memory_space<vmem>>, %arg9: memref<3x128xf32, #tpu.memory_space<vmem>>, %arg10: memref<2x128xf32, #tpu.memory_space<vmem>>) attributes {dimension_semantics = [], scalar_prefetch = 0 : i64, scratch_operands = 0 : i64, tpu.core_type = #tpu.core_type<tc>} {
    %0 = tpu.iota {dimensions = array<i32: 0>} : vector<34x34xi32>
    %1 = tpu.iota {dimensions = array<i32: 1>} : vector<34x34xi32>
    %c17_i32 = arith.constant 17 : i32
    %2 = vector.broadcast %c17_i32 : i32 to vector<34x34xi32>
    %3 = arith.cmpi sge, %0, %2 : vector<34x34xi32>
    %c17_i32_0 = arith.constant 17 : i32
    %4 = vector.broadcast %c17_i32_0 : i32 to vector<34x34xi32>
    %5 = arith.cmpi sge, %1, %4 : vector<34x34xi32>
    %6 = arith.xori %3, %5 : vector<34x34xi1>
    %cst = arith.constant dense<true> : vector<34x34xi1>
    %7 = arith.xori %6, %cst : vector<34x34xi1>
    %cst_1 = arith.constant 0.000000e+00 : f32
    %cst_2 = arith.constant -1.000000e+30 : f32
    %8 = vector.broadcast %cst_1 : f32 to vector<34x34xf32>
    %9 = vector.broadcast %cst_2 : f32 to vector<34x34xf32>
    %10 = arith.select %7, %8, %9 : vector<34x34xi1>, vector<34x34xf32>
    %11 = tpu.concatenate %10, %10, %10, %10 in 0 : vector<34x34xf32>, vector<34x34xf32>, vector<34x34xf32>, vector<34x34xf32> -> vector<136x34xf32>
    %c0 = arith.constant 0 : index
    %c0_3 = arith.constant 0 : index
    %12 = vector.load %arg0[%c0, %c0_3] : memref<32x48xf32, #tpu.memory_space<vmem>>, vector<32x48xf32>
    %13 = arith.truncf %12 : vector<32x48xf32> to vector<32x48xbf16>
    %c0_4 = arith.constant 0 : index
    %c0_5 = arith.constant 0 : index
    %14 = vector.load %arg2[%c0_4, %c0_5] : memref<48x32xbf16, #tpu.memory_space<vmem>>, vector<48x32xbf16>
    %cst_6 = arith.constant dense<0.000000e+00> : vector<32x32xf32>
    %15 = tpu.matmul %13, %14, %cst_6 {dimension_numbers = #tpu.dot_dimension_numbers<[1], [0], [0], [1], [0, 0, 1, 1], [], []>} : vector<32x48xbf16>, vector<48x32xbf16>, vector<32x32xf32> -> vector<32x32xf32>
    %cst_7 = arith.constant 0.000000e+00 : f32
    %16 = vector.broadcast %cst_7 : f32 to vector<1x32xf32>
    %17 = vector.extract_strided_slice %15 {offsets = [0, 0], sizes = [16, 32], strides = [1, 1]} : vector<32x32xf32> to vector<16x32xf32>
    %18 = vector.extract_strided_slice %15 {offsets = [16, 0], sizes = [16, 32], strides = [1, 1]} : vector<32x32xf32> to vector<16x32xf32>
    %19 = tpu.concatenate %16, %17, %16, %18 in 0 : vector<1x32xf32>, vector<16x32xf32>, vector<1x32xf32>, vector<16x32xf32> -> vector<34x32xf32>
    %c0_8 = arith.constant 0 : index
    %c0_9 = arith.constant 0 : index
    %20 = vector.load %arg1[%c0_8, %c0_9] : memref<34x32xf32, #tpu.memory_space<vmem>>, vector<34x32xf32>
    %21 = arith.addf %19, %20 : vector<34x32xf32>
    %c0_10 = arith.constant 0 : index
    %c0_11 = arith.constant 0 : index
    %c0_12 = arith.constant 0 : index
    %22 = vector.load %arg7[%c0_10, %c0_11, %c0_12] : memref<2x8x128xf32, #tpu.memory_space<vmem>>, vector<1x8x128xf32>
    %23 = vector.shape_cast %22 : vector<1x8x128xf32> to vector<8x128xf32>
    %24 = vector.extract_strided_slice %23 {offsets = [0, 0], sizes = [1, 32], strides = [1, 1]} : vector<8x128xf32> to vector<1x32xf32>
    %25 = vector.extract_strided_slice %23 {offsets = [1, 0], sizes = [1, 32], strides = [1, 1]} : vector<8x128xf32> to vector<1x32xf32>
    %26 = vector.extract_strided_slice %23 {offsets = [2, 0], sizes = [1, 96], strides = [1, 1]} : vector<8x128xf32> to vector<1x96xf32>
    %27 = vector.extract_strided_slice %23 {offsets = [3, 0], sizes = [1, 32], strides = [1, 1]} : vector<8x128xf32> to vector<1x32xf32>
    %28 = vector.extract_strided_slice %23 {offsets = [4, 0], sizes = [1, 32], strides = [1, 1]} : vector<8x128xf32> to vector<1x32xf32>
    %29 = vector.extract_strided_slice %23 {offsets = [5, 0], sizes = [1, 32], strides = [1, 1]} : vector<8x128xf32> to vector<1x32xf32>
    %30 = vector.extract_strided_slice %23 {offsets = [6, 0], sizes = [1, 128], strides = [1, 1]} : vector<8x128xf32> to vector<1x128xf32>
    %31 = vector.extract_strided_slice %23 {offsets = [7, 0], sizes = [1, 32], strides = [1, 1]} : vector<8x128xf32> to vector<1x32xf32>
    %cst_13 = arith.constant dense<0.000000e+00> : vector<34xf32>
    %32 = vector.multi_reduction <add>, %21, %cst_13 [1] : vector<34x32xf32> to vector<34xf32>
    %33 = vector.shape_cast %32 : vector<34xf32> to vector<34x1xf32>
    %cst_14 = arith.constant 3.200000e+01 : f32
    %34 = vector.broadcast %cst_14 : f32 to vector<34x1xf32>
    %35 = arith.divf %33, %34 : vector<34x1xf32>
    %36 = vector.broadcast %35 : vector<34x1xf32> to vector<34x32xf32>
    %37 = arith.subf %21, %36 : vector<34x32xf32>
    %38 = arith.mulf %37, %37 : vector<34x32xf32>
    %cst_15 = arith.constant dense<0.000000e+00> : vector<34xf32>
    %39 = vector.multi_reduction <add>, %38, %cst_15 [1] : vector<34x32xf32> to vector<34xf32>
    %40 = vector.shape_cast %39 : vector<34xf32> to vector<34x1xf32>
    %cst_16 = arith.constant 3.200000e+01 : f32
    %41 = vector.broadcast %cst_16 : f32 to vector<34x1xf32>
    %42 = arith.divf %40, %41 : vector<34x1xf32>
    %43 = vector.broadcast %35 : vector<34x1xf32> to vector<34x32xf32>
    %44 = arith.subf %21, %43 : vector<34x32xf32>
    %cst_17 = arith.constant 9.99999997E-7 : f32
    %45 = vector.broadcast %cst_17 : f32 to vector<34x1xf32>
    %46 = arith.addf %42, %45 : vector<34x1xf32>
    %47 = math.rsqrt %46 : vector<34x1xf32>
    %48 = vector.broadcast %47 : vector<34x1xf32> to vector<34x32xf32>
    %49 = arith.mulf %44, %48 : vector<34x32xf32>
    %50 = vector.broadcast %24 : vector<1x32xf32> to vector<34x32xf32>
    %51 = arith.mulf %49, %50 : vector<34x32xf32>
    %52 = vector.broadcast %25 : vector<1x32xf32> to vector<34x32xf32>
    %53 = arith.addf %51, %52 : vector<34x32xf32>
    %54 = arith.truncf %53 : vector<34x32xf32> to vector<34x32xbf16>
    %c0_18 = arith.constant 0 : index
    %c0_19 = arith.constant 0 : index
    %c0_20 = arith.constant 0 : index
    %55 = vector.load %arg3[%c0_18, %c0_19, %c0_20] : memref<2x32x96xbf16, #tpu.memory_space<vmem>>, vector<1x32x96xbf16>
    %56 = vector.shape_cast %55 : vector<1x32x96xbf16> to vector<32x96xbf16>
    %cst_21 = arith.constant dense<0.000000e+00> : vector<34x96xf32>
    %57 = tpu.matmul %54, %56, %cst_21 {dimension_numbers = #tpu.dot_dimension_numbers<[1], [0], [0], [1], [0, 0, 1, 1], [], []>} : vector<34x32xbf16>, vector<32x96xbf16>, vector<34x96xf32> -> vector<34x96xf32>
    %58 = vector.broadcast %26 : vector<1x96xf32> to vector<34x96xf32>
    %59 = arith.addf %57, %58 : vector<34x96xf32>
    %60 = vector.extract_strided_slice %59 {offsets = [0, 0], sizes = [34, 32], strides = [1, 1]} : vector<34x96xf32> to vector<34x32xf32>
    %61 = vector.extract_strided_slice %59 {offsets = [0, 32], sizes = [34, 32], strides = [1, 1]} : vector<34x96xf32> to vector<34x32xf32>
    %62 = vector.extract_strided_slice %59 {offsets = [0, 64], sizes = [34, 32], strides = [1, 1]} : vector<34x96xf32> to vector<34x32xf32>
    %63 = vector.extract_strided_slice %60 {offsets = [0, 0], sizes = [34, 8], strides = [1, 1]} : vector<34x32xf32> to vector<34x8xf32>
    %64 = vector.extract_strided_slice %61 {offsets = [0, 0], sizes = [34, 8], strides = [1, 1]} : vector<34x32xf32> to vector<34x8xf32>
    %cst_22 = arith.constant dense<0.000000e+00> : vector<34x34xf32>
    %65 = tpu.matmul %63, %64, %cst_22 {dimension_numbers = #tpu.dot_dimension_numbers<[1], [1], [0], [0], [0, 0, 1, 0], [], []>} : vector<34x8xf32>, vector<34x8xf32>, vector<34x34xf32> -> vector<34x34xf32>
    %66 = vector.extract_strided_slice %60 {offsets = [0, 8], sizes = [34, 8], strides = [1, 1]} : vector<34x32xf32> to vector<34x8xf32>
    %67 = vector.extract_strided_slice %61 {offsets = [0, 8], sizes = [34, 8], strides = [1, 1]} : vector<34x32xf32> to vector<34x8xf32>
    %cst_23 = arith.constant dense<0.000000e+00> : vector<34x34xf32>
    %68 = tpu.matmul %66, %67, %cst_23 {dimension_numbers = #tpu.dot_dimension_numbers<[1], [1], [0], [0], [0, 0, 1, 0], [], []>} : vector<34x8xf32>, vector<34x8xf32>, vector<34x34xf32> -> vector<34x34xf32>
    %69 = vector.extract_strided_slice %60 {offsets = [0, 16], sizes = [34, 8], strides = [1, 1]} : vector<34x32xf32> to vector<34x8xf32>
    %70 = vector.extract_strided_slice %61 {offsets = [0, 16], sizes = [34, 8], strides = [1, 1]} : vector<34x32xf32> to vector<34x8xf32>
    %cst_24 = arith.constant dense<0.000000e+00> : vector<34x34xf32>
    %71 = tpu.matmul %69, %70, %cst_24 {dimension_numbers = #tpu.dot_dimension_numbers<[1], [1], [0], [0], [0, 0, 1, 0], [], []>} : vector<34x8xf32>, vector<34x8xf32>, vector<34x34xf32> -> vector<34x34xf32>
    %72 = vector.extract_strided_slice %60 {offsets = [0, 24], sizes = [34, 8], strides = [1, 1]} : vector<34x32xf32> to vector<34x8xf32>
    %73 = vector.extract_strided_slice %61 {offsets = [0, 24], sizes = [34, 8], strides = [1, 1]} : vector<34x32xf32> to vector<34x8xf32>
    %cst_25 = arith.constant dense<0.000000e+00> : vector<34x34xf32>
    %74 = tpu.matmul %72, %73, %cst_25 {dimension_numbers = #tpu.dot_dimension_numbers<[1], [1], [0], [0], [0, 0, 1, 0], [], []>} : vector<34x8xf32>, vector<34x8xf32>, vector<34x34xf32> -> vector<34x34xf32>
    %75 = tpu.concatenate %65, %68, %71, %74 in 0 : vector<34x34xf32>, vector<34x34xf32>, vector<34x34xf32>, vector<34x34xf32> -> vector<136x34xf32>
    %76 = arith.addf %75, %11 : vector<136x34xf32>
    %cst_26 = arith.constant dense<0xFF800000> : vector<136xf32>
    %77 = vector.multi_reduction <maximumf>, %76, %cst_26 [1] : vector<136x34xf32> to vector<136xf32>
    %78 = vector.shape_cast %77 : vector<136xf32> to vector<136x1xf32>
    %79 = vector.broadcast %78 : vector<136x1xf32> to vector<136x34xf32>
    %80 = arith.subf %76, %79 : vector<136x34xf32>
    %81 = math.exp %80 : vector<136x34xf32>
    %cst_27 = arith.constant dense<0.000000e+00> : vector<136xf32>
    %82 = vector.multi_reduction <add>, %81, %cst_27 [1] : vector<136x34xf32> to vector<136xf32>
    %83 = vector.shape_cast %82 : vector<136xf32> to vector<136x1xf32>
    %84 = tpu.reciprocal %83 {approx = true} : vector<136x1xf32> -> vector<136x1xf32>
    %85 = vector.broadcast %84 : vector<136x1xf32> to vector<136x34xf32>
    %86 = arith.mulf %81, %85 : vector<136x34xf32>
    %87 = vector.extract_strided_slice %86 {offsets = [0, 0], sizes = [34, 34], strides = [1, 1]} : vector<136x34xf32> to vector<34x34xf32>
    %88 = vector.extract_strided_slice %62 {offsets = [0, 0], sizes = [34, 8], strides = [1, 1]} : vector<34x32xf32> to vector<34x8xf32>
    %89 = arith.truncf %87 : vector<34x34xf32> to vector<34x34xbf16>
    %90 = arith.truncf %88 : vector<34x8xf32> to vector<34x8xbf16>
    %cst_28 = arith.constant dense<0.000000e+00> : vector<34x8xf32>
    %91 = tpu.matmul %89, %90, %cst_28 {dimension_numbers = #tpu.dot_dimension_numbers<[1], [0], [0], [1], [0, 0, 1, 1], [], []>} : vector<34x34xbf16>, vector<34x8xbf16>, vector<34x8xf32> -> vector<34x8xf32>
    %92 = vector.extract_strided_slice %86 {offsets = [34, 0], sizes = [34, 34], strides = [1, 1]} : vector<136x34xf32> to vector<34x34xf32>
    %93 = vector.extract_strided_slice %62 {offsets = [0, 8], sizes = [34, 8], strides = [1, 1]} : vector<34x32xf32> to vector<34x8xf32>
    %94 = arith.truncf %92 : vector<34x34xf32> to vector<34x34xbf16>
    %95 = arith.truncf %93 : vector<34x8xf32> to vector<34x8xbf16>
    %cst_29 = arith.constant dense<0.000000e+00> : vector<34x8xf32>
    %96 = tpu.matmul %94, %95, %cst_29 {dimension_numbers = #tpu.dot_dimension_numbers<[1], [0], [0], [1], [0, 0, 1, 1], [], []>} : vector<34x34xbf16>, vector<34x8xbf16>, vector<34x8xf32> -> vector<34x8xf32>
    %97 = vector.extract_strided_slice %86 {offsets = [68, 0], sizes = [34, 34], strides = [1, 1]} : vector<136x34xf32> to vector<34x34xf32>
    %98 = vector.extract_strided_slice %62 {offsets = [0, 16], sizes = [34, 8], strides = [1, 1]} : vector<34x32xf32> to vector<34x8xf32>
    %99 = arith.truncf %97 : vector<34x34xf32> to vector<34x34xbf16>
    %100 = arith.truncf %98 : vector<34x8xf32> to vector<34x8xbf16>
    %cst_30 = arith.constant dense<0.000000e+00> : vector<34x8xf32>
    %101 = tpu.matmul %99, %100, %cst_30 {dimension_numbers = #tpu.dot_dimension_numbers<[1], [0], [0], [1], [0, 0, 1, 1], [], []>} : vector<34x34xbf16>, vector<34x8xbf16>, vector<34x8xf32> -> vector<34x8xf32>
    %102 = vector.extract_strided_slice %86 {offsets = [102, 0], sizes = [34, 34], strides = [1, 1]} : vector<136x34xf32> to vector<34x34xf32>
    %103 = vector.extract_strided_slice %62 {offsets = [0, 24], sizes = [34, 8], strides = [1, 1]} : vector<34x32xf32> to vector<34x8xf32>
    %104 = arith.truncf %102 : vector<34x34xf32> to vector<34x34xbf16>
    %105 = arith.truncf %103 : vector<34x8xf32> to vector<34x8xbf16>
    %cst_31 = arith.constant dense<0.000000e+00> : vector<34x8xf32>
    %106 = tpu.matmul %104, %105, %cst_31 {dimension_numbers = #tpu.dot_dimension_numbers<[1], [0], [0], [1], [0, 0, 1, 1], [], []>} : vector<34x34xbf16>, vector<34x8xbf16>, vector<34x8xf32> -> vector<34x8xf32>
    %107 = tpu.concatenate %91, %96, %101, %106 in 1 : vector<34x8xf32>, vector<34x8xf32>, vector<34x8xf32>, vector<34x8xf32> -> vector<34x32xf32>
    %108 = arith.truncf %107 : vector<34x32xf32> to vector<34x32xbf16>
    %c0_32 = arith.constant 0 : index
    %c0_33 = arith.constant 0 : index
    %c0_34 = arith.constant 0 : index
    %109 = vector.load %arg4[%c0_32, %c0_33, %c0_34] : memref<2x32x32xbf16, #tpu.memory_space<vmem>>, vector<1x32x32xbf16>
    %110 = vector.shape_cast %109 : vector<1x32x32xbf16> to vector<32x32xbf16>
    %cst_35 = arith.constant dense<0.000000e+00> : vector<34x32xf32>
    %111 = tpu.matmul %108, %110, %cst_35 {dimension_numbers = #tpu.dot_dimension_numbers<[1], [0], [0], [1], [0, 0, 1, 1], [], []>} : vector<34x32xbf16>, vector<32x32xbf16>, vector<34x32xf32> -> vector<34x32xf32>
    %112 = arith.addf %21, %111 : vector<34x32xf32>
    %113 = vector.broadcast %27 : vector<1x32xf32> to vector<34x32xf32>
    %114 = arith.addf %112, %113 : vector<34x32xf32>
    %cst_36 = arith.constant dense<0.000000e+00> : vector<34xf32>
    %115 = vector.multi_reduction <add>, %114, %cst_36 [1] : vector<34x32xf32> to vector<34xf32>
    %116 = vector.shape_cast %115 : vector<34xf32> to vector<34x1xf32>
    %cst_37 = arith.constant 3.200000e+01 : f32
    %117 = vector.broadcast %cst_37 : f32 to vector<34x1xf32>
    %118 = arith.divf %116, %117 : vector<34x1xf32>
    %119 = vector.broadcast %118 : vector<34x1xf32> to vector<34x32xf32>
    %120 = arith.subf %114, %119 : vector<34x32xf32>
    %121 = arith.mulf %120, %120 : vector<34x32xf32>
    %cst_38 = arith.constant dense<0.000000e+00> : vector<34xf32>
    %122 = vector.multi_reduction <add>, %121, %cst_38 [1] : vector<34x32xf32> to vector<34xf32>
    %123 = vector.shape_cast %122 : vector<34xf32> to vector<34x1xf32>
    %cst_39 = arith.constant 3.200000e+01 : f32
    %124 = vector.broadcast %cst_39 : f32 to vector<34x1xf32>
    %125 = arith.divf %123, %124 : vector<34x1xf32>
    %126 = vector.broadcast %118 : vector<34x1xf32> to vector<34x32xf32>
    %127 = arith.subf %114, %126 : vector<34x32xf32>
    %cst_40 = arith.constant 9.99999997E-7 : f32
    %128 = vector.broadcast %cst_40 : f32 to vector<34x1xf32>
    %129 = arith.addf %125, %128 : vector<34x1xf32>
    %130 = math.rsqrt %129 : vector<34x1xf32>
    %131 = vector.broadcast %130 : vector<34x1xf32> to vector<34x32xf32>
    %132 = arith.mulf %127, %131 : vector<34x32xf32>
    %133 = vector.broadcast %28 : vector<1x32xf32> to vector<34x32xf32>
    %134 = arith.mulf %132, %133 : vector<34x32xf32>
    %135 = vector.broadcast %29 : vector<1x32xf32> to vector<34x32xf32>
    %136 = arith.addf %134, %135 : vector<34x32xf32>
    %137 = arith.truncf %136 : vector<34x32xf32> to vector<34x32xbf16>
    %c0_41 = arith.constant 0 : index
    %c0_42 = arith.constant 0 : index
    %c0_43 = arith.constant 0 : index
    %138 = vector.load %arg5[%c0_41, %c0_42, %c0_43] : memref<2x32x128xbf16, #tpu.memory_space<vmem>>, vector<1x32x128xbf16>
    %139 = vector.shape_cast %138 : vector<1x32x128xbf16> to vector<32x128xbf16>
    %cst_44 = arith.constant dense<0.000000e+00> : vector<34x128xf32>
    %140 = tpu.matmul %137, %139, %cst_44 {dimension_numbers = #tpu.dot_dimension_numbers<[1], [0], [0], [1], [0, 0, 1, 1], [], []>} : vector<34x32xbf16>, vector<32x128xbf16>, vector<34x128xf32> -> vector<34x128xf32>
    %141 = vector.broadcast %30 : vector<1x128xf32> to vector<34x128xf32>
    %142 = arith.addf %140, %141 : vector<34x128xf32>
    %143 = arith.mulf %142, %142 : vector<34x128xf32>
    %144 = arith.mulf %142, %143 : vector<34x128xf32>
    %cst_45 = arith.constant 4.471500e-02 : f32
    %145 = vector.broadcast %cst_45 : f32 to vector<34x128xf32>
    %146 = arith.mulf %145, %144 : vector<34x128xf32>
    %147 = arith.addf %142, %146 : vector<34x128xf32>
    %cst_46 = arith.constant 0.797884583 : f32
    %148 = vector.broadcast %cst_46 : f32 to vector<34x128xf32>
    %149 = arith.mulf %148, %147 : vector<34x128xf32>
    %150 = math.tanh %149 : vector<34x128xf32>
    %cst_47 = arith.constant 1.000000e+00 : f32
    %151 = vector.broadcast %cst_47 : f32 to vector<34x128xf32>
    %152 = arith.addf %151, %150 : vector<34x128xf32>
    %cst_48 = arith.constant 5.000000e-01 : f32
    %153 = vector.broadcast %cst_48 : f32 to vector<34x128xf32>
    %154 = arith.mulf %153, %152 : vector<34x128xf32>
    %155 = arith.mulf %142, %154 : vector<34x128xf32>
    %156 = arith.truncf %155 : vector<34x128xf32> to vector<34x128xbf16>
    %c0_49 = arith.constant 0 : index
    %c0_50 = arith.constant 0 : index
    %c0_51 = arith.constant 0 : index
    %157 = vector.load %arg6[%c0_49, %c0_50, %c0_51] : memref<2x128x32xbf16, #tpu.memory_space<vmem>>, vector<1x128x32xbf16>
    %158 = vector.shape_cast %157 : vector<1x128x32xbf16> to vector<128x32xbf16>
    %cst_52 = arith.constant dense<0.000000e+00> : vector<34x32xf32>
    %159 = tpu.matmul %156, %158, %cst_52 {dimension_numbers = #tpu.dot_dimension_numbers<[1], [0], [0], [1], [0, 0, 1, 1], [], []>} : vector<34x128xbf16>, vector<128x32xbf16>, vector<34x32xf32> -> vector<34x32xf32>
    %160 = vector.broadcast %31 : vector<1x32xf32> to vector<34x32xf32>
    %161 = arith.addf %159, %160 : vector<34x32xf32>
    %162 = arith.addf %114, %161 : vector<34x32xf32>
    %c1 = arith.constant 1 : index
    %c0_53 = arith.constant 0 : index
    %c0_54 = arith.constant 0 : index
    %163 = vector.load %arg7[%c1, %c0_53, %c0_54] : memref<2x8x128xf32, #tpu.memory_space<vmem>>, vector<1x8x128xf32>
    %164 = vector.shape_cast %163 : vector<1x8x128xf32> to vector<8x128xf32>
    %165 = vector.extract_strided_slice %164 {offsets = [0, 0], sizes = [1, 32], strides = [1, 1]} : vector<8x128xf32> to vector<1x32xf32>
    %166 = vector.extract_strided_slice %164 {offsets = [1, 0], sizes = [1, 32], strides = [1, 1]} : vector<8x128xf32> to vector<1x32xf32>
    %167 = vector.extract_strided_slice %164 {offsets = [2, 0], sizes = [1, 96], strides = [1, 1]} : vector<8x128xf32> to vector<1x96xf32>
    %168 = vector.extract_strided_slice %164 {offsets = [3, 0], sizes = [1, 32], strides = [1, 1]} : vector<8x128xf32> to vector<1x32xf32>
    %169 = vector.extract_strided_slice %164 {offsets = [4, 0], sizes = [1, 32], strides = [1, 1]} : vector<8x128xf32> to vector<1x32xf32>
    %170 = vector.extract_strided_slice %164 {offsets = [5, 0], sizes = [1, 32], strides = [1, 1]} : vector<8x128xf32> to vector<1x32xf32>
    %171 = vector.extract_strided_slice %164 {offsets = [6, 0], sizes = [1, 128], strides = [1, 1]} : vector<8x128xf32> to vector<1x128xf32>
    %172 = vector.extract_strided_slice %164 {offsets = [7, 0], sizes = [1, 32], strides = [1, 1]} : vector<8x128xf32> to vector<1x32xf32>
    %cst_55 = arith.constant dense<0.000000e+00> : vector<34xf32>
    %173 = vector.multi_reduction <add>, %162, %cst_55 [1] : vector<34x32xf32> to vector<34xf32>
    %174 = vector.shape_cast %173 : vector<34xf32> to vector<34x1xf32>
    %cst_56 = arith.constant 3.200000e+01 : f32
    %175 = vector.broadcast %cst_56 : f32 to vector<34x1xf32>
    %176 = arith.divf %174, %175 : vector<34x1xf32>
    %177 = vector.broadcast %176 : vector<34x1xf32> to vector<34x32xf32>
    %178 = arith.subf %162, %177 : vector<34x32xf32>
    %179 = arith.mulf %178, %178 : vector<34x32xf32>
    %cst_57 = arith.constant dense<0.000000e+00> : vector<34xf32>
    %180 = vector.multi_reduction <add>, %179, %cst_57 [1] : vector<34x32xf32> to vector<34xf32>
    %181 = vector.shape_cast %180 : vector<34xf32> to vector<34x1xf32>
    %cst_58 = arith.constant 3.200000e+01 : f32
    %182 = vector.broadcast %cst_58 : f32 to vector<34x1xf32>
    %183 = arith.divf %181, %182 : vector<34x1xf32>
    %184 = vector.broadcast %176 : vector<34x1xf32> to vector<34x32xf32>
    %185 = arith.subf %162, %184 : vector<34x32xf32>
    %cst_59 = arith.constant 9.99999997E-7 : f32
    %186 = vector.broadcast %cst_59 : f32 to vector<34x1xf32>
    %187 = arith.addf %183, %186 : vector<34x1xf32>
    %188 = math.rsqrt %187 : vector<34x1xf32>
    %189 = vector.broadcast %188 : vector<34x1xf32> to vector<34x32xf32>
    %190 = arith.mulf %185, %189 : vector<34x32xf32>
    %191 = vector.broadcast %165 : vector<1x32xf32> to vector<34x32xf32>
    %192 = arith.mulf %190, %191 : vector<34x32xf32>
    %193 = vector.broadcast %166 : vector<1x32xf32> to vector<34x32xf32>
    %194 = arith.addf %192, %193 : vector<34x32xf32>
    %195 = arith.truncf %194 : vector<34x32xf32> to vector<34x32xbf16>
    %c1_60 = arith.constant 1 : index
    %c0_61 = arith.constant 0 : index
    %c0_62 = arith.constant 0 : index
    %196 = vector.load %arg3[%c1_60, %c0_61, %c0_62] : memref<2x32x96xbf16, #tpu.memory_space<vmem>>, vector<1x32x96xbf16>
    %197 = vector.shape_cast %196 : vector<1x32x96xbf16> to vector<32x96xbf16>
    %cst_63 = arith.constant dense<0.000000e+00> : vector<34x96xf32>
    %198 = tpu.matmul %195, %197, %cst_63 {dimension_numbers = #tpu.dot_dimension_numbers<[1], [0], [0], [1], [0, 0, 1, 1], [], []>} : vector<34x32xbf16>, vector<32x96xbf16>, vector<34x96xf32> -> vector<34x96xf32>
    %199 = vector.broadcast %167 : vector<1x96xf32> to vector<34x96xf32>
    %200 = arith.addf %198, %199 : vector<34x96xf32>
    %201 = vector.extract_strided_slice %200 {offsets = [0, 0], sizes = [34, 32], strides = [1, 1]} : vector<34x96xf32> to vector<34x32xf32>
    %202 = vector.extract_strided_slice %200 {offsets = [0, 32], sizes = [34, 32], strides = [1, 1]} : vector<34x96xf32> to vector<34x32xf32>
    %203 = vector.extract_strided_slice %200 {offsets = [0, 64], sizes = [34, 32], strides = [1, 1]} : vector<34x96xf32> to vector<34x32xf32>
    %204 = vector.extract_strided_slice %201 {offsets = [0, 0], sizes = [34, 8], strides = [1, 1]} : vector<34x32xf32> to vector<34x8xf32>
    %205 = vector.extract_strided_slice %202 {offsets = [0, 0], sizes = [34, 8], strides = [1, 1]} : vector<34x32xf32> to vector<34x8xf32>
    %cst_64 = arith.constant dense<0.000000e+00> : vector<34x34xf32>
    %206 = tpu.matmul %204, %205, %cst_64 {dimension_numbers = #tpu.dot_dimension_numbers<[1], [1], [0], [0], [0, 0, 1, 0], [], []>} : vector<34x8xf32>, vector<34x8xf32>, vector<34x34xf32> -> vector<34x34xf32>
    %207 = vector.extract_strided_slice %201 {offsets = [0, 8], sizes = [34, 8], strides = [1, 1]} : vector<34x32xf32> to vector<34x8xf32>
    %208 = vector.extract_strided_slice %202 {offsets = [0, 8], sizes = [34, 8], strides = [1, 1]} : vector<34x32xf32> to vector<34x8xf32>
    %cst_65 = arith.constant dense<0.000000e+00> : vector<34x34xf32>
    %209 = tpu.matmul %207, %208, %cst_65 {dimension_numbers = #tpu.dot_dimension_numbers<[1], [1], [0], [0], [0, 0, 1, 0], [], []>} : vector<34x8xf32>, vector<34x8xf32>, vector<34x34xf32> -> vector<34x34xf32>
    %210 = vector.extract_strided_slice %201 {offsets = [0, 16], sizes = [34, 8], strides = [1, 1]} : vector<34x32xf32> to vector<34x8xf32>
    %211 = vector.extract_strided_slice %202 {offsets = [0, 16], sizes = [34, 8], strides = [1, 1]} : vector<34x32xf32> to vector<34x8xf32>
    %cst_66 = arith.constant dense<0.000000e+00> : vector<34x34xf32>
    %212 = tpu.matmul %210, %211, %cst_66 {dimension_numbers = #tpu.dot_dimension_numbers<[1], [1], [0], [0], [0, 0, 1, 0], [], []>} : vector<34x8xf32>, vector<34x8xf32>, vector<34x34xf32> -> vector<34x34xf32>
    %213 = vector.extract_strided_slice %201 {offsets = [0, 24], sizes = [34, 8], strides = [1, 1]} : vector<34x32xf32> to vector<34x8xf32>
    %214 = vector.extract_strided_slice %202 {offsets = [0, 24], sizes = [34, 8], strides = [1, 1]} : vector<34x32xf32> to vector<34x8xf32>
    %cst_67 = arith.constant dense<0.000000e+00> : vector<34x34xf32>
    %215 = tpu.matmul %213, %214, %cst_67 {dimension_numbers = #tpu.dot_dimension_numbers<[1], [1], [0], [0], [0, 0, 1, 0], [], []>} : vector<34x8xf32>, vector<34x8xf32>, vector<34x34xf32> -> vector<34x34xf32>
    %216 = tpu.concatenate %206, %209, %212, %215 in 0 : vector<34x34xf32>, vector<34x34xf32>, vector<34x34xf32>, vector<34x34xf32> -> vector<136x34xf32>
    %217 = arith.addf %216, %11 : vector<136x34xf32>
    %cst_68 = arith.constant dense<0xFF800000> : vector<136xf32>
    %218 = vector.multi_reduction <maximumf>, %217, %cst_68 [1] : vector<136x34xf32> to vector<136xf32>
    %219 = vector.shape_cast %218 : vector<136xf32> to vector<136x1xf32>
    %220 = vector.broadcast %219 : vector<136x1xf32> to vector<136x34xf32>
    %221 = arith.subf %217, %220 : vector<136x34xf32>
    %222 = math.exp %221 : vector<136x34xf32>
    %cst_69 = arith.constant dense<0.000000e+00> : vector<136xf32>
    %223 = vector.multi_reduction <add>, %222, %cst_69 [1] : vector<136x34xf32> to vector<136xf32>
    %224 = vector.shape_cast %223 : vector<136xf32> to vector<136x1xf32>
    %225 = tpu.reciprocal %224 {approx = true} : vector<136x1xf32> -> vector<136x1xf32>
    %226 = vector.broadcast %225 : vector<136x1xf32> to vector<136x34xf32>
    %227 = arith.mulf %222, %226 : vector<136x34xf32>
    %228 = vector.extract_strided_slice %227 {offsets = [0, 0], sizes = [34, 34], strides = [1, 1]} : vector<136x34xf32> to vector<34x34xf32>
    %229 = vector.extract_strided_slice %203 {offsets = [0, 0], sizes = [34, 8], strides = [1, 1]} : vector<34x32xf32> to vector<34x8xf32>
    %230 = arith.truncf %228 : vector<34x34xf32> to vector<34x34xbf16>
    %231 = arith.truncf %229 : vector<34x8xf32> to vector<34x8xbf16>
    %cst_70 = arith.constant dense<0.000000e+00> : vector<34x8xf32>
    %232 = tpu.matmul %230, %231, %cst_70 {dimension_numbers = #tpu.dot_dimension_numbers<[1], [0], [0], [1], [0, 0, 1, 1], [], []>} : vector<34x34xbf16>, vector<34x8xbf16>, vector<34x8xf32> -> vector<34x8xf32>
    %233 = vector.extract_strided_slice %227 {offsets = [34, 0], sizes = [34, 34], strides = [1, 1]} : vector<136x34xf32> to vector<34x34xf32>
    %234 = vector.extract_strided_slice %203 {offsets = [0, 8], sizes = [34, 8], strides = [1, 1]} : vector<34x32xf32> to vector<34x8xf32>
    %235 = arith.truncf %233 : vector<34x34xf32> to vector<34x34xbf16>
    %236 = arith.truncf %234 : vector<34x8xf32> to vector<34x8xbf16>
    %cst_71 = arith.constant dense<0.000000e+00> : vector<34x8xf32>
    %237 = tpu.matmul %235, %236, %cst_71 {dimension_numbers = #tpu.dot_dimension_numbers<[1], [0], [0], [1], [0, 0, 1, 1], [], []>} : vector<34x34xbf16>, vector<34x8xbf16>, vector<34x8xf32> -> vector<34x8xf32>
    %238 = vector.extract_strided_slice %227 {offsets = [68, 0], sizes = [34, 34], strides = [1, 1]} : vector<136x34xf32> to vector<34x34xf32>
    %239 = vector.extract_strided_slice %203 {offsets = [0, 16], sizes = [34, 8], strides = [1, 1]} : vector<34x32xf32> to vector<34x8xf32>
    %240 = arith.truncf %238 : vector<34x34xf32> to vector<34x34xbf16>
    %241 = arith.truncf %239 : vector<34x8xf32> to vector<34x8xbf16>
    %cst_72 = arith.constant dense<0.000000e+00> : vector<34x8xf32>
    %242 = tpu.matmul %240, %241, %cst_72 {dimension_numbers = #tpu.dot_dimension_numbers<[1], [0], [0], [1], [0, 0, 1, 1], [], []>} : vector<34x34xbf16>, vector<34x8xbf16>, vector<34x8xf32> -> vector<34x8xf32>
    %243 = vector.extract_strided_slice %227 {offsets = [102, 0], sizes = [34, 34], strides = [1, 1]} : vector<136x34xf32> to vector<34x34xf32>
    %244 = vector.extract_strided_slice %203 {offsets = [0, 24], sizes = [34, 8], strides = [1, 1]} : vector<34x32xf32> to vector<34x8xf32>
    %245 = arith.truncf %243 : vector<34x34xf32> to vector<34x34xbf16>
    %246 = arith.truncf %244 : vector<34x8xf32> to vector<34x8xbf16>
    %cst_73 = arith.constant dense<0.000000e+00> : vector<34x8xf32>
    %247 = tpu.matmul %245, %246, %cst_73 {dimension_numbers = #tpu.dot_dimension_numbers<[1], [0], [0], [1], [0, 0, 1, 1], [], []>} : vector<34x34xbf16>, vector<34x8xbf16>, vector<34x8xf32> -> vector<34x8xf32>
    %248 = tpu.concatenate %232, %237, %242, %247 in 1 : vector<34x8xf32>, vector<34x8xf32>, vector<34x8xf32>, vector<34x8xf32> -> vector<34x32xf32>
    %249 = arith.truncf %248 : vector<34x32xf32> to vector<34x32xbf16>
    %c1_74 = arith.constant 1 : index
    %c0_75 = arith.constant 0 : index
    %c0_76 = arith.constant 0 : index
    %250 = vector.load %arg4[%c1_74, %c0_75, %c0_76] : memref<2x32x32xbf16, #tpu.memory_space<vmem>>, vector<1x32x32xbf16>
    %251 = vector.shape_cast %250 : vector<1x32x32xbf16> to vector<32x32xbf16>
    %cst_77 = arith.constant dense<0.000000e+00> : vector<34x32xf32>
    %252 = tpu.matmul %249, %251, %cst_77 {dimension_numbers = #tpu.dot_dimension_numbers<[1], [0], [0], [1], [0, 0, 1, 1], [], []>} : vector<34x32xbf16>, vector<32x32xbf16>, vector<34x32xf32> -> vector<34x32xf32>
    %253 = arith.addf %162, %252 : vector<34x32xf32>
    %254 = vector.broadcast %168 : vector<1x32xf32> to vector<34x32xf32>
    %255 = arith.addf %253, %254 : vector<34x32xf32>
    %cst_78 = arith.constant dense<0.000000e+00> : vector<34xf32>
    %256 = vector.multi_reduction <add>, %255, %cst_78 [1] : vector<34x32xf32> to vector<34xf32>
    %257 = vector.shape_cast %256 : vector<34xf32> to vector<34x1xf32>
    %cst_79 = arith.constant 3.200000e+01 : f32
    %258 = vector.broadcast %cst_79 : f32 to vector<34x1xf32>
    %259 = arith.divf %257, %258 : vector<34x1xf32>
    %260 = vector.broadcast %259 : vector<34x1xf32> to vector<34x32xf32>
    %261 = arith.subf %255, %260 : vector<34x32xf32>
    %262 = arith.mulf %261, %261 : vector<34x32xf32>
    %cst_80 = arith.constant dense<0.000000e+00> : vector<34xf32>
    %263 = vector.multi_reduction <add>, %262, %cst_80 [1] : vector<34x32xf32> to vector<34xf32>
    %264 = vector.shape_cast %263 : vector<34xf32> to vector<34x1xf32>
    %cst_81 = arith.constant 3.200000e+01 : f32
    %265 = vector.broadcast %cst_81 : f32 to vector<34x1xf32>
    %266 = arith.divf %264, %265 : vector<34x1xf32>
    %267 = vector.broadcast %259 : vector<34x1xf32> to vector<34x32xf32>
    %268 = arith.subf %255, %267 : vector<34x32xf32>
    %cst_82 = arith.constant 9.99999997E-7 : f32
    %269 = vector.broadcast %cst_82 : f32 to vector<34x1xf32>
    %270 = arith.addf %266, %269 : vector<34x1xf32>
    %271 = math.rsqrt %270 : vector<34x1xf32>
    %272 = vector.broadcast %271 : vector<34x1xf32> to vector<34x32xf32>
    %273 = arith.mulf %268, %272 : vector<34x32xf32>
    %274 = vector.broadcast %169 : vector<1x32xf32> to vector<34x32xf32>
    %275 = arith.mulf %273, %274 : vector<34x32xf32>
    %276 = vector.broadcast %170 : vector<1x32xf32> to vector<34x32xf32>
    %277 = arith.addf %275, %276 : vector<34x32xf32>
    %278 = arith.truncf %277 : vector<34x32xf32> to vector<34x32xbf16>
    %c1_83 = arith.constant 1 : index
    %c0_84 = arith.constant 0 : index
    %c0_85 = arith.constant 0 : index
    %279 = vector.load %arg5[%c1_83, %c0_84, %c0_85] : memref<2x32x128xbf16, #tpu.memory_space<vmem>>, vector<1x32x128xbf16>
    %280 = vector.shape_cast %279 : vector<1x32x128xbf16> to vector<32x128xbf16>
    %cst_86 = arith.constant dense<0.000000e+00> : vector<34x128xf32>
    %281 = tpu.matmul %278, %280, %cst_86 {dimension_numbers = #tpu.dot_dimension_numbers<[1], [0], [0], [1], [0, 0, 1, 1], [], []>} : vector<34x32xbf16>, vector<32x128xbf16>, vector<34x128xf32> -> vector<34x128xf32>
    %282 = vector.broadcast %171 : vector<1x128xf32> to vector<34x128xf32>
    %283 = arith.addf %281, %282 : vector<34x128xf32>
    %284 = arith.mulf %283, %283 : vector<34x128xf32>
    %285 = arith.mulf %283, %284 : vector<34x128xf32>
    %cst_87 = arith.constant 4.471500e-02 : f32
    %286 = vector.broadcast %cst_87 : f32 to vector<34x128xf32>
    %287 = arith.mulf %286, %285 : vector<34x128xf32>
    %288 = arith.addf %283, %287 : vector<34x128xf32>
    %cst_88 = arith.constant 0.797884583 : f32
    %289 = vector.broadcast %cst_88 : f32 to vector<34x128xf32>
    %290 = arith.mulf %289, %288 : vector<34x128xf32>
    %291 = math.tanh %290 : vector<34x128xf32>
    %cst_89 = arith.constant 1.000000e+00 : f32
    %292 = vector.broadcast %cst_89 : f32 to vector<34x128xf32>
    %293 = arith.addf %292, %291 : vector<34x128xf32>
    %cst_90 = arith.constant 5.000000e-01 : f32
    %294 = vector.broadcast %cst_90 : f32 to vector<34x128xf32>
    %295 = arith.mulf %294, %293 : vector<34x128xf32>
    %296 = arith.mulf %283, %295 : vector<34x128xf32>
    %297 = arith.truncf %296 : vector<34x128xf32> to vector<34x128xbf16>
    %c1_91 = arith.constant 1 : index
    %c0_92 = arith.constant 0 : index
    %c0_93 = arith.constant 0 : index
    %298 = vector.load %arg6[%c1_91, %c0_92, %c0_93] : memref<2x128x32xbf16, #tpu.memory_space<vmem>>, vector<1x128x32xbf16>
    %299 = vector.shape_cast %298 : vector<1x128x32xbf16> to vector<128x32xbf16>
    %cst_94 = arith.constant dense<0.000000e+00> : vector<34x32xf32>
    %300 = tpu.matmul %297, %299, %cst_94 {dimension_numbers = #tpu.dot_dimension_numbers<[1], [0], [0], [1], [0, 0, 1, 1], [], []>} : vector<34x128xbf16>, vector<128x32xbf16>, vector<34x32xf32> -> vector<34x32xf32>
    %301 = vector.broadcast %172 : vector<1x32xf32> to vector<34x32xf32>
    %302 = arith.addf %300, %301 : vector<34x32xf32>
    %303 = arith.addf %255, %302 : vector<34x32xf32>
    %c0_95 = arith.constant 0 : index
    %c0_96 = arith.constant 0 : index
    %304 = vector.load %arg9[%c0_95, %c0_96] : memref<3x128xf32, #tpu.memory_space<vmem>>, vector<1x32xf32>
    %c1_97 = arith.constant 1 : index
    %c0_98 = arith.constant 0 : index
    %305 = vector.load %arg9[%c1_97, %c0_98] : memref<3x128xf32, #tpu.memory_space<vmem>>, vector<1x32xf32>
    %c2 = arith.constant 2 : index
    %c0_99 = arith.constant 0 : index
    %306 = vector.load %arg9[%c2, %c0_99] : memref<3x128xf32, #tpu.memory_space<vmem>>, vector<1x128xf32>
    %307 = vector.extract_strided_slice %303 {offsets = [0, 0], sizes = [1, 32], strides = [1, 1]} : vector<34x32xf32> to vector<1x32xf32>
    %308 = vector.extract_strided_slice %303 {offsets = [17, 0], sizes = [1, 32], strides = [1, 1]} : vector<34x32xf32> to vector<1x32xf32>
    %309 = tpu.concatenate %307, %308 in 0 : vector<1x32xf32>, vector<1x32xf32> -> vector<2x32xf32>
    %cst_100 = arith.constant dense<0.000000e+00> : vector<2xf32>
    %310 = vector.multi_reduction <add>, %309, %cst_100 [1] : vector<2x32xf32> to vector<2xf32>
    %311 = vector.shape_cast %310 : vector<2xf32> to vector<2x1xf32>
    %cst_101 = arith.constant 3.200000e+01 : f32
    %312 = vector.broadcast %cst_101 : f32 to vector<2x1xf32>
    %313 = arith.divf %311, %312 : vector<2x1xf32>
    %314 = vector.broadcast %313 : vector<2x1xf32> to vector<2x32xf32>
    %315 = arith.subf %309, %314 : vector<2x32xf32>
    %316 = arith.mulf %315, %315 : vector<2x32xf32>
    %cst_102 = arith.constant dense<0.000000e+00> : vector<2xf32>
    %317 = vector.multi_reduction <add>, %316, %cst_102 [1] : vector<2x32xf32> to vector<2xf32>
    %318 = vector.shape_cast %317 : vector<2xf32> to vector<2x1xf32>
    %cst_103 = arith.constant 3.200000e+01 : f32
    %319 = vector.broadcast %cst_103 : f32 to vector<2x1xf32>
    %320 = arith.divf %318, %319 : vector<2x1xf32>
    %321 = vector.broadcast %313 : vector<2x1xf32> to vector<2x32xf32>
    %322 = arith.subf %309, %321 : vector<2x32xf32>
    %cst_104 = arith.constant 9.99999997E-7 : f32
    %323 = vector.broadcast %cst_104 : f32 to vector<2x1xf32>
    %324 = arith.addf %320, %323 : vector<2x1xf32>
    %325 = math.rsqrt %324 : vector<2x1xf32>
    %326 = vector.broadcast %325 : vector<2x1xf32> to vector<2x32xf32>
    %327 = arith.mulf %322, %326 : vector<2x32xf32>
    %328 = vector.broadcast %304 : vector<1x32xf32> to vector<2x32xf32>
    %329 = arith.mulf %327, %328 : vector<2x32xf32>
    %330 = vector.broadcast %305 : vector<1x32xf32> to vector<2x32xf32>
    %331 = arith.addf %329, %330 : vector<2x32xf32>
    %332 = arith.truncf %331 : vector<2x32xf32> to vector<2x32xbf16>
    %c0_105 = arith.constant 0 : index
    %c0_106 = arith.constant 0 : index
    %333 = vector.load %arg8[%c0_105, %c0_106] : memref<32x128xbf16, #tpu.memory_space<vmem>>, vector<32x128xbf16>
    %cst_107 = arith.constant dense<0.000000e+00> : vector<2x128xf32>
    %334 = tpu.matmul %332, %333, %cst_107 {dimension_numbers = #tpu.dot_dimension_numbers<[1], [0], [0], [1], [0, 0, 1, 1], [], []>} : vector<2x32xbf16>, vector<32x128xbf16>, vector<2x128xf32> -> vector<2x128xf32>
    %335 = vector.broadcast %306 : vector<1x128xf32> to vector<2x128xf32>
    %336 = arith.addf %334, %335 : vector<2x128xf32>
    %c0_108 = arith.constant 0 : index
    %c0_109 = arith.constant 0 : index
    %337 = vector.load %arg10[%c0_108, %c0_109] : memref<2x128xf32, #tpu.memory_space<vmem>>, vector<2x128xf32>
    tpu.vector_store %arg10[%c0_108, %c0_109], %336 {strides = array<i32>} : memref<2x128xf32, #tpu.memory_space<vmem>>, vector<2x128xf32>,
    return
  }
}

</mosaic_0001>

<llo_original>
// kernel: vit_forward.1
$region0: #{vit_forward.1}
  #allocation0 [shape = 'u32[]', space=smem, size = 0x4, offset = 0x4, fixed_abs, tag = 'smem constant byte address 0x4 - core index']
  #allocation1 [shape = 'u32[144,128]{1,0:T(1,128)}', space=vmem, size = 0x12000, scoped, tag = 'internal scratch']
  %s0 = inlined_call_operand.vmem [shape: f32[32,48], index: 0, kind: input, shape index: {}]
  %s1 = inlined_call_operand.vmem [shape: f32[34,32], index: 1, kind: input, shape index: {}]
  %s2 = inlined_call_operand.vmem [shape: bf16[48,32], index: 2, kind: input, shape index: {}]
  %s3 = inlined_call_operand.vmem [shape: bf16[2,32,96], index: 3, kind: input, shape index: {}]
  %s4 = inlined_call_operand.vmem [shape: bf16[2,32,32], index: 4, kind: input, shape index: {}]
  %s5 = inlined_call_operand.vmem [shape: bf16[2,32,128], index: 5, kind: input, shape index: {}]
  %s6 = inlined_call_operand.vmem [shape: bf16[2,128,32], index: 6, kind: input, shape index: {}]
  %s7 = inlined_call_operand.vmem [shape: f32[2,8,128], index: 7, kind: input, shape index: {}]
  %s8 = inlined_call_operand.vmem [shape: bf16[32,128], index: 8, kind: input, shape index: {}]
  %s9 = inlined_call_operand.vmem [shape: f32[3,128], index: 9, kind: input, shape index: {}]
  %s10 = inlined_call_operand.hbm [shape: f32[2,128], index: 10, kind: output, shape index: {}]
  %s11 = sld [smem:[#allocation0]]
  $region50: #{vit_forward.1} parent=0
    _
  %s13 = ssub.s32 1, %s11
  %s14 = scalar_select 0, %s13, %s11
  $region1: #{vit_forward.1} parent=0
    #allocation2 [shape = 'u8[1024]{0}', space=vmem, size = 0x400, scoped, tag = 'output window, operand 0, single buffered']
    #allocation3 [shape = 's32[1]{0}', space=sflag, size = 0x4, scoped, tag = 'scoped memory for vit_forward.1']
    %15 = vsyncpa [#allocation3], 0
    // Predicated region
    $region2: #{vit_forward.1} parent=1 // pred_check
      _
    $region3: #{vit_forward.1} parent=1 // pred_check_branch
      %17 = sbr.rel (0) target = $region5
    $region4: #{vit_forward.1} parent=1 // pred_region
      _
    $region5: #{vit_forward.1} parent=1 // pred_fallthru
      _
    // Predicated region
    $region6: #{vit_forward.1} parent=1 // pred_check
      _
    $region7: #{vit_forward.1} parent=1 // pred_check_branch
      %19 = sbr.rel (0) target = $region9
    $region8: #{vit_forward.1} parent=1 // pred_region
      _
    $region9: #{vit_forward.1} parent=1 // pred_fallthru
      _
    // Predicated region
    $region10: #{vit_forward.1} parent=1 // pred_check
      _
    $region11: #{vit_forward.1} parent=1 // pred_check_branch
      %21 = sbr.rel (0) target = $region13
    $region12: #{vit_forward.1} parent=1 // pred_region
      _
    $region13: #{vit_forward.1} parent=1 // pred_fallthru
      _
    // Predicated region
    $region14: #{vit_forward.1} parent=1 // pred_check
      _
    $region15: #{vit_forward.1} parent=1 // pred_check_branch
      %23 = sbr.rel (0) target = $region17
    $region16: #{vit_forward.1} parent=1 // pred_region
      _
    $region17: #{vit_forward.1} parent=1 // pred_fallthru
      _
    // Predicated region
    $region18: #{vit_forward.1} parent=1 // pred_check
      _
    $region19: #{vit_forward.1} parent=1 // pred_check_branch
      %25 = sbr.rel (0) target = $region21
    $region20: #{vit_forward.1} parent=1 // pred_region
      _
    $region21: #{vit_forward.1} parent=1 // pred_fallthru
      _
    // Predicated region
    $region22: #{vit_forward.1} parent=1 // pred_check
      _
    $region23: #{vit_forward.1} parent=1 // pred_check_branch
      %27 = sbr.rel (0) target = $region25
    $region24: #{vit_forward.1} parent=1 // pred_region
      _
    $region25: #{vit_forward.1} parent=1 // pred_fallthru
      _
    // Predicated region
    $region26: #{vit_forward.1} parent=1 // pred_check
      _
    $region27: #{vit_forward.1} parent=1 // pred_check_branch
      %29 = sbr.rel (0) target = $region29
    $region28: #{vit_forward.1} parent=1 // pred_region
      _
    $region29: #{vit_forward.1} parent=1 // pred_fallthru
      _
    // Predicated region
    $region30: #{vit_forward.1} parent=1 // pred_check
      _
    $region31: #{vit_forward.1} parent=1 // pred_check_branch
      %31 = sbr.rel (0) target = $region33
    $region32: #{vit_forward.1} parent=1 // pred_region
      _
    $region33: #{vit_forward.1} parent=1 // pred_fallthru
      _
    // Predicated region
    $region34: #{vit_forward.1} parent=1 // pred_check
      _
    $region35: #{vit_forward.1} parent=1 // pred_check_branch
      %33 = sbr.rel (0) target = $region37
    $region36: #{vit_forward.1} parent=1 // pred_region
      _
    $region37: #{vit_forward.1} parent=1 // pred_fallthru
      _
    // Predicated region
    $region38: #{vit_forward.1} parent=1 // pred_check
      _
    $region39: #{vit_forward.1} parent=1 // pred_check_branch
      %35 = sbr.rel (0) target = $region41
    $region40: #{vit_forward.1} parent=1 // pred_region
      _
    $region41: #{vit_forward.1} parent=1 // pred_fallthru
      _
    %v37 = vlaneseq
    %v38 = vshrl.u32 %v37, 7
    %v39 = vadd.s32 %v38, 8
    %v40 = vadd.s32 %v38, 16
    %v41 = vadd.s32 %v38, 24
    %v42 = vadd.s32 %v38, 32
    %v43 = vlaneseq
    %v44 = vand.u32 %v43, 127
    %vm45 = vcmp.ge.s32.totalorder %v38, 17
    %vm46 = vcmp.ge.s32.totalorder %v39, 17
    %vm47 = vcmp.ge.s32.totalorder %v40, 17
    %vm48 = vcmp.ge.s32.totalorder %v41, 17
    %vm49 = vcmp.ge.s32.totalorder %v42, 17
    %vm50 = vcmp.ge.s32.totalorder %v44, 17
    %vm51 = vmxor %vm45, %vm50
    %vm52 = vmxor %vm46, %vm50
    %vm53 = vmxor %vm47, %vm50
    %vm54 = vmxor %vm48, %vm50
    %vm55 = vmxor %vm49, %vm50
    %vm56 = vmxor %vm51, 1
    %vm57 = vmxor %vm52, 1
    %vm58 = vmxor %vm53, 1
    %vm59 = vmxor %vm54, 1
    %vm60 = vmxor %vm55, 1
    %v61 = vsel %vm56, 0.0, -1e+30
    %v62 = vsel %vm57, 0.0, -1e+30
    %v63 = vsel %vm58, 0.0, -1e+30
    %v64 = vsel %vm59, 0.0, -1e+30
    %v65 = vsel %vm60, 0.0, -1e+30
    %vm71 = vcmask 1041408
    %v72 = vrot.slane %v61, 6
    %v73 = vrot.slane %v62, 6
    %v74 = vsel %vm71, %v72, %v73
    %v75 = vrot.slane %v63, 6
    %v76 = vsel %vm71, %v73, %v75
    %v77 = vrot.slane %v64, 6
    %v78 = vsel %vm71, %v75, %v77
    %v79 = vrot.slane %v65, 6
    %v80 = vsel %vm71, %v77, %v79
    %vm86 = vcmask 1043456
    %v87 = vrot.slane %v61, 4
    %v88 = vrot.slane %v62, 4
    %v89 = vsel %vm86, %v87, %v88
    %v90 = vrot.slane %v63, 4
    %v91 = vsel %vm86, %v88, %v90
    %v92 = vrot.slane %v64, 4
    %v93 = vsel %vm86, %v90, %v92
    %v94 = vrot.slane %v65, 4
    %v95 = vsel %vm86, %v92, %v94
    %vm101 = vcmask 1045504
    %v102 = vrot.slane %v61, 2
    %v103 = vrot.slane %v62, 2
    %v104 = vsel %vm101, %v102, %v103
    %v105 = vrot.slane %v63, 2
    %v106 = vsel %vm101, %v103, %v105
    %v107 = vrot.slane %v64, 2
    %v108 = vsel %vm101, %v105, %v107
    %v109 = vrot.slane %v65, 2
    %v110 = vsel %vm101, %v107, %v109
    %v116 = vsel %vm71, %v65, %v72
    %v117 = vsel %vm86, %v80, %v87
    %v118 = vsel %vm101, %v95, %v102
    %v119 = vld [vmem:[%s0] sm:$0xff]
    %v120 = vld [vmem:[%s0 + $0x8] sm:$0xff]
    %v121 = vld [vmem:[%s0 + $0x10] sm:$0xff]
    %v122 = vld [vmem:[%s0 + $0x18] sm:$0xff]
    %v123 = vpack.c.bf16 %v120, %v119
    %v124 = vpack.c.bf16 %v122, %v121
    %v125 = vld [vmem:[%s2] sm:$0xf]
    %v126 = vld [vmem:[%s2 + $0x4] sm:$0xf]
    %v127 = vld [vmem:[%s2 + $0x8] sm:$0xf]
    %v128 = vld [vmem:[%s2 + $0xc] sm:$0xf]
    %v129 = vld [vmem:[%s2 + $0x10] sm:$0xf]
    %v130 = vld [vmem:[%s2 + $0x14] sm:$0xf]
    %v137 = vunpack.c.l.b16 %v125
    %v138 = vunpack.c.l.b16 %v126
    %v139 = vunpack.c.l.b16 %v127
    %v140 = vunpack.c.l.b16 %v128
    %v141 = vunpack.c.l.b16 %v129
    %v142 = vunpack.c.l.b16 %v130
    %v143 = vpack.c.b16 %v138, %v137
    %v144 = vpack.c.b16 %v140, %v139
    %v145 = vpack.c.b16 %v142, %v141
    %vm149 = vcmask 392192
    %v151 = vsel %vm149, %v123, 0
    %v154 = vsel %vm149, %v124, 0
    %156 = vmatprep.subr.bf16.mxu0 0
    %157 = vmatpush1.bf16.msra.mxu0 %v143
    %158 = vmatprep.subr.bf16.mxu0 0
    %159 = vmatpush1.bf16.msra.mxu0 %v144
    %160 = vmatprep.subr.bf16.mxu0 0
    %161 = vmatpush1.bf16.msra.mxu0 %v145
    %162 = vmatprep.subr.bf16.mxu0 0
    %163 = vmatpush1.bf16.msra.mxu0 0
    %164 = vmatprep.subr.bf16.mxu0 0
    %165 = vmatpush1.bf16.msra.mxu0 0
    %166 = vmatprep.subr.bf16.mxu0 0
    %167 = vmatpush1.bf16.msra.mxu0 0
    %168 = vmatprep.subr.bf16.mxu0 0
    %169 = vmatpush1.bf16.msra.mxu0 0
    %170 = vmatprep.subr.bf16.mxu0 0
    %171 = vmatpush1.bf16.msra.mxu0 0
    %172 = vmatprep.subr.bf16.mxu0 0
    %173 = vmatpush1.bf16.msra.mxu0 0
    %174 = vmatprep.subr.bf16.mxu0 0
    %175 = vmatpush1.bf16.msra.mxu0 0
    %176 = vmatprep.subr.bf16.mxu0 0
    %177 = vmatpush1.bf16.msra.mxu0 0
    %178 = vmatprep.subr.bf16.mxu0 0
    %179 = vmatpush1.bf16.msra.mxu0 0
    %180 = vmatprep.subr.bf16.mxu0 0
    %181 = vmatpush1.bf16.msra.mxu0 0
    %182 = vmatprep.subr.bf16.mxu0 0
    %183 = vmatpush1.bf16.msra.mxu0 0
    %184 = vmatprep.subr.bf16.mxu0 0
    %185 = vmatpush1.bf16.msra.mxu0 0
    %186 = vmatprep.subr.bf16.mxu0 0
    %187 = vmatpush1.bf16.msra.mxu0 0
    %188 = vmatprep.mubr.bf16.mxu0 0
    %189 = vmatmul.mubr.bf16.gmra.mrb[0].mxu0 %v151
    %v190 = vpop.f32.mrb[0].mxu0
    %v191 = vadd.f32 0.0, %v190
    %v192 = vpop.f32.mrb[0].mxu0
    %v193 = vpop.f32.mrb[0].mxu0
    %v194 = vadd.f32 0.0, %v193
    %v195 = vpop.f32.mrb[0].mxu0
    %196 = vmatprep.mubr.bf16.mxu0 0
    %197 = vmatmul.mubr.bf16.gmra.mrb[0].mxu0 %v154
    %v198 = vpop.f32.mrb[0].mxu0
    %v199 = vadd.f32 0.0, %v198
    %v200 = vpop.f32.mrb[0].mxu0
    %v201 = vpop.f32.mrb[0].mxu0
    %v202 = vadd.f32 0.0, %v201
    %v203 = vpop.f32.mrb[0].mxu0
    %204 = vdwg.mxu0
    %vm207 = vcmask 1040384
    %v208 = vrot.slane %v191, 7
    %v209 = vrot.slane %v194, 7
    %v210 = vsel %vm207, %v208, %v209
    %v216 = vrot.slane %v199, 6
    %v217 = vrot.slane %v202, 6
    %v218 = vsel %vm71, %v216, %v217
    %v222 = vsel %vm207, 0.0, %v208
    %v223 = vsel %vm207, %v209, 0.0
    %v224 = vsel %vm71, %v223, %v216
    %v225 = vld [vmem:[%s1] sm:$0xff]
    %v226 = vld [vmem:[%s1 + $0x8] sm:$0xff]
    %v227 = vld [vmem:[%s1 + $0x10] sm:$0xff]
    %v228 = vld [vmem:[%s1 + $0x18] sm:$0xff]
    %v229 = vld [vmem:[%s1 + $0x20] sm:$0x3]
    %v230 = vadd.f32 %v222, %v225
    %v231 = vadd.f32 %v210, %v226
    %v232 = vadd.f32 %v224, %v227
    %v233 = vadd.f32 %v218, %v228
    %v234 = vadd.f32 %v217, %v229
    %v235 = vld [vmem:[%s7] sm:$0xff]
    %vm236 = vcmask 261120
    %v237 = vsel %vm236, %v230, 0.0
    %238 = vadd.xlane.f32.xlu0 %v237
    %v239 = vpop.xlane.xlu0 %238
    %v240 = vsel %vm236, %v231, 0.0
    %241 = vadd.xlane.f32.xlu0 %v240
    %v242 = vpop.xlane.xlu0 %241
    %v243 = vsel %vm236, %v232, 0.0
    %244 = vadd.xlane.f32.xlu0 %v243
    %v245 = vpop.xlane.xlu0 %244
    %v246 = vsel %vm236, %v233, 0.0
    %247 = vadd.xlane.f32.xlu0 %v246
    %v248 = vpop.xlane.xlu0 %247
    %vm249 = vcmask 254976
    %v250 = vsel %vm249, %v234, 0.0
    %251 = vadd.xlane.f32.xlu0 %v250
    %v252 = vpop.xlane.xlu0 %251
    %v253 = vrcp.pop 32.0
    %v254 = vmul.f32 %v239, %v253
    %v255 = vmul.f32 %v242, %v253
    %v256 = vmul.f32 %v245, %v253
    %v257 = vmul.f32 %v248, %v253
    %v258 = vmul.f32 %v252, %v253
    %v259 = vsub.f32 %v230, %v254
    %v260 = vsub.f32 %v231, %v255
    %v261 = vsub.f32 %v232, %v256
    %v262 = vsub.f32 %v233, %v257
    %v263 = vsub.f32 %v234, %v258
    %v264 = vmul.f32 %v259, %v259
    %v265 = vmul.f32 %v260, %v260
    %v266 = vmul.f32 %v261, %v261
    %v267 = vmul.f32 %v262, %v262
    %v268 = vmul.f32 %v263, %v263
    %v269 = vsel %vm236, %v264, 0.0
    %270 = vadd.xlane.f32.xlu0 %v269
    %v271 = vpop.xlane.xlu0 %270
    %v272 = vsel %vm236, %v265, 0.0
    %273 = vadd.xlane.f32.xlu0 %v272
    %v274 = vpop.xlane.xlu0 %273
    %v275 = vsel %vm236, %v266, 0.0
    %276 = vadd.xlane.f32.xlu0 %v275
    %v277 = vpop.xlane.xlu0 %276
    %v278 = vsel %vm236, %v267, 0.0
    %279 = vadd.xlane.f32.xlu0 %v278
    %v280 = vpop.xlane.xlu0 %279
    %v281 = vsel %vm249, %v268, 0.0
    %282 = vadd.xlane.f32.xlu0 %v281
    %v283 = vpop.xlane.xlu0 %282
    %v284 = vmul.f32 %v271, %v253
    %v285 = vmul.f32 %v274, %v253
    %v286 = vmul.f32 %v277, %v253
    %v287 = vmul.f32 %v280, %v253
    %v288 = vmul.f32 %v283, %v253
    %v289 = vadd.f32 %v284, 1e-06
    %v290 = vadd.f32 %v285, 1e-06
    %v291 = vadd.f32 %v286, 1e-06
    %v292 = vadd.f32 %v287, 1e-06
    %v293 = vadd.f32 %v288, 1e-06
    %v294 = vrsqrt.pop %v289
    %v295 = vrsqrt.pop %v290
    %v296 = vrsqrt.pop %v291
    %v297 = vrsqrt.pop %v292
    %v298 = vrsqrt.pop %v293
    %v299 = vmul.f32 %v259, %v294
    %v300 = vmul.f32 %v260, %v295
    %v301 = vmul.f32 %v261, %v296
    %v302 = vmul.f32 %v262, %v297
    %v303 = vmul.f32 %v263, %v298
    %v304 = vlaneseq
    %v305 = vshrl.u32 %v304, 7
    %v306 = vsub.s32 0, %v305
    %v307 = vrot.slane %v235, %v306
    %v308 = vmul.f32 %v299, %v307
    %v309 = vmul.f32 %v300, %v307
    %v310 = vmul.f32 %v301, %v307
    %v311 = vmul.f32 %v302, %v307
    %v312 = vmul.f32 %v303, %v307
    %v313 = vlaneseq
    %v314 = vshrl.u32 %v313, 7
    %v315 = vsub.s32 1, %v314
    %v316 = vrot.slane %v235, %v315
    %v317 = vadd.f32 %v308, %v316
    %v318 = vadd.f32 %v309, %v316
    %v319 = vadd.f32 %v310, %v316
    %v320 = vadd.f32 %v311, %v316
    %v321 = vadd.f32 %v312, %v316
    %v322 = vpack.c.bf16 %v318, %v317
    %v323 = vpack.c.bf16 %v320, %v319
    %v324 = vpack.c.bf16 %v321, %v321
    %v325 = vld [vmem:[%s3] sm:$0xf]
    %v326 = vld [vmem:[%s3 + $0x4] sm:$0xf]
    %v327 = vld [vmem:[%s3 + $0x8] sm:$0xf]
    %v328 = vld [vmem:[%s3 + $0xc] sm:$0xf]
    %v329 = vlaneseq
    %v330 = vshrl.u32 %v329, 7
    %v331 = vsub.s32 2, %v330
    %v332 = vrot.slane %v235, %v331
    %v337 = vunpack.c.l.b16 %v325
    %v338 = vunpack.c.l.b16 %v326
    %v339 = vunpack.c.l.b16 %v327
    %v340 = vunpack.c.l.b16 %v328
    %v341 = vpack.c.b16 %v338, %v337
    %v342 = vpack.c.b16 %v340, %v339
    %v346 = vsel %vm236, %v322, 0
    %v349 = vsel %vm236, %v323, 0
    %v352 = vsel %vm236, %v324, 0
    %354 = vmatprep.subr.bf16.mxu0 0
    %355 = vmatpush1.bf16.msra.mxu0 %v341
    %356 = vmatprep.subr.bf16.mxu0 0
    %357 = vmatpush1.bf16.msra.mxu0 %v342
    %358 = vmatprep.subr.bf16.mxu0 0
    %359 = vmatpush1.bf16.msra.mxu0 0
    %360 = vmatprep.subr.bf16.mxu0 0
    %361 = vmatpush1.bf16.msra.mxu0 0
    %362 = vmatprep.subr.bf16.mxu0 0
    %363 = vmatpush1.bf16.msra.mxu0 0
    %364 = vmatprep.subr.bf16.mxu0 0
    %365 = vmatpush1.bf16.msra.mxu0 0
    %366 = vmatprep.subr.bf16.mxu0 0
    %367 = vmatpush1.bf16.msra.mxu0 0
    %368 = vmatprep.subr.bf16.mxu0 0
    %369 = vmatpush1.bf16.msra.mxu0 0
    %370 = vmatprep.subr.bf16.mxu0 0
    %371 = vmatpush1.bf16.msra.mxu0 0
    %372 = vmatprep.subr.bf16.mxu0 0
    %373 = vmatpush1.bf16.msra.mxu0 0
    %374 = vmatprep.subr.bf16.mxu0 0
    %375 = vmatpush1.bf16.msra.mxu0 0
    %376 = vmatprep.subr.bf16.mxu0 0
    %377 = vmatpush1.bf16.msra.mxu0 0
    %378 = vmatprep.subr.bf16.mxu0 0
    %379 = vmatpush1.bf16.msra.mxu0 0
    %380 = vmatprep.subr.bf16.mxu0 0
    %381 = vmatpush1.bf16.msra.mxu0 0
    %382 = vmatprep.subr.bf16.mxu0 0
    %383 = vmatpush1.bf16.msra.mxu0 0
    %384 = vmatprep.subr.bf16.mxu0 0
    %385 = vmatpush1.bf16.msra.mxu0 0
    %386 = vmatprep.mubr.bf16.mxu0 0
    %387 = vmatmul.mubr.bf16.gmra.mrb[0].mxu0 %v346
    %v388 = vpop.f32.mrb[0].mxu0
    %v389 = vadd.f32 %v332, %v388
    %v390 = vpop.f32.mrb[0].mxu0
    %v391 = vpop.f32.mrb[0].mxu0
    %v392 = vadd.f32 %v332, %v391
    %v393 = vpop.f32.mrb[0].mxu0
    %394 = vmatprep.mubr.bf16.mxu0 0
    %395 = vmatmul.mubr.bf16.gmra.mrb[0].mxu0 %v349
    %v396 = vpop.f32.mrb[0].mxu0
    %v397 = vadd.f32 %v332, %v396
    %v398 = vpop.f32.mrb[0].mxu0
    %v399 = vpop.f32.mrb[0].mxu0
    %v400 = vadd.f32 %v332, %v399
    %v401 = vpop.f32.mrb[0].mxu0
    %402 = vmatprep.mubr.bf16.mxu0 0
    %403 = vmatmul.mubr.bf16.gmra.mrb[0].mxu0 %v352
    %v404 = vpop.f32.mrb[0].mxu0
    %v405 = vadd.f32 %v332, %v404
    %v406 = vpop.f32.mrb[0].mxu0
    %v407 = vpop.f32.mrb[0].mxu0
    %v408 = vpop.f32.mrb[0].mxu0
    %409 = vdwg.mxu0
    %415 = vrot.lane.b32.xlu0 %v389, 96
    %v416 = vpop.permute.xlu0 %415
    %417 = vrot.lane.b32.xlu0 %v392, 96
    %v418 = vpop.permute.xlu0 %417
    %419 = vrot.lane.b32.xlu0 %v397, 96
    %v420 = vpop.permute.xlu0 %419
    %421 = vrot.lane.b32.xlu0 %v400, 96
    %v422 = vpop.permute.xlu0 %421
    %423 = vrot.lane.b32.xlu0 %v405, 96
    %v424 = vpop.permute.xlu0 %423
    %vm425 = vcmask 64512
    %v426 = vsel %vm425, %v389, 0
    %v428 = vsel %vm425, %v392, 0
    %v430 = vsel %vm425, %v397, 0
    %v432 = vsel %vm425, %v400, 0
    %v434 = vsel %vm425, %v405, 0
    %v436 = vsel %vm425, %v416, 0
    %v438 = vsel %vm425, %v418, 0
    %v440 = vsel %vm425, %v420, 0
    %v442 = vsel %vm425, %v422, 0
    %v444 = vsel %vm425, %v424, 0
    %446 = vmatprep.subr.mxu0 0.0
    %447 = vmatpush1.xpose.msra.mxu0 %v436
    %448 = vmatprep.subr.mxu0 0.0
    %449 = vmatpush1.xpose.msra.mxu0 %v438
    %450 = vmatprep.subr.mxu0 0.0
    %451 = vmatpush1.xpose.msra.mxu0 %v440
    %452 = vmatprep.subr.mxu0 0.0
    %453 = vmatpush1.xpose.msra.mxu0 %v442
    %454 = vmatprep.subr.mxu0 0.0
    %455 = vmatpush1.xpose.msra.mxu0 %v444
    %456 = vmatprep.subr.mxu0 0.0
    %457 = vmatpush1.xpose.msra.mxu0 0.0
    %458 = vmatprep.subr.mxu0 0.0
    %459 = vmatpush1.xpose.msra.mxu0 0.0
    %460 = vmatprep.subr.mxu0 0.0
    %461 = vmatpush1.xpose.msra.mxu0 0.0
    %462 = vmatprep.subr.mxu0 0.0
    %463 = vmatpush1.xpose.msra.mxu0 0.0
    %464 = vmatprep.subr.mxu0 0.0
    %465 = vmatpush1.xpose.msra.mxu0 0.0
    %466 = vmatprep.subr.mxu0 0.0
    %467 = vmatpush1.xpose.msra.mxu0 0.0
    %468 = vmatprep.subr.mxu0 0.0
    %469 = vmatpush1.xpose.msra.mxu0 0.0
    %470 = vmatprep.subr.mxu0 0.0
    %471 = vmatpush1.xpose.msra.mxu0 0.0
    %472 = vmatprep.subr.mxu0 0.0
    %473 = vmatpush1.xpose.msra.mxu0 0.0
    %474 = vmatprep.subr.mxu0 0.0
    %475 = vmatpush1.xpose.msra.mxu0 0.0
    %476 = vmatprep.subr.mxu0 0.0
    %477 = vmatpush1.xpose.msra.mxu0 0.0
    %478 = vmatprep.subr.mxu0 0.0
    %479 = vmatpush1.xpose.msra.mxu0 0.0
    %480 = vmatprep.subr.mxu0 0.0
    %481 = vmatpush1.xpose.msra.mxu0 0.0
    %482 = vmatprep.subr.mxu0 0.0
    %483 = vmatpush1.xpose.msra.mxu0 0.0
    %484 = vmatprep.subr.mxu0 0.0
    %485 = vmatpush1.xpose.msra.mxu0 0.0
    %486 = vmatprep.subr.mxu0 0.0
    %487 = vmatpush1.xpose.msra.mxu0 0.0
    %488 = vmatprep.subr.mxu0 0.0
    %489 = vmatpush1.xpose.msra.mxu0 0.0
    %490 = vmatprep.subr.mxu0 0.0
    %491 = vmatpush1.xpose.msra.mxu0 0.0
    %492 = vmatprep.subr.mxu0 0.0
    %493 = vmatpush1.xpose.msra.mxu0 0.0
    %494 = vmatprep.subr.mxu0 0.0
    %495 = vmatpush1.xpose.msra.mxu0 0.0
    %496 = vmatprep.subr.mxu0 0.0
    %497 = vmatpush1.xpose.msra.mxu0 0.0
    %498 = vmatprep.subr.mxu0 0.0
    %499 = vmatpush1.xpose.msra.mxu0 0.0
    %500 = vmatprep.subr.mxu0 0.0
    %501 = vmatpush1.xpose.msra.mxu0 0.0
    %502 = vmatprep.subr.mxu0 0.0
    %503 = vmatpush1.xpose.msra.mxu0 0.0
    %504 = vmatprep.subr.mxu0 0.0
    %505 = vmatpush1.xpose.msra.mxu0 0.0
    %506 = vmatprep.subr.mxu0 0.0
    %507 = vmatpush1.xpose.msra.mxu0 0.0
    %508 = vmatprep.subr.mxu0 0.0
    %509 = vmatpush1.xpose.msra.mxu0 0.0
    %510 = vmatprep.mubr.f32.mxu0 0.0
    %511 = vmatmul.mubr.f32.gmra.mrb[0].mxu0 %v426
    %v512 = vpop.f32.mrb[0].mxu0
    %v513 = vadd.f32 0.0, %v512
    %v514 = vpop.f32.mrb[0].mxu0
    %515 = vmatprep.mubr.f32.mxu0 0.0
    %516 = vmatmul.mubr.f32.gmra.mrb[0].mxu0 %v428
    %v517 = vpop.f32.mrb[0].mxu0
    %v518 = vadd.f32 0.0, %v517
    %v519 = vpop.f32.mrb[0].mxu0
    %520 = vmatprep.mubr.f32.mxu0 0.0
    %521 = vmatmul.mubr.f32.gmra.mrb[0].mxu0 %v430
    %v522 = vpop.f32.mrb[0].mxu0
    %v523 = vadd.f32 0.0, %v522
    %v524 = vpop.f32.mrb[0].mxu0
    %525 = vmatprep.mubr.f32.mxu0 0.0
    %526 = vmatmul.mubr.f32.gmra.mrb[0].mxu0 %v432
    %v527 = vpop.f32.mrb[0].mxu0
    %v528 = vadd.f32 0.0, %v527
    %v529 = vpop.f32.mrb[0].mxu0
    %530 = vmatprep.mubr.f32.mxu0 0.0
    %531 = vmatmul.mubr.f32.gmra.mrb[0].mxu0 %v434
    %v532 = vpop.f32.mrb[0].mxu0
    %v533 = vadd.f32 0.0, %v532
    %v534 = vpop.f32.mrb[0].mxu0
    %535 = vdwg.mxu0
    %536 = vrot.lane.b32.xlu0 %v389, 120
    %v537 = vpop.permute.xlu0 %536
    %538 = vrot.lane.b32.xlu0 %v392, 120
    %v539 = vpop.permute.xlu0 %538
    %540 = vrot.lane.b32.xlu0 %v397, 120
    %v541 = vpop.permute.xlu0 %540
    %542 = vrot.lane.b32.xlu0 %v400, 120
    %v543 = vpop.permute.xlu0 %542
    %544 = vrot.lane.b32.xlu0 %v405, 120
    %v545 = vpop.permute.xlu0 %544
    %546 = vrot.lane.b32.xlu0 %v389, 88
    %v547 = vpop.permute.xlu0 %546
    %548 = vrot.lane.b32.xlu0 %v392, 88
    %v549 = vpop.permute.xlu0 %548
    %550 = vrot.lane.b32.xlu0 %v397, 88
    %v551 = vpop.permute.xlu0 %550
    %552 = vrot.lane.b32.xlu0 %v400, 88
    %v553 = vpop.permute.xlu0 %552
    %554 = vrot.lane.b32.xlu0 %v405, 88
    %v555 = vpop.permute.xlu0 %554
    %v556 = vsel %vm425, %v537, 0
    %v558 = vsel %vm425, %v539, 0
    %v560 = vsel %vm425, %v541, 0
    %v562 = vsel %vm425, %v543, 0
    %v564 = vsel %vm425, %v545, 0
    %v566 = vsel %vm425, %v547, 0
    %v568 = vsel %vm425, %v549, 0
    %v570 = vsel %vm425, %v551, 0
    %v572 = vsel %vm425, %v553, 0
    %v574 = vsel %vm425, %v555, 0
    %576 = vmatprep.subr.mxu0 0.0
    %577 = vmatpush1.xpose.msra.mxu0 %v566
    %578 = vmatprep.subr.mxu0 0.0
    %579 = vmatpush1.xpose.msra.mxu0 %v568
    %580 = vmatprep.subr.mxu0 0.0
    %581 = vmatpush1.xpose.msra.mxu0 %v570
    %582 = vmatprep.subr.mxu0 0.0
    %583 = vmatpush1.xpose.msra.mxu0 %v572
    %584 = vmatprep.subr.mxu0 0.0
    %585 = vmatpush1.xpose.msra.mxu0 %v574
    %586 = vmatprep.subr.mxu0 0.0
    %587 = vmatpush1.xpose.msra.mxu0 0.0
    %588 = vmatprep.subr.mxu0 0.0
    %589 = vmatpush1.xpose.msra.mxu0 0.0
    %590 = vmatprep.subr.mxu0 0.0
    %591 = vmatpush1.xpose.msra.mxu0 0.0
    %592 = vmatprep.subr.mxu0 0.0
    %593 = vmatpush1.xpose.msra.mxu0 0.0
    %594 = vmatprep.subr.mxu0 0.0
    %595 = vmatpush1.xpose.msra.mxu0 0.0
    %596 = vmatprep.subr.mxu0 0.0
    %597 = vmatpush1.xpose.msra.mxu0 0.0
    %598 = vmatprep.subr.mxu0 0.0
    %599 = vmatpush1.xpose.msra.mxu0 0.0
    %600 = vmatprep.subr.mxu0 0.0
    %601 = vmatpush1.xpose.msra.mxu0 0.0
    %602 = vmatprep.subr.mxu0 0.0
    %603 = vmatpush1.xpose.msra.mxu0 0.0
    %604 = vmatprep.subr.mxu0 0.0
    %605 = vmatpush1.xpose.msra.mxu0 0.0
    %606 = vmatprep.subr.mxu0 0.0
    %607 = vmatpush1.xpose.msra.mxu0 0.0
    %608 = vmatprep.subr.mxu0 0.0
    %609 = vmatpush1.xpose.msra.mxu0 0.0
    %610 = vmatprep.subr.mxu0 0.0
    %611 = vmatpush1.xpose.msra.mxu0 0.0
    %612 = vmatprep.subr.mxu0 0.0
    %613 = vmatpush1.xpose.msra.mxu0 0.0
    %614 = vmatprep.subr.mxu0 0.0
    %615 = vmatpush1.xpose.msra.mxu0 0.0
    %616 = vmatprep.subr.mxu0 0.0
    %617 = vmatpush1.xpose.msra.mxu0 0.0
    %618 = vmatprep.subr.mxu0 0.0
    %619 = vmatpush1.xpose.msra.mxu0 0.0
    %620 = vmatprep.subr.mxu0 0.0
    %621 = vmatpush1.xpose.msra.mxu0 0.0
    %622 = vmatprep.subr.mxu0 0.0
    %623 = vmatpush1.xpose.msra.mxu0 0.0
    %624 = vmatprep.subr.mxu0 0.0
    %625 = vmatpush1.xpose.msra.mxu0 0.0
    %626 = vmatprep.subr.mxu0 0.0
    %627 = vmatpush1.xpose.msra.mxu0 0.0
    %628 = vmatprep.subr.mxu0 0.0
    %629 = vmatpush1.xpose.msra.mxu0 0.0
    %630 = vmatprep.subr.mxu0 0.0
    %631 = vmatpush1.xpose.msra.mxu0 0.0
    %632 = vmatprep.subr.mxu0 0.0
    %633 = vmatpush1.xpose.msra.mxu0 0.0
    %634 = vmatprep.subr.mxu0 0.0
    %635 = vmatpush1.xpose.msra.mxu0 0.0
    %636 = vmatprep.subr.mxu0 0.0
    %637 = vmatpush1.xpose.msra.mxu0 0.0
    %638 = vmatprep.subr.mxu0 0.0
    %639 = vmatpush1.xpose.msra.mxu0 0.0
    %640 = vmatprep.mubr.f32.mxu0 0.0
    %641 = vmatmul.mubr.f32.gmra.mrb[0].mxu0 %v556
    %v642 = vpop.f32.mrb[0].mxu0
    %v643 = vadd.f32 0.0, %v642
    %v644 = vpop.f32.mrb[0].mxu0
    %645 = vmatprep.mubr.f32.mxu0 0.0
    %646 = vmatmul.mubr.f32.gmra.mrb[0].mxu0 %v558
    %v647 = vpop.f32.mrb[0].mxu0
    %v648 = vadd.f32 0.0, %v647
    %v649 = vpop.f32.mrb[0].mxu0
    %650 = vmatprep.mubr.f32.mxu0 0.0
    %651 = vmatmul.mubr.f32.gmra.mrb[0].mxu0 %v560
    %v652 = vpop.f32.mrb[0].mxu0
    %v653 = vadd.f32 0.0, %v652
    %v654 = vpop.f32.mrb[0].mxu0
    %655 = vmatprep.mubr.f32.mxu0 0.0
    %656 = vmatmul.mubr.f32.gmra.mrb[0].mxu0 %v562
    %v657 = vpop.f32.mrb[0].mxu0
    %v658 = vadd.f32 0.0, %v657
    %v659 = vpop.f32.mrb[0].mxu0
    %660 = vmatprep.mubr.f32.mxu0 0.0
    %661 = vmatmul.mubr.f32.gmra.mrb[0].mxu0 %v564
    %v662 = vpop.f32.mrb[0].mxu0
    %v663 = vadd.f32 0.0, %v662
    %v664 = vpop.f32.mrb[0].mxu0
    %665 = vdwg.mxu0
    %666 = vrot.lane.b32.xlu0 %v389, 112
    %v667 = vpop.permute.xlu0 %666
    %668 = vrot.lane.b32.xlu0 %v392, 112
    %v669 = vpop.permute.xlu0 %668
    %670 = vrot.lane.b32.xlu0 %v397, 112
    %v671 = vpop.permute.xlu0 %670
    %672 = vrot.lane.b32.xlu0 %v400, 112
    %v673 = vpop.permute.xlu0 %672
    %674 = vrot.lane.b32.xlu0 %v405, 112
    %v675 = vpop.permute.xlu0 %674
    %676 = vrot.lane.b32.xlu0 %v389, 80
    %v677 = vpop.permute.xlu0 %676
    %678 = vrot.lane.b32.xlu0 %v392, 80
    %v679 = vpop.permute.xlu0 %678
    %680 = vrot.lane.b32.xlu0 %v397, 80
    %v681 = vpop.permute.xlu0 %680
    %682 = vrot.lane.b32.xlu0 %v400, 80
    %v683 = vpop.permute.xlu0 %682
    %684 = vrot.lane.b32.xlu0 %v405, 80
    %v685 = vpop.permute.xlu0 %684
    %v686 = vsel %vm425, %v667, 0
    %v688 = vsel %vm425, %v669, 0
    %v690 = vsel %vm425, %v671, 0
    %v692 = vsel %vm425, %v673, 0
    %v694 = vsel %vm425, %v675, 0
    %v696 = vsel %vm425, %v677, 0
    %v698 = vsel %vm425, %v679, 0
    %v700 = vsel %vm425, %v681, 0
    %v702 = vsel %vm425, %v683, 0
    %v704 = vsel %vm425, %v685, 0
    %706 = vmatprep.subr.mxu0 0.0
    %707 = vmatpush1.xpose.msra.mxu0 %v696
    %708 = vmatprep.subr.mxu0 0.0
    %709 = vmatpush1.xpose.msra.mxu0 %v698
    %710 = vmatprep.subr.mxu0 0.0
    %711 = vmatpush1.xpose.msra.mxu0 %v700
    %712 = vmatprep.subr.mxu0 0.0
    %713 = vmatpush1.xpose.msra.mxu0 %v702
    %714 = vmatprep.subr.mxu0 0.0
    %715 = vmatpush1.xpose.msra.mxu0 %v704
    %716 = vmatprep.subr.mxu0 0.0
    %717 = vmatpush1.xpose.msra.mxu0 0.0
    %718 = vmatprep.subr.mxu0 0.0
    %719 = vmatpush1.xpose.msra.mxu0 0.0
    %720 = vmatprep.subr.mxu0 0.0
    %721 = vmatpush1.xpose.msra.mxu0 0.0
    %722 = vmatprep.subr.mxu0 0.0
    %723 = vmatpush1.xpose.msra.mxu0 0.0
    %724 = vmatprep.subr.mxu0 0.0
    %725 = vmatpush1.xpose.msra.mxu0 0.0
    %726 = vmatprep.subr.mxu0 0.0
    %727 = vmatpush1.xpose.msra.mxu0 0.0
    %728 = vmatprep.subr.mxu0 0.0
    %729 = vmatpush1.xpose.msra.mxu0 0.0
    %730 = vmatprep.subr.mxu0 0.0
    %731 = vmatpush1.xpose.msra.mxu0 0.0
    %732 = vmatprep.subr.mxu0 0.0
    %733 = vmatpush1.xpose.msra.mxu0 0.0
    %734 = vmatprep.subr.mxu0 0.0
    %735 = vmatpush1.xpose.msra.mxu0 0.0
    %736 = vmatprep.subr.mxu0 0.0
    %737 = vmatpush1.xpose.msra.mxu0 0.0
    %738 = vmatprep.subr.mxu0 0.0
    %739 = vmatpush1.xpose.msra.mxu0 0.0
    %740 = vmatprep.subr.mxu0 0.0
    %741 = vmatpush1.xpose.msra.mxu0 0.0
    %742 = vmatprep.subr.mxu0 0.0
    %743 = vmatpush1.xpose.msra.mxu0 0.0
    %744 = vmatprep.subr.mxu0 0.0
    %745 = vmatpush1.xpose.msra.mxu0 0.0
    %746 = vmatprep.subr.mxu0 0.0
    %747 = vmatpush1.xpose.msra.mxu0 0.0
    %748 = vmatprep.subr.mxu0 0.0
    %749 = vmatpush1.xpose.msra.mxu0 0.0
    %750 = vmatprep.subr.mxu0 0.0
    %751 = vmatpush1.xpose.msra.mxu0 0.0
    %752 = vmatprep.subr.mxu0 0.0
    %753 = vmatpush1.xpose.msra.mxu0 0.0
    %754 = vmatprep.subr.mxu0 0.0
    %755 = vmatpush1.xpose.msra.mxu0 0.0
    %756 = vmatprep.subr.mxu0 0.0
    %757 = vmatpush1.xpose.msra.mxu0 0.0
    %758 = vmatprep.subr.mxu0 0.0
    %759 = vmatpush1.xpose.msra.mxu0 0.0
    %760 = vmatprep.subr.mxu0 0.0
    %761 = vmatpush1.xpose.msra.mxu0 0.0
    %762 = vmatprep.subr.mxu0 0.0
    %763 = vmatpush1.xpose.msra.mxu0 0.0
    %764 = vmatprep.subr.mxu0 0.0
    %765 = vmatpush1.xpose.msra.mxu0 0.0
    %766 = vmatprep.subr.mxu0 0.0
    %767 = vmatpush1.xpose.msra.mxu0 0.0
    %768 = vmatprep.subr.mxu0 0.0
    %769 = vmatpush1.xpose.msra.mxu0 0.0
    %770 = vmatprep.mubr.f32.mxu0 0.0
    %771 = vmatmul.mubr.f32.gmra.mrb[0].mxu0 %v686
    %v772 = vpop.f32.mrb[0].mxu0
    %v773 = vadd.f32 0.0, %v772
    %v774 = vpop.f32.mrb[0].mxu0
    %775 = vmatprep.mubr.f32.mxu0 0.0
    %776 = vmatmul.mubr.f32.gmra.mrb[0].mxu0 %v688
    %v777 = vpop.f32.mrb[0].mxu0
    %v778 = vadd.f32 0.0, %v777
    %v779 = vpop.f32.mrb[0].mxu0
    %780 = vmatprep.mubr.f32.mxu0 0.0
    %781 = vmatmul.mubr.f32.gmra.mrb[0].mxu0 %v690
    %v782 = vpop.f32.mrb[0].mxu0
    %v783 = vadd.f32 0.0, %v782
    %v784 = vpop.f32.mrb[0].mxu0
    %785 = vmatprep.mubr.f32.mxu0 0.0
    %786 = vmatmul.mubr.f32.gmra.mrb[0].mxu0 %v692
    %v787 = vpop.f32.mrb[0].mxu0
    %v788 = vadd.f32 0.0, %v787
    %v789 = vpop.f32.mrb[0].mxu0
    %790 = vmatprep.mubr.f32.mxu0 0.0
    %791 = vmatmul.mubr.f32.gmra.mrb[0].mxu0 %v694
    %v792 = vpop.f32.mrb[0].mxu0
    %v793 = vadd.f32 0.0, %v792
    %v794 = vpop.f32.mrb[0].mxu0
    %795 = vdwg.mxu0
    %796 = vrot.lane.b32.xlu0 %v389, 104
    %v797 = vpop.permute.xlu0 %796
    %798 = vrot.lane.b32.xlu0 %v392, 104
    %v799 = vpop.permute.xlu0 %798
    %800 = vrot.lane.b32.xlu0 %v397, 104
    %v801 = vpop.permute.xlu0 %800
    %802 = vrot.lane.b32.xlu0 %v400, 104
    %v803 = vpop.permute.xlu0 %802
    %804 = vrot.lane.b32.xlu0 %v405, 104
    %v805 = vpop.permute.xlu0 %804
    %806 = vrot.lane.b32.xlu0 %v389, 72
    %v807 = vpop.permute.xlu0 %806
    %808 = vrot.lane.b32.xlu0 %v392, 72
    %v809 = vpop.permute.xlu0 %808
    %810 = vrot.lane.b32.xlu0 %v397, 72
    %v811 = vpop.permute.xlu0 %810
    %812 = vrot.lane.b32.xlu0 %v400, 72
    %v813 = vpop.permute.xlu0 %812
    %814 = vrot.lane.b32.xlu0 %v405, 72
    %v815 = vpop.permute.xlu0 %814
    %v816 = vsel %vm425, %v797, 0
    %v818 = vsel %vm425, %v799, 0
    %v820 = vsel %vm425, %v801, 0
    %v822 = vsel %vm425, %v803, 0
    %v824 = vsel %vm425, %v805, 0
    %v826 = vsel %vm425, %v807, 0
    %v828 = vsel %vm425, %v809, 0
    %v830 = vsel %vm425, %v811, 0
    %v832 = vsel %vm425, %v813, 0
    %v834 = vsel %vm425, %v815, 0
    %836 = vmatprep.subr.mxu0 0.0
    %837 = vmatpush1.xpose.msra.mxu0 %v826
    %838 = vmatprep.subr.mxu0 0.0
    %839 = vmatpush1.xpose.msra.mxu0 %v828
    %840 = vmatprep.subr.mxu0 0.0
    %841 = vmatpush1.xpose.msra.mxu0 %v830
    %842 = vmatprep.subr.mxu0 0.0
    %843 = vmatpush1.xpose.msra.mxu0 %v832
    %844 = vmatprep.subr.mxu0 0.0
    %845 = vmatpush1.xpose.msra.mxu0 %v834
    %846 = vmatprep.subr.mxu0 0.0
    %847 = vmatpush1.xpose.msra.mxu0 0.0
    %848 = vmatprep.subr.mxu0 0.0
    %849 = vmatpush1.xpose.msra.mxu0 0.0
    %850 = vmatprep.subr.mxu0 0.0
    %851 = vmatpush1.xpose.msra.mxu0 0.0
    %852 = vmatprep.subr.mxu0 0.0
    %853 = vmatpush1.xpose.msra.mxu0 0.0
    %854 = vmatprep.subr.mxu0 0.0
    %855 = vmatpush1.xpose.msra.mxu0 0.0
    %856 = vmatprep.subr.mxu0 0.0
    %857 = vmatpush1.xpose.msra.mxu0 0.0
    %858 = vmatprep.subr.mxu0 0.0
    %859 = vmatpush1.xpose.msra.mxu0 0.0
    %860 = vmatprep.subr.mxu0 0.0
    %861 = vmatpush1.xpose.msra.mxu0 0.0
    %862 = vmatprep.subr.mxu0 0.0
    %863 = vmatpush1.xpose.msra.mxu0 0.0
    %864 = vmatprep.subr.mxu0 0.0
    %865 = vmatpush1.xpose.msra.mxu0 0.0
    %866 = vmatprep.subr.mxu0 0.0
    %867 = vmatpush1.xpose.msra.mxu0 0.0
    %868 = vmatprep.subr.mxu0 0.0
    %869 = vmatpush1.xpose.msra.mxu0 0.0
    %870 = vmatprep.subr.mxu0 0.0
    %871 = vmatpush1.xpose.msra.mxu0 0.0
    %872 = vmatprep.subr.mxu0 0.0
    %873 = vmatpush1.xpose.msra.mxu0 0.0
    %874 = vmatprep.subr.mxu0 0.0
    %875 = vmatpush1.xpose.msra.mxu0 0.0
    %876 = vmatprep.subr.mxu0 0.0
    %877 = vmatpush1.xpose.msra.mxu0 0.0
    %878 = vmatprep.subr.mxu0 0.0
    %879 = vmatpush1.xpose.msra.mxu0 0.0
    %880 = vmatprep.subr.mxu0 0.0
    %881 = vmatpush1.xpose.msra.mxu0 0.0
    %882 = vmatprep.subr.mxu0 0.0
    %883 = vmatpush1.xpose.msra.mxu0 0.0
    %884 = vmatprep.subr.mxu0 0.0
    %885 = vmatpush1.xpose.msra.mxu0 0.0
    %886 = vmatprep.subr.mxu0 0.0
    %887 = vmatpush1.xpose.msra.mxu0 0.0
    %888 = vmatprep.subr.mxu0 0.0
    %889 = vmatpush1.xpose.msra.mxu0 0.0
    %890 = vmatprep.subr.mxu0 0.0
    %891 = vmatpush1.xpose.msra.mxu0 0.0
    %892 = vmatprep.subr.mxu0 0.0
    %893 = vmatpush1.xpose.msra.mxu0 0.0
    %894 = vmatprep.subr.mxu0 0.0
    %895 = vmatpush1.xpose.msra.mxu0 0.0
    %896 = vmatprep.subr.mxu0 0.0
    %897 = vmatpush1.xpose.msra.mxu0 0.0
    %898 = vmatprep.subr.mxu0 0.0
    %899 = vmatpush1.xpose.msra.mxu0 0.0
    %900 = vmatprep.mubr.f32.mxu0 0.0
    %901 = vmatmul.mubr.f32.gmra.mrb[0].mxu0 %v816
    %v902 = vpop.f32.mrb[0].mxu0
    %v903 = vadd.f32 0.0, %v902
    %v904 = vpop.f32.mrb[0].mxu0
    %905 = vmatprep.mubr.f32.mxu0 0.0
    %906 = vmatmul.mubr.f32.gmra.mrb[0].mxu0 %v818
    %v907 = vpop.f32.mrb[0].mxu0
    %v908 = vadd.f32 0.0, %v907
    %v909 = vpop.f32.mrb[0].mxu0
    %910 = vmatprep.mubr.f32.mxu0 0.0
    %911 = vmatmul.mubr.f32.gmra.mrb[0].mxu0 %v820
    %v912 = vpop.f32.mrb[0].mxu0
    %v913 = vadd.f32 0.0, %v912
    %v914 = vpop.f32.mrb[0].mxu0
    %915 = vmatprep.mubr.f32.mxu0 0.0
    %916 = vmatmul.mubr.f32.gmra.mrb[0].mxu0 %v822
    %v917 = vpop.f32.mrb[0].mxu0
    %v918 = vadd.f32 0.0, %v917
    %v919 = vpop.f32.mrb[0].mxu0
    %920 = vmatprep.mubr.f32.mxu0 0.0
    %921 = vmatmul.mubr.f32.gmra.mrb[0].mxu0 %v824
    %v922 = vpop.f32.mrb[0].mxu0
    %v923 = vadd.f32 0.0, %v922
    %v924 = vpop.f32.mrb[0].mxu0
    %925 = vdwg.mxu0
    %v931 = vrot.slane %v643, 6
    %v932 = vrot.slane %v648, 6
    %v933 = vsel %vm71, %v931, %v932
    %v934 = vrot.slane %v653, 6
    %v935 = vsel %vm71, %v932, %v934
    %v936 = vrot.slane %v658, 6
    %v937 = vsel %vm71, %v934, %v936
    %v938 = vrot.slane %v663, 6
    %v939 = vsel %vm71, %v936, %v938
    %v950 = vrot.slane %v773, 4
    %v951 = vrot.slane %v778, 4
    %v952 = vsel %vm86, %v950, %v951
    %v953 = vrot.slane %v783, 4
    %v954 = vsel %vm86, %v951, %v953
    %v955 = vrot.slane %v788, 4
    %v956 = vsel %vm86, %v953, %v955
    %v957 = vrot.slane %v793, 4
    %v958 = vsel %vm86, %v955, %v957
    %v969 = vrot.slane %v903, 2
    %v970 = vrot.slane %v908, 2
    %v971 = vsel %vm101, %v969, %v970
    %v972 = vrot.slane %v913, 2
    %v973 = vsel %vm101, %v970, %v972
    %v974 = vrot.slane %v918, 2
    %v975 = vsel %vm101, %v972, %v974
    %v976 = vrot.slane %v923, 2
    %v977 = vsel %vm101, %v974, %v976
    %v983 = vsel %vm71, %v533, %v931
    %v984 = vsel %vm86, %v939, %v950
    %v985 = vsel %vm101, %v958, %v969
    %v986 = vadd.f32 %v513, %v61
    %v987 = vadd.f32 %v518, %v62
    %v988 = vadd.f32 %v523, %v63
    %v989 = vadd.f32 %v528, %v64
    %v990 = vadd.f32 %v983, %v116
    %v991 = vadd.f32 %v933, %v74
    %v992 = vadd.f32 %v935, %v76
    %v993 = vadd.f32 %v937, %v78
    %v994 = vadd.f32 %v984, %v117
    %v995 = vadd.f32 %v952, %v89
    %v996 = vadd.f32 %v954, %v91
    %v997 = vadd.f32 %v956, %v93
    %v998 = vadd.f32 %v985, %v118
    %v999 = vadd.f32 %v971, %v104
    %v1000 = vadd.f32 %v973, %v106
    %v1001 = vadd.f32 %v975, %v108
    %v1002 = vadd.f32 %v977, %v110
    %vm1003 = vcmask 277504
    %v1004 = vsel %vm1003, %v986, -inf
    %1005 = vmax.xlane.f32.xlu0 %v1004
    %v1006 = vpop.xlane.xlu0 %1005
    %v1007 = vsel %vm1003, %v987, -inf
    %1008 = vmax.xlane.f32.xlu0 %v1007
    %v1009 = vpop.xlane.xlu0 %1008
    %v1010 = vsel %vm1003, %v988, -inf
    %1011 = vmax.xlane.f32.xlu0 %v1010
    %v1012 = vpop.xlane.xlu0 %1011
    %v1013 = vsel %vm1003, %v989, -inf
    %1014 = vmax.xlane.f32.xlu0 %v1013
    %v1015 = vpop.xlane.xlu0 %1014
    %v1016 = vsel %vm1003, %v990, -inf
    %1017 = vmax.xlane.f32.xlu0 %v1016
    %v1018 = vpop.xlane.xlu0 %1017
    %v1019 = vsel %vm1003, %v991, -inf
    %1020 = vmax.xlane.f32.xlu0 %v1019
    %v1021 = vpop.xlane.xlu0 %1020
    %v1022 = vsel %vm1003, %v992, -inf
    %1023 = vmax.xlane.f32.xlu0 %v1022
    %v1024 = vpop.xlane.xlu0 %1023
    %v1025 = vsel %vm1003, %v993, -inf
    %1026 = vmax.xlane.f32.xlu0 %v1025
    %v1027 = vpop.xlane.xlu0 %1026
    %v1028 = vsel %vm1003, %v994, -inf
    %1029 = vmax.xlane.f32.xlu0 %v1028
    %v1030 = vpop.xlane.xlu0 %1029
    %v1031 = vsel %vm1003, %v995, -inf
    %1032 = vmax.xlane.f32.xlu0 %v1031
    %v1033 = vpop.xlane.xlu0 %1032
    %v1034 = vsel %vm1003, %v996, -inf
    %1035 = vmax.xlane.f32.xlu0 %v1034
    %v1036 = vpop.xlane.xlu0 %1035
    %v1037 = vsel %vm1003, %v997, -inf
    %1038 = vmax.xlane.f32.xlu0 %v1037
    %v1039 = vpop.xlane.xlu0 %1038
    %v1040 = vsel %vm1003, %v998, -inf
    %1041 = vmax.xlane.f32.xlu0 %v1040
    %v1042 = vpop.xlane.xlu0 %1041
    %v1043 = vsel %vm1003, %v999, -inf
    %1044 = vmax.xlane.f32.xlu0 %v1043
    %v1045 = vpop.xlane.xlu0 %1044
    %v1046 = vsel %vm1003, %v1000, -inf
    %1047 = vmax.xlane.f32.xlu0 %v1046
    %v1048 = vpop.xlane.xlu0 %1047
    %v1049 = vsel %vm1003, %v1001, -inf
    %1050 = vmax.xlane.f32.xlu0 %v1049
    %v1051 = vpop.xlane.xlu0 %1050
    %v1052 = vsel %vm1003, %v1002, -inf
    %1053 = vmax.xlane.f32.xlu0 %v1052
    %v1054 = vpop.xlane.xlu0 %1053
    %v1055 = vsub.f32 %v986, %v1006
    %v1056 = vsub.f32 %v987, %v1009
    %v1057 = vsub.f32 %v988, %v1012
    %v1058 = vsub.f32 %v989, %v1015
    %v1059 = vsub.f32 %v990, %v1018
    %v1060 = vsub.f32 %v991, %v1021
    %v1061 = vsub.f32 %v992, %v1024
    %v1062 = vsub.f32 %v993, %v1027
    %v1063 = vsub.f32 %v994, %v1030
    %v1064 = vsub.f32 %v995, %v1033
    %v1065 = vsub.f32 %v996, %v1036
    %v1066 = vsub.f32 %v997, %v1039
    %v1067 = vsub.f32 %v998, %v1042
    %v1068 = vsub.f32 %v999, %v1045
    %v1069 = vsub.f32 %v1000, %v1048
    %v1070 = vsub.f32 %v1001, %v1051
    %v1071 = vsub.f32 %v1002, %v1054
    %v1072 = vmul.f32 %v1055, 1.442695
    %v1073 = vpow.pop %v1072
    %v1074 = vmul.f32 %v1056, 1.442695
    %v1075 = vpow.pop %v1074
    %v1076 = vmul.f32 %v1057, 1.442695
    %v1077 = vpow.pop %v1076
    %v1078 = vmul.f32 %v1058, 1.442695
    %v1079 = vpow.pop %v1078
    %v1080 = vmul.f32 %v1059, 1.442695
    %v1081 = vpow.pop %v1080
    %v1082 = vmul.f32 %v1060, 1.442695
    %v1083 = vpow.pop %v1082
    %v1084 = vmul.f32 %v1061, 1.442695
    %v1085 = vpow.pop %v1084
    %v1086 = vmul.f32 %v1062, 1.442695
    %v1087 = vpow.pop %v1086
    %v1088 = vmul.f32 %v1063, 1.442695
    %v1089 = vpow.pop %v1088
    %v1090 = vmul.f32 %v1064, 1.442695
    %v1091 = vpow.pop %v1090
    %v1092 = vmul.f32 %v1065, 1.442695
    %v1093 = vpow.pop %v1092
    %v1094 = vmul.f32 %v1066, 1.442695
    %v1095 = vpow.pop %v1094
    %v1096 = vmul.f32 %v1067, 1.442695
    %v1097 = vpow.pop %v1096
    %v1098 = vmul.f32 %v1068, 1.442695
    %v1099 = vpow.pop %v1098
    %v1100 = vmul.f32 %v1069, 1.442695
    %v1101 = vpow.pop %v1100
    %v1102 = vmul.f32 %v1070, 1.442695
    %v1103 = vpow.pop %v1102
    %v1104 = vmul.f32 %v1071, 1.442695
    %v1105 = vpow.pop %v1104
    %v1106 = vsel %vm1003, %v1073, 0.0
    %1107 = vadd.xlane.f32.xlu0 %v1106
    %v1108 = vpop.xlane.xlu0 %1107
    %v1109 = vsel %vm1003, %v1075, 0.0
    %1110 = vadd.xlane.f32.xlu0 %v1109
    %v1111 = vpop.xlane.xlu0 %1110
    %v1112 = vsel %vm1003, %v1077, 0.0
    %1113 = vadd.xlane.f32.xlu0 %v1112
    %v1114 = vpop.xlane.xlu0 %1113
    %v1115 = vsel %vm1003, %v1079, 0.0
    %1116 = vadd.xlane.f32.xlu0 %v1115
    %v1117 = vpop.xlane.xlu0 %1116
    %v1118 = vsel %vm1003, %v1081, 0.0
    %1119 = vadd.xlane.f32.xlu0 %v1118
    %v1120 = vpop.xlane.xlu0 %1119
    %v1121 = vsel %vm1003, %v1083, 0.0
    %1122 = vadd.xlane.f32.xlu0 %v1121
    %v1123 = vpop.xlane.xlu0 %1122
    %v1124 = vsel %vm1003, %v1085, 0.0
    %1125 = vadd.xlane.f32.xlu0 %v1124
    %v1126 = vpop.xlane.xlu0 %1125
    %v1127 = vsel %vm1003, %v1087, 0.0
    %1128 = vadd.xlane.f32.xlu0 %v1127
    %v1129 = vpop.xlane.xlu0 %1128
    %v1130 = vsel %vm1003, %v1089, 0.0
    %1131 = vadd.xlane.f32.xlu0 %v1130
    %v1132 = vpop.xlane.xlu0 %1131
    %v1133 = vsel %vm1003, %v1091, 0.0
    %1134 = vadd.xlane.f32.xlu0 %v1133
    %v1135 = vpop.xlane.xlu0 %1134
    %v1136 = vsel %vm1003, %v1093, 0.0
    %1137 = vadd.xlane.f32.xlu0 %v1136
    %v1138 = vpop.xlane.xlu0 %1137
    %v1139 = vsel %vm1003, %v1095, 0.0
    %1140 = vadd.xlane.f32.xlu0 %v1139
    %v1141 = vpop.xlane.xlu0 %1140
    %v1142 = vsel %vm1003, %v1097, 0.0
    %1143 = vadd.xlane.f32.xlu0 %v1142
    %v1144 = vpop.xlane.xlu0 %1143
    %v1145 = vsel %vm1003, %v1099, 0.0
    %1146 = vadd.xlane.f32.xlu0 %v1145
    %v1147 = vpop.xlane.xlu0 %1146
    %v1148 = vsel %vm1003, %v1101, 0.0
    %1149 = vadd.xlane.f32.xlu0 %v1148
    %v1150 = vpop.xlane.xlu0 %1149
    %v1151 = vsel %vm1003, %v1103, 0.0
    %1152 = vadd.xlane.f32.xlu0 %v1151
    %v1153 = vpop.xlane.xlu0 %1152
    %v1154 = vsel %vm1003, %v1105, 0.0
    %1155 = vadd.xlane.f32.xlu0 %v1154
    %v1156 = vpop.xlane.xlu0 %1155
    %v1157 = vrcp.pop %v1108
    %v1158 = vrcp.pop %v1111
    %v1159 = vrcp.pop %v1114
    %v1160 = vrcp.pop %v1117
    %v1161 = vrcp.pop %v1120
    %v1162 = vrcp.pop %v1123
    %v1163 = vrcp.pop %v1126
    %v1164 = vrcp.pop %v1129
    %v1165 = vrcp.pop %v1132
    %v1166 = vrcp.pop %v1135
    %v1167 = vrcp.pop %v1138
    %v1168 = vrcp.pop %v1141
    %v1169 = vrcp.pop %v1144
    %v1170 = vrcp.pop %v1147
    %v1171 = vrcp.pop %v1150
    %v1172 = vrcp.pop %v1153
    %v1173 = vrcp.pop %v1156
    %v1174 = vmul.f32 %v1073, %v1157
    %v1175 = vmul.f32 %v1075, %v1158
    %v1176 = vmul.f32 %v1077, %v1159
    %v1177 = vmul.f32 %v1079, %v1160
    %v1178 = vmul.f32 %v1081, %v1161
    %v1179 = vmul.f32 %v1083, %v1162
    %v1180 = vmul.f32 %v1085, %v1163
    %v1181 = vmul.f32 %v1087, %v1164
    %v1182 = vmul.f32 %v1089, %v1165
    %v1183 = vmul.f32 %v1091, %v1166
    %v1184 = vmul.f32 %v1093, %v1167
    %v1185 = vmul.f32 %v1095, %v1168
    %v1186 = vmul.f32 %v1097, %v1169
    %v1187 = vmul.f32 %v1099, %v1170
    %v1188 = vmul.f32 %v1101, %v1171
    %v1189 = vmul.f32 %v1103, %v1172
    %v1190 = vmul.f32 %v1105, %v1173
    %v1191 = vpack.c.bf16 %v1175, %v1174
    %v1192 = vpack.c.bf16 %v1177, %v1176
    %v1193 = vpack.c.bf16 %v1178, %v1178
    %v1194 = vpack.c.bf16 %v392, %v389
    %v1195 = vpack.c.bf16 %v400, %v397
    %v1196 = vpack.c.bf16 %v405, %v405
    %1200 = vrot.lane.b32.xlu0 %v1194, 64
    %v1201 = vpop.permute.xlu0 %1200
    %1202 = vrot.lane.b32.xlu0 %v1195, 64
    %v1203 = vpop.permute.xlu0 %1202
    %1204 = vrot.lane.b32.xlu0 %v1196, 64
    %v1205 = vpop.permute.xlu0 %1204
    %v1209 = vsel %vm1003, %v1191, 0
    %v1212 = vsel %vm1003, %v1192, 0
    %v1215 = vsel %vm1003, %v1193, 0
    %v1218 = vsel %vm207, %v1205, 0
    %1220 = vmatprep.subr.bf16.mxu0 0
    %1221 = vmatpush1.bf16.msra.mxu0 %v1201
    %1222 = vmatprep.subr.bf16.mxu0 0
    %1223 = vmatpush1.bf16.msra.mxu0 %v1203
    %1224 = vmatprep.subr.bf16.mxu0 0
    %1225 = vmatpush1.bf16.msra.mxu0 %v1218
    %1226 = vmatprep.subr.bf16.mxu0 0
    %1227 = vmatpush1.bf16.msra.mxu0 0
    %1228 = vmatprep.subr.bf16.mxu0 0
    %1229 = vmatpush1.bf16.msra.mxu0 0
    %1230 = vmatprep.subr.bf16.mxu0 0
    %1231 = vmatpush1.bf16.msra.mxu0 0
    %1232 = vmatprep.subr.bf16.mxu0 0
    %1233 = vmatpush1.bf16.msra.mxu0 0
    %1234 = vmatprep.subr.bf16.mxu0 0
    %1235 = vmatpush1.bf16.msra.mxu0 0
    %1236 = vmatprep.subr.bf16.mxu0 0
    %1237 = vmatpush1.bf16.msra.mxu0 0
    %1238 = vmatprep.subr.bf16.mxu0 0
    %1239 = vmatpush1.bf16.msra.mxu0 0
    %1240 = vmatprep.subr.bf16.mxu0 0
    %1241 = vmatpush1.bf16.msra.mxu0 0
    %1242 = vmatprep.subr.bf16.mxu0 0
    %1243 = vmatpush1.bf16.msra.mxu0 0
    %1244 = vmatprep.subr.bf16.mxu0 0
    %1245 = vmatpush1.bf16.msra.mxu0 0
    %1246 = vmatprep.subr.bf16.mxu0 0
    %1247 = vmatpush1.bf16.msra.mxu0 0
    %1248 = vmatprep.subr.bf16.mxu0 0
    %1249 = vmatpush1.bf16.msra.mxu0 0
    %1250 = vmatprep.subr.bf16.mxu0 0
    %1251 = vmatpush1.bf16.msra.mxu0 0
    %1252 = vmatprep.mubr.bf16.mxu0 0
    %1253 = vmatmul.mubr.bf16.gmra.mrb[0].mxu0 %v1209
    %v1254 = vpop.f32.mrb[0].mxu0
    %v1255 = vadd.f32 0.0, %v1254
    %v1256 = vpop.f32.mrb[0].mxu0
    %v1257 = vpop.f32.mrb[0].mxu0
    %v1258 = vadd.f32 0.0, %v1257
    %v1259 = vpop.f32.mrb[0].mxu0
    %1260 = vmatprep.mubr.bf16.mxu0 0
    %1261 = vmatmul.mubr.bf16.gmra.mrb[0].mxu0 %v1212
    %v1262 = vpop.f32.mrb[0].mxu0
    %v1263 = vadd.f32 0.0, %v1262
    %v1264 = vpop.f32.mrb[0].mxu0
    %v1265 = vpop.f32.mrb[0].mxu0
    %v1266 = vadd.f32 0.0, %v1265
    %v1267 = vpop.f32.mrb[0].mxu0
    %1268 = vmatprep.mubr.bf16.mxu0 0
    %1269 = vmatmul.mubr.bf16.gmra.mrb[0].mxu0 %v1215
    %v1270 = vpop.f32.mrb[0].mxu0
    %v1271 = vadd.f32 0.0, %v1270
    %v1272 = vpop.f32.mrb[0].mxu0
    %v1273 = vpop.f32.mrb[0].mxu0
    %v1274 = vpop.f32.mrb[0].mxu0
    %1275 = vdwg.mxu0
    %v1276 = vpack.c.bf16 %v1179, %v1178
    %v1277 = vpack.c.bf16 %v1181, %v1180
    %v1278 = vpack.c.bf16 %v1182, %v1182
    %vm1282 = vcmask 1046528
    %v1283 = vrot.slane %v1276, 1
    %v1284 = vrot.slane %v1277, 1
    %v1285 = vsel %vm1282, %v1283, %v1284
    %v1286 = vrot.slane %v1278, 1
    %v1287 = vsel %vm1282, %v1284, %v1286
    %1288 = vrot.lane.b32.xlu0 %v1194, 56
    %v1289 = vpop.permute.xlu0 %1288
    %1290 = vrot.lane.b32.xlu0 %v1195, 56
    %v1291 = vpop.permute.xlu0 %1290
    %1292 = vrot.lane.b32.xlu0 %v1196, 56
    %v1293 = vpop.permute.xlu0 %1292
    %v1297 = vsel %vm1003, %v1285, 0
    %v1300 = vsel %vm1003, %v1287, 0
    %v1303 = vsel %vm1003, %v1286, 0
    %v1306 = vsel %vm207, %v1293, 0
    %1308 = vmatprep.subr.bf16.mxu0 0
    %1309 = vmatpush1.bf16.msra.mxu0 %v1289
    %1310 = vmatprep.subr.bf16.mxu0 0
    %1311 = vmatpush1.bf16.msra.mxu0 %v1291
    %1312 = vmatprep.subr.bf16.mxu0 0
    %1313 = vmatpush1.bf16.msra.mxu0 %v1306
    %1314 = vmatprep.subr.bf16.mxu0 0
    %1315 = vmatpush1.bf16.msra.mxu0 0
    %1316 = vmatprep.subr.bf16.mxu0 0
    %1317 = vmatpush1.bf16.msra.mxu0 0
    %1318 = vmatprep.subr.bf16.mxu0 0
    %1319 = vmatpush1.bf16.msra.mxu0 0
    %1320 = vmatprep.subr.bf16.mxu0 0
    %1321 = vmatpush1.bf16.msra.mxu0 0
    %1322 = vmatprep.subr.bf16.mxu0 0
    %1323 = vmatpush1.bf16.msra.mxu0 0
    %1324 = vmatprep.subr.bf16.mxu0 0
    %1325 = vmatpush1.bf16.msra.mxu0 0
    %1326 = vmatprep.subr.bf16.mxu0 0
    %1327 = vmatpush1.bf16.msra.mxu0 0
    %1328 = vmatprep.subr.bf16.mxu0 0
    %1329 = vmatpush1.bf16.msra.mxu0 0
    %1330 = vmatprep.subr.bf16.mxu0 0
    %1331 = vmatpush1.bf16.msra.mxu0 0
    %1332 = vmatprep.subr.bf16.mxu0 0
    %1333 = vmatpush1.bf16.msra.mxu0 0
    %1334 = vmatprep.subr.bf16.mxu0 0
    %1335 = vmatpush1.bf16.msra.mxu0 0
    %1336 = vmatprep.subr.bf16.mxu0 0
    %1337 = vmatpush1.bf16.msra.mxu0 0
    %1338 = vmatprep.subr.bf16.mxu0 0
    %1339 = vmatpush1.bf16.msra.mxu0 0
    %1340 = vmatprep.mubr.bf16.mxu0 0
    %1341 = vmatmul.mubr.bf16.gmra.mrb[0].mxu0 %v1297
    %v1342 = vpop.f32.mrb[0].mxu0
    %v1343 = vadd.f32 0.0, %v1342
    %v1344 = vpop.f32.mrb[0].mxu0
    %v1345 = vpop.f32.mrb[0].mxu0
    %v1346 = vadd.f32 0.0, %v1345
    %v1347 = vpop.f32.mrb[0].mxu0
    %1348 = vmatprep.mubr.bf16.mxu0 0
    %1349 = vmatmul.mubr.bf16.gmra.mrb[0].mxu0 %v1300
    %v1350 = vpop.f32.mrb[0].mxu0
    %v1351 = vadd.f32 0.0, %v1350
    %v1352 = vpop.f32.mrb[0].mxu0
    %v1353 = vpop.f32.mrb[0].mxu0
    %v1354 = vadd.f32 0.0, %v1353
    %v1355 = vpop.f32.mrb[0].mxu0
    %1356 = vmatprep.mubr.bf16.mxu0 0
    %1357 = vmatmul.mubr.bf16.gmra.mrb[0].mxu0 %v1303
    %v1358 = vpop.f32.mrb[0].mxu0
    %v1359 = vadd.f32 0.0, %v1358
    %v1360 = vpop.f32.mrb[0].mxu0
    %v1361 = vpop.f32.mrb[0].mxu0
    %v1362 = vpop.f32.mrb[0].mxu0
    %1363 = vdwg.mxu0
    %v1364 = vpack.c.bf16 %v1183, %v1182
    %v1365 = vpack.c.bf16 %v1185, %v1184
    %v1366 = vpack.c.bf16 %v1186, %v1186
    %vm1370 = vcmask 1045504
    %v1371 = vrot.slane %v1364, 2
    %v1372 = vrot.slane %v1365, 2
    %v1373 = vsel %vm1370, %v1371, %v1372
    %v1374 = vrot.slane %v1366, 2
    %v1375 = vsel %vm1370, %v1372, %v1374
    %1376 = vrot.lane.b32.xlu0 %v1194, 48
    %v1377 = vpop.permute.xlu0 %1376
    %1378 = vrot.lane.b32.xlu0 %v1195, 48
    %v1379 = vpop.permute.xlu0 %1378
    %1380 = vrot.lane.b32.xlu0 %v1196, 48
    %v1381 = vpop.permute.xlu0 %1380
    %v1385 = vsel %vm1003, %v1373, 0
    %v1388 = vsel %vm1003, %v1375, 0
    %v1391 = vsel %vm1003, %v1374, 0
    %v1394 = vsel %vm207, %v1381, 0
    %1396 = vmatprep.subr.bf16.mxu0 0
    %1397 = vmatpush1.bf16.msra.mxu0 %v1377
    %1398 = vmatprep.subr.bf16.mxu0 0
    %1399 = vmatpush1.bf16.msra.mxu0 %v1379
    %1400 = vmatprep.subr.bf16.mxu0 0
    %1401 = vmatpush1.bf16.msra.mxu0 %v1394
    %1402 = vmatprep.subr.bf16.mxu0 0
    %1403 = vmatpush1.bf16.msra.mxu0 0
    %1404 = vmatprep.subr.bf16.mxu0 0
    %1405 = vmatpush1.bf16.msra.mxu0 0
    %1406 = vmatprep.subr.bf16.mxu0 0
    %1407 = vmatpush1.bf16.msra.mxu0 0
    %1408 = vmatprep.subr.bf16.mxu0 0
    %1409 = vmatpush1.bf16.msra.mxu0 0
    %1410 = vmatprep.subr.bf16.mxu0 0
    %1411 = vmatpush1.bf16.msra.mxu0 0
    %1412 = vmatprep.subr.bf16.mxu0 0
    %1413 = vmatpush1.bf16.msra.mxu0 0
    %1414 = vmatprep.subr.bf16.mxu0 0
    %1415 = vmatpush1.bf16.msra.mxu0 0
    %1416 = vmatprep.subr.bf16.mxu0 0
    %1417 = vmatpush1.bf16.msra.mxu0 0
    %1418 = vmatprep.subr.bf16.mxu0 0
    %1419 = vmatpush1.bf16.msra.mxu0 0
    %1420 = vmatprep.subr.bf16.mxu0 0
    %1421 = vmatpush1.bf16.msra.mxu0 0
    %1422 = vmatprep.subr.bf16.mxu0 0
    %1423 = vmatpush1.bf16.msra.mxu0 0
    %1424 = vmatprep.subr.bf16.mxu0 0
    %1425 = vmatpush1.bf16.msra.mxu0 0
    %1426 = vmatprep.subr.bf16.mxu0 0
    %1427 = vmatpush1.bf16.msra.mxu0 0
    %1428 = vmatprep.mubr.bf16.mxu0 0
    %1429 = vmatmul.mubr.bf16.gmra.mrb[0].mxu0 %v1385
    %v1430 = vpop.f32.mrb[0].mxu0
    %v1431 = vadd.f32 0.0, %v1430
    %v1432 = vpop.f32.mrb[0].mxu0
    %v1433 = vpop.f32.mrb[0].mxu0
    %v1434 = vadd.f32 0.0, %v1433
    %v1435 = vpop.f32.mrb[0].mxu0
    %1436 = vmatprep.mubr.bf16.mxu0 0
    %1437 = vmatmul.mubr.bf16.gmra.mrb[0].mxu0 %v1388
    %v1438 = vpop.f32.mrb[0].mxu0
    %v1439 = vadd.f32 0.0, %v1438
    %v1440 = vpop.f32.mrb[0].mxu0
    %v1441 = vpop.f32.mrb[0].mxu0
    %v1442 = vadd.f32 0.0, %v1441
    %v1443 = vpop.f32.mrb[0].mxu0
    %1444 = vmatprep.mubr.bf16.mxu0 0
    %1445 = vmatmul.mubr.bf16.gmra.mrb[0].mxu0 %v1391
    %v1446 = vpop.f32.mrb[0].mxu0
    %v1447 = vadd.f32 0.0, %v1446
    %v1448 = vpop.f32.mrb[0].mxu0
    %v1449 = vpop.f32.mrb[0].mxu0
    %v1450 = vpop.f32.mrb[0].mxu0
    %1451 = vdwg.mxu0
    %v1452 = vpack.c.bf16 %v1187, %v1186
    %v1453 = vpack.c.bf16 %v1189, %v1188
    %v1454 = vpack.c.bf16 %v1190, %v1190
    %vm1458 = vcmask 1044480
    %v1459 = vrot.slane %v1452, 3
    %v1460 = vrot.slane %v1453, 3
    %v1461 = vsel %vm1458, %v1459, %v1460
    %v1462 = vrot.slane %v1454, 3
    %v1463 = vsel %vm1458, %v1460, %v1462
    %1464 = vrot.lane.b32.xlu0 %v1194, 40
    %v1465 = vpop.permute.xlu0 %1464
    %1466 = vrot.lane.b32.xlu0 %v1195, 40
    %v1467 = vpop.permute.xlu0 %1466
    %1468 = vrot.lane.b32.xlu0 %v1196, 40
    %v1469 = vpop.permute.xlu0 %1468
    %v1473 = vsel %vm1003, %v1461, 0
    %v1476 = vsel %vm1003, %v1463, 0
    %v1479 = vsel %vm1003, %v1462, 0
    %v1482 = vsel %vm207, %v1469, 0
    %1484 = vmatprep.subr.bf16.mxu0 0
    %1485 = vmatpush1.bf16.msra.mxu0 %v1465
    %1486 = vmatprep.subr.bf16.mxu0 0
    %1487 = vmatpush1.bf16.msra.mxu0 %v1467
    %1488 = vmatprep.subr.bf16.mxu0 0
    %1489 = vmatpush1.bf16.msra.mxu0 %v1482
    %1490 = vmatprep.subr.bf16.mxu0 0
    %1491 = vmatpush1.bf16.msra.mxu0 0
    %1492 = vmatprep.subr.bf16.mxu0 0
    %1493 = vmatpush1.bf16.msra.mxu0 0
    %1494 = vmatprep.subr.bf16.mxu0 0
    %1495 = vmatpush1.bf16.msra.mxu0 0
    %1496 = vmatprep.subr.bf16.mxu0 0
    %1497 = vmatpush1.bf16.msra.mxu0 0
    %1498 = vmatprep.subr.bf16.mxu0 0
    %1499 = vmatpush1.bf16.msra.mxu0 0
    %1500 = vmatprep.subr.bf16.mxu0 0
    %1501 = vmatpush1.bf16.msra.mxu0 0
    %1502 = vmatprep.subr.bf16.mxu0 0
    %1503 = vmatpush1.bf16.msra.mxu0 0
    %1504 = vmatprep.subr.bf16.mxu0 0
    %1505 = vmatpush1.bf16.msra.mxu0 0
    %1506 = vmatprep.subr.bf16.mxu0 0
    %1507 = vmatpush1.bf16.msra.mxu0 0
    %1508 = vmatprep.subr.bf16.mxu0 0
    %1509 = vmatpush1.bf16.msra.mxu0 0
    %1510 = vmatprep.subr.bf16.mxu0 0
    %1511 = vmatpush1.bf16.msra.mxu0 0
    %1512 = vmatprep.subr.bf16.mxu0 0
    %1513 = vmatpush1.bf16.msra.mxu0 0
    %1514 = vmatprep.subr.bf16.mxu0 0
    %1515 = vmatpush1.bf16.msra.mxu0 0
    %1516 = vmatprep.mubr.bf16.mxu0 0
    %1517 = vmatmul.mubr.bf16.gmra.mrb[0].mxu0 %v1473
    %v1518 = vpop.f32.mrb[0].mxu0
    %v1519 = vadd.f32 0.0, %v1518
    %v1520 = vpop.f32.mrb[0].mxu0
    %v1521 = vpop.f32.mrb[0].mxu0
    %v1522 = vadd.f32 0.0, %v1521
    %v1523 = vpop.f32.mrb[0].mxu0
    %1524 = vmatprep.mubr.bf16.mxu0 0
    %1525 = vmatmul.mubr.bf16.gmra.mrb[0].mxu0 %v1476
    %v1526 = vpop.f32.mrb[0].mxu0
    %v1527 = vadd.f32 0.0, %v1526
    %v1528 = vpop.f32.mrb[0].mxu0
    %v1529 = vpop.f32.mrb[0].mxu0
    %v1530 = vadd.f32 0.0, %v1529
    %v1531 = vpop.f32.mrb[0].mxu0
    %1532 = vmatprep.mubr.bf16.mxu0 0
    %1533 = vmatmul.mubr.bf16.gmra.mrb[0].mxu0 %v1479
    %v1534 = vpop.f32.mrb[0].mxu0
    %v1535 = vadd.f32 0.0, %v1534
    %v1536 = vpop.f32.mrb[0].mxu0
    %v1537 = vpop.f32.mrb[0].mxu0
    %v1538 = vpop.f32.mrb[0].mxu0
    %1539 = vdwg.mxu0
    %1545 = vrot.lane.b32.xlu0 %v1343, 8
    %v1546 = vpop.permute.xlu0 %1545
    %1547 = vrot.lane.b32.xlu0 %v1346, 8
    %v1548 = vpop.permute.xlu0 %1547
    %1549 = vrot.lane.b32.xlu0 %v1351, 8
    %v1550 = vpop.permute.xlu0 %1549
    %1551 = vrot.lane.b32.xlu0 %v1354, 8
    %v1552 = vpop.permute.xlu0 %1551
    %1553 = vrot.lane.b32.xlu0 %v1359, 8
    %v1554 = vpop.permute.xlu0 %1553
    %1565 = vrot.lane.b32.xlu0 %v1431, 16
    %v1566 = vpop.permute.xlu0 %1565
    %1567 = vrot.lane.b32.xlu0 %v1434, 16
    %v1568 = vpop.permute.xlu0 %1567
    %1569 = vrot.lane.b32.xlu0 %v1439, 16
    %v1570 = vpop.permute.xlu0 %1569
    %1571 = vrot.lane.b32.xlu0 %v1442, 16
    %v1572 = vpop.permute.xlu0 %1571
    %1573 = vrot.lane.b32.xlu0 %v1447, 16
    %v1574 = vpop.permute.xlu0 %1573
    %1585 = vrot.lane.b32.xlu0 %v1519, 24
    %v1586 = vpop.permute.xlu0 %1585
    %1587 = vrot.lane.b32.xlu0 %v1522, 24
    %v1588 = vpop.permute.xlu0 %1587
    %1589 = vrot.lane.b32.xlu0 %v1527, 24
    %v1590 = vpop.permute.xlu0 %1589
    %1591 = vrot.lane.b32.xlu0 %v1530, 24
    %v1592 = vpop.permute.xlu0 %1591
    %1593 = vrot.lane.b32.xlu0 %v1535, 24
    %v1594 = vpop.permute.xlu0 %1593
    %v1600 = vsel %vm425, %v1255, %v1546
    %v1601 = vsel %vm425, %v1258, %v1548
    %v1602 = vsel %vm425, %v1263, %v1550
    %v1603 = vsel %vm425, %v1266, %v1552
    %v1604 = vsel %vm425, %v1271, %v1554
    %vm1605 = vcmask 130048
    %v1606 = vsel %vm1605, %v1600, %v1566
    %v1607 = vsel %vm1605, %v1601, %v1568
    %v1608 = vsel %vm1605, %v1602, %v1570
    %v1609 = vsel %vm1605, %v1603, %v1572
    %v1610 = vsel %vm1605, %v1604, %v1574
    %vm1611 = vcmask 195584
    %v1612 = vsel %vm1611, %v1606, %v1586
    %v1613 = vsel %vm1611, %v1607, %v1588
    %v1614 = vsel %vm1611, %v1608, %v1590
    %v1615 = vsel %vm1611, %v1609, %v1592
    %v1616 = vsel %vm1611, %v1610, %v1594
    %v1617 = vpack.c.bf16 %v1613, %v1612
    %v1618 = vpack.c.bf16 %v1615, %v1614
    %v1619 = vpack.c.bf16 %v1616, %v1616
    %v1620 = vld [vmem:[%s4] sm:$0xf]
    %v1621 = vld [vmem:[%s4 + $0x4] sm:$0xf]
    %v1622 = vld [vmem:[%s4 + $0x8] sm:$0xf]
    %v1623 = vld [vmem:[%s4 + $0xc] sm:$0xf]
    %v1628 = vunpack.c.l.b16 %v1620
    %v1629 = vunpack.c.l.b16 %v1621
    %v1630 = vunpack.c.l.b16 %v1622
    %v1631 = vunpack.c.l.b16 %v1623
    %v1632 = vpack.c.b16 %v1629, %v1628
    %v1633 = vpack.c.b16 %v1631, %v1630
    %v1637 = vsel %vm236, %v1617, 0
    %v1640 = vsel %vm236, %v1618, 0
    %v1643 = vsel %vm236, %v1619, 0
    %1645 = vmatprep.subr.bf16.mxu0 0
    %1646 = vmatpush1.bf16.msra.mxu0 %v1632
    %1647 = vmatprep.subr.bf16.mxu0 0
    %1648 = vmatpush1.bf16.msra.mxu0 %v1633
    %1649 = vmatprep.subr.bf16.mxu0 0
    %1650 = vmatpush1.bf16.msra.mxu0 0
    %1651 = vmatprep.subr.bf16.mxu0 0
    %1652 = vmatpush1.bf16.msra.mxu0 0
    %1653 = vmatprep.subr.bf16.mxu0 0
    %1654 = vmatpush1.bf16.msra.mxu0 0
    %1655 = vmatprep.subr.bf16.mxu0 0
    %1656 = vmatpush1.bf16.msra.mxu0 0
    %1657 = vmatprep.subr.bf16.mxu0 0
    %1658 = vmatpush1.bf16.msra.mxu0 0
    %1659 = vmatprep.subr.bf16.mxu0 0
    %1660 = vmatpush1.bf16.msra.mxu0 0
    %1661 = vmatprep.subr.bf16.mxu0 0
    %1662 = vmatpush1.bf16.msra.mxu0 0
    %1663 = vmatprep.subr.bf16.mxu0 0
    %1664 = vmatpush1.bf16.msra.mxu0 0
    %1665 = vmatprep.subr.bf16.mxu0 0
    %1666 = vmatpush1.bf16.msra.mxu0 0
    %1667 = vmatprep.subr.bf16.mxu0 0
    %1668 = vmatpush1.bf16.msra.mxu0 0
    %1669 = vmatprep.subr.bf16.mxu0 0
    %1670 = vmatpush1.bf16.msra.mxu0 0
    %1671 = vmatprep.subr.bf16.mxu0 0
    %1672 = vmatpush1.bf16.msra.mxu0 0
    %1673 = vmatprep.subr.bf16.mxu0 0
    %1674 = vmatpush1.bf16.msra.mxu0 0
    %1675 = vmatprep.subr.bf16.mxu0 0
    %1676 = vmatpush1.bf16.msra.mxu0 0
    %1677 = vmatprep.mubr.bf16.mxu0 0
    %1678 = vmatmul.mubr.bf16.gmra.mrb[0].mxu0 %v1637
    %v1679 = vpop.f32.mrb[0].mxu0
    %v1680 = vadd.f32 0.0, %v1679
    %v1681 = vpop.f32.mrb[0].mxu0
    %v1682 = vpop.f32.mrb[0].mxu0
    %v1683 = vadd.f32 0.0, %v1682
    %v1684 = vpop.f32.mrb[0].mxu0
    %1685 = vmatprep.mubr.bf16.mxu0 0
    %1686 = vmatmul.mubr.bf16.gmra.mrb[0].mxu0 %v1640
    %v1687 = vpop.f32.mrb[0].mxu0
    %v1688 = vadd.f32 0.0, %v1687
    %v1689 = vpop.f32.mrb[0].mxu0
    %v1690 = vpop.f32.mrb[0].mxu0
    %v1691 = vadd.f32 0.0, %v1690
    %v1692 = vpop.f32.mrb[0].mxu0
    %1693 = vmatprep.mubr.bf16.mxu0 0
    %1694 = vmatmul.mubr.bf16.gmra.mrb[0].mxu0 %v1643
    %v1695 = vpop.f32.mrb[0].mxu0
    %v1696 = vadd.f32 0.0, %v1695
    %v1697 = vpop.f32.mrb[0].mxu0
    %v1698 = vpop.f32.mrb[0].mxu0
    %v1699 = vpop.f32.mrb[0].mxu0
    %1700 = vdwg.mxu0
    %v1701 = vadd.f32 %v230, %v1680
    %v1702 = vadd.f32 %v231, %v1683
    %v1703 = vadd.f32 %v232, %v1688
    %v1704 = vadd.f32 %v233, %v1691
    %v1705 = vadd.f32 %v234, %v1696
    %v1706 = vlaneseq
    %v1707 = vshrl.u32 %v1706, 7
    %v1708 = vsub.s32 3, %v1707
    %v1709 = vrot.slane %v235, %v1708
    %v1710 = vadd.f32 %v1701, %v1709
    %v1711 = vadd.f32 %v1702, %v1709
    %v1712 = vadd.f32 %v1703, %v1709
    %v1713 = vadd.f32 %v1704, %v1709
    %v1714 = vadd.f32 %v1705, %v1709
    %v1715 = vsel %vm236, %v1710, 0.0
    %1716 = vadd.xlane.f32.xlu0 %v1715
    %v1717 = vpop.xlane.xlu0 %1716
    %v1718 = vsel %vm236, %v1711, 0.0
    %1719 = vadd.xlane.f32.xlu0 %v1718
    %v1720 = vpop.xlane.xlu0 %1719
    %v1721 = vsel %vm236, %v1712, 0.0
    %1722 = vadd.xlane.f32.xlu0 %v1721
    %v1723 = vpop.xlane.xlu0 %1722
    %v1724 = vsel %vm236, %v1713, 0.0
    %1725 = vadd.xlane.f32.xlu0 %v1724
    %v1726 = vpop.xlane.xlu0 %1725
    %v1727 = vsel %vm249, %v1714, 0.0
    %1728 = vadd.xlane.f32.xlu0 %v1727
    %v1729 = vpop.xlane.xlu0 %1728
    %v1730 = vmul.f32 %v1717, %v253
    %v1731 = vmul.f32 %v1720, %v253
    %v1732 = vmul.f32 %v1723, %v253
    %v1733 = vmul.f32 %v1726, %v253
    %v1734 = vmul.f32 %v1729, %v253
    %v1735 = vsub.f32 %v1710, %v1730
    %v1736 = vsub.f32 %v1711, %v1731
    %v1737 = vsub.f32 %v1712, %v1732
    %v1738 = vsub.f32 %v1713, %v1733
    %v1739 = vsub.f32 %v1714, %v1734
    %v1740 = vmul.f32 %v1735, %v1735
    %v1741 = vmul.f32 %v1736, %v1736
    %v1742 = vmul.f32 %v1737, %v1737
    %v1743 = vmul.f32 %v1738, %v1738
    %v1744 = vmul.f32 %v1739, %v1739
    %v1745 = vsel %vm236, %v1740, 0.0
    %1746 = vadd.xlane.f32.xlu0 %v1745
    %v1747 = vpop.xlane.xlu0 %1746
    %v1748 = vsel %vm236, %v1741, 0.0
    %1749 = vadd.xlane.f32.xlu0 %v1748
    %v1750 = vpop.xlane.xlu0 %1749
    %v1751 = vsel %vm236, %v1742, 0.0
    %1752 = vadd.xlane.f32.xlu0 %v1751
    %v1753 = vpop.xlane.xlu0 %1752
    %v1754 = vsel %vm236, %v1743, 0.0
    %1755 = vadd.xlane.f32.xlu0 %v1754
    %v1756 = vpop.xlane.xlu0 %1755
    %v1757 = vsel %vm249, %v1744, 0.0
    %1758 = vadd.xlane.f32.xlu0 %v1757
    %v1759 = vpop.xlane.xlu0 %1758
    %v1760 = vmul.f32 %v1747, %v253
    %v1761 = vmul.f32 %v1750, %v253
    %v1762 = vmul.f32 %v1753, %v253
    %v1763 = vmul.f32 %v1756, %v253
    %v1764 = vmul.f32 %v1759, %v253
    %v1765 = vadd.f32 %v1760, 1e-06
    %v1766 = vadd.f32 %v1761, 1e-06
    %v1767 = vadd.f32 %v1762, 1e-06
    %v1768 = vadd.f32 %v1763, 1e-06
    %v1769 = vadd.f32 %v1764, 1e-06
    %v1770 = vrsqrt.pop %v1765
    %v1771 = vrsqrt.pop %v1766
    %v1772 = vrsqrt.pop %v1767
    %v1773 = vrsqrt.pop %v1768
    %v1774 = vrsqrt.pop %v1769
    %v1775 = vmul.f32 %v1735, %v1770
    %v1776 = vmul.f32 %v1736, %v1771
    %v1777 = vmul.f32 %v1737, %v1772
    %v1778 = vmul.f32 %v1738, %v1773
    %v1779 = vmul.f32 %v1739, %v1774
    %v1780 = vlaneseq
    %v1781 = vshrl.u32 %v1780, 7
    %v1782 = vsub.s32 4, %v1781
    %v1783 = vrot.slane %v235, %v1782
    %v1784 = vmul.f32 %v1775, %v1783
    %v1785 = vmul.f32 %v1776, %v1783
    %v1786 = vmul.f32 %v1777, %v1783
    %v1787 = vmul.f32 %v1778, %v1783
    %v1788 = vmul.f32 %v1779, %v1783
    %v1789 = vlaneseq
    %v1790 = vshrl.u32 %v1789, 7
    %v1791 = vsub.s32 5, %v1790
    %v1792 = vrot.slane %v235, %v1791
    %v1793 = vadd.f32 %v1784, %v1792
    %v1794 = vadd.f32 %v1785, %v1792
    %v1795 = vadd.f32 %v1786, %v1792
    %v1796 = vadd.f32 %v1787, %v1792
    %v1797 = vadd.f32 %v1788, %v1792
    %v1798 = vpack.c.bf16 %v1794, %v1793
    %v1799 = vpack.c.bf16 %v1796, %v1795
    %v1800 = vpack.c.bf16 %v1797, %v1797
    %v1801 = vld [vmem:[%s5] sm:$0xf]
    %v1802 = vld [vmem:[%s5 + $0x4] sm:$0xf]
    %v1803 = vld [vmem:[%s5 + $0x8] sm:$0xf]
    %v1804 = vld [vmem:[%s5 + $0xc] sm:$0xf]
    %v1805 = vlaneseq
    %v1806 = vshrl.u32 %v1805, 7
    %v1807 = vsub.s32 6, %v1806
    %v1808 = vrot.slane %v235, %v1807
    %v1813 = vunpack.c.l.b16 %v1801
    %v1814 = vunpack.c.l.b16 %v1802
    %v1815 = vunpack.c.l.b16 %v1803
    %v1816 = vunpack.c.l.b16 %v1804
    %v1817 = vpack.c.b16 %v1814, %v1813
    %v1818 = vpack.c.b16 %v1816, %v1815
    %v1822 = vsel %vm236, %v1798, 0
    %v1825 = vsel %vm236, %v1799, 0
    %v1828 = vsel %vm236, %v1800, 0
    %1830 = vmatprep.subr.bf16.mxu0 0
    %1831 = vmatpush1.bf16.msra.mxu0 %v1817
    %1832 = vmatprep.subr.bf16.mxu0 0
    %1833 = vmatpush1.bf16.msra.mxu0 %v1818
    %1834 = vmatprep.subr.bf16.mxu0 0
    %1835 = vmatpush1.bf16.msra.mxu0 0
    %1836 = vmatprep.subr.bf16.mxu0 0
    %1837 = vmatpush1.bf16.msra.mxu0 0
    %1838 = vmatprep.subr.bf16.mxu0 0
    %1839 = vmatpush1.bf16.msra.mxu0 0
    %1840 = vmatprep.subr.bf16.mxu0 0
    %1841 = vmatpush1.bf16.msra.mxu0 0
    %1842 = vmatprep.subr.bf16.mxu0 0
    %1843 = vmatpush1.bf16.msra.mxu0 0
    %1844 = vmatprep.subr.bf16.mxu0 0
    %1845 = vmatpush1.bf16.msra.mxu0 0
    %1846 = vmatprep.subr.bf16.mxu0 0
    %1847 = vmatpush1.bf16.msra.mxu0 0
    %1848 = vmatprep.subr.bf16.mxu0 0
    %1849 = vmatpush1.bf16.msra.mxu0 0
    %1850 = vmatprep.subr.bf16.mxu0 0
    %1851 = vmatpush1.bf16.msra.mxu0 0
    %1852 = vmatprep.subr.bf16.mxu0 0
    %1853 = vmatpush1.bf16.msra.mxu0 0
    %1854 = vmatprep.subr.bf16.mxu0 0
    %1855 = vmatpush1.bf16.msra.mxu0 0
    %1856 = vmatprep.subr.bf16.mxu0 0
    %1857 = vmatpush1.bf16.msra.mxu0 0
    %1858 = vmatprep.subr.bf16.mxu0 0
    %1859 = vmatpush1.bf16.msra.mxu0 0
    %1860 = vmatprep.subr.bf16.mxu0 0
    %1861 = vmatpush1.bf16.msra.mxu0 0
    %1862 = vmatprep.mubr.bf16.mxu0 0
    %1863 = vmatmul.mubr.bf16.gmra.mrb[0].mxu0 %v1822
    %v1864 = vpop.f32.mrb[0].mxu0
    %v1865 = vadd.f32 %v1808, %v1864
    %v1866 = vpop.f32.mrb[0].mxu0
    %v1867 = vpop.f32.mrb[0].mxu0
    %v1868 = vadd.f32 %v1808, %v1867
    %v1869 = vpop.f32.mrb[0].mxu0
    %1870 = vmatprep.mubr.bf16.mxu0 0
    %1871 = vmatmul.mubr.bf16.gmra.mrb[0].mxu0 %v1825
    %v1872 = vpop.f32.mrb[0].mxu0
    %v1873 = vadd.f32 %v1808, %v1872
    %v1874 = vpop.f32.mrb[0].mxu0
    %v1875 = vpop.f32.mrb[0].mxu0
    %v1876 = vadd.f32 %v1808, %v1875
    %v1877 = vpop.f32.mrb[0].mxu0
    %1878 = vmatprep.mubr.bf16.mxu0 0
    %1879 = vmatmul.mubr.bf16.gmra.mrb[0].mxu0 %v1828
    %v1880 = vpop.f32.mrb[0].mxu0
    %v1881 = vadd.f32 %v1808, %v1880
    %v1882 = vpop.f32.mrb[0].mxu0
    %v1883 = vpop.f32.mrb[0].mxu0
    %v1884 = vpop.f32.mrb[0].mxu0
    %1885 = vdwg.mxu0
    %v1886 = vmul.f32 %v1865, %v1865
    %v1887 = vmul.f32 %v1868, %v1868
    %v1888 = vmul.f32 %v1873, %v1873
    %v1889 = vmul.f32 %v1876, %v1876
    %v1890 = vmul.f32 %v1881, %v1881
    %v1891 = vmul.f32 %v1865, %v1886
    %v1892 = vmul.f32 %v1868, %v1887
    %v1893 = vmul.f32 %v1873, %v1888
    %v1894 = vmul.f32 %v1876, %v1889
    %v1895 = vmul.f32 %v1881, %v1890
    %v1896 = vmul.f32 %v1891, 0.044715
    %v1897 = vmul.f32 %v1892, 0.044715
    %v1898 = vmul.f32 %v1893, 0.044715
    %v1899 = vmul.f32 %v1894, 0.044715
    %v1900 = vmul.f32 %v1895, 0.044715
    %v1901 = vadd.f32 %v1865, %v1896
    %v1902 = vadd.f32 %v1868, %v1897
    %v1903 = vadd.f32 %v1873, %v1898
    %v1904 = vadd.f32 %v1876, %v1899
    %v1905 = vadd.f32 %v1881, %v1900
    %v1906 = vmul.f32 %v1901, 0.7978846
    %v1907 = vmul.f32 %v1902, 0.7978846
    %v1908 = vmul.f32 %v1903, 0.7978846
    %v1909 = vmul.f32 %v1904, 0.7978846
    %v1910 = vmul.f32 %v1905, 0.7978846
    %v1911 = vtanh.pop %v1906
    %v1912 = vtanh.pop %v1907
    %v1913 = vtanh.pop %v1908
    %v1914 = vtanh.pop %v1909
    %v1915 = vtanh.pop %v1910
    %v1916 = vadd.f32 %v1911, 1.0
    %v1917 = vadd.f32 %v1912, 1.0
    %v1918 = vadd.f32 %v1913, 1.0
    %v1919 = vadd.f32 %v1914, 1.0
    %v1920 = vadd.f32 %v1915, 1.0
    %v1921 = vmul.f32 %v1916, 0.5
    %v1922 = vmul.f32 %v1917, 0.5
    %v1923 = vmul.f32 %v1918, 0.5
    %v1924 = vmul.f32 %v1919, 0.5
    %v1925 = vmul.f32 %v1920, 0.5
    %v1926 = vmul.f32 %v1865, %v1921
    %v1927 = vmul.f32 %v1868, %v1922
    %v1928 = vmul.f32 %v1873, %v1923
    %v1929 = vmul.f32 %v1876, %v1924
    %v1930 = vmul.f32 %v1881, %v1925
    %v1931 = vpack.c.bf16 %v1927, %v1926
    %v1932 = vpack.c.bf16 %v1929, %v1928
    %v1933 = vpack.c.bf16 %v1930, %v1930
    %v1934 = vld [vmem:[%s6] sm:$0xf]
    %v1935 = vld [vmem:[%s6 + $0x4] sm:$0xf]
    %v1936 = vld [vmem:[%s6 + $0x8] sm:$0xf]
    %v1937 = vld [vmem:[%s6 + $0xc] sm:$0xf]
    %v1938 = vld [vmem:[%s6 + $0x10] sm:$0xf]
    %v1939 = vld [vmem:[%s6 + $0x14] sm:$0xf]
    %v1940 = vld [vmem:[%s6 + $0x18] sm:$0xf]
    %v1941 = vld [vmem:[%s6 + $0x1c] sm:$0xf]
    %v1942 = vld [vmem:[%s6 + $0x20] sm:$0xf]
    %v1943 = vld [vmem:[%s6 + $0x24] sm:$0xf]
    %v1944 = vld [vmem:[%s6 + $0x28] sm:$0xf]
    %v1945 = vld [vmem:[%s6 + $0x2c] sm:$0xf]
    %v1946 = vld [vmem:[%s6 + $0x30] sm:$0xf]
    %v1947 = vld [vmem:[%s6 + $0x34] sm:$0xf]
    %v1948 = vld [vmem:[%s6 + $0x38] sm:$0xf]
    %v1949 = vld [vmem:[%s6 + $0x3c] sm:$0xf]
    %v1950 = vlaneseq
    %v1951 = vshrl.u32 %v1950, 7
    %v1952 = vsub.s32 7, %v1951
    %v1953 = vrot.slane %v235, %v1952
    %v1970 = vunpack.c.l.b16 %v1934
    %v1971 = vunpack.c.l.b16 %v1935
    %v1972 = vunpack.c.l.b16 %v1936
    %v1973 = vunpack.c.l.b16 %v1937
    %v1974 = vunpack.c.l.b16 %v1938
    %v1975 = vunpack.c.l.b16 %v1939
    %v1976 = vunpack.c.l.b16 %v1940
    %v1977 = vunpack.c.l.b16 %v1941
    %v1978 = vunpack.c.l.b16 %v1942
    %v1979 = vunpack.c.l.b16 %v1943
    %v1980 = vunpack.c.l.b16 %v1944
    %v1981 = vunpack.c.l.b16 %v1945
    %v1982 = vunpack.c.l.b16 %v1946
    %v1983 = vunpack.c.l.b16 %v1947
    %v1984 = vunpack.c.l.b16 %v1948
    %v1985 = vunpack.c.l.b16 %v1949
    %v1986 = vpack.c.b16 %v1971, %v1970
    %v1987 = vpack.c.b16 %v1973, %v1972
    %v1988 = vpack.c.b16 %v1975, %v1974
    %v1989 = vpack.c.b16 %v1977, %v1976
    %v1990 = vpack.c.b16 %v1979, %v1978
    %v1991 = vpack.c.b16 %v1981, %v1980
    %v1992 = vpack.c.b16 %v1983, %v1982
    %v1993 = vpack.c.b16 %v1985, %v1984
    %2002 = vmatprep.subr.bf16.mxu0 0
    %2003 = vmatpush1.bf16.msra.mxu0 %v1986
    %2004 = vmatprep.subr.bf16.mxu0 0
    %2005 = vmatpush1.bf16.msra.mxu0 %v1987
    %2006 = vmatprep.subr.bf16.mxu0 0
    %2007 = vmatpush1.bf16.msra.mxu0 %v1988
    %2008 = vmatprep.subr.bf16.mxu0 0
    %2009 = vmatpush1.bf16.msra.mxu0 %v1989
    %2010 = vmatprep.subr.bf16.mxu0 0
    %2011 = vmatpush1.bf16.msra.mxu0 %v1990
    %2012 = vmatprep.subr.bf16.mxu0 0
    %2013 = vmatpush1.bf16.msra.mxu0 %v1991
    %2014 = vmatprep.subr.bf16.mxu0 0
    %2015 = vmatpush1.bf16.msra.mxu0 %v1992
    %2016 = vmatprep.subr.bf16.mxu0 0
    %2017 = vmatpush1.bf16.msra.mxu0 %v1993
    %2018 = vmatprep.subr.bf16.mxu0 0
    %2019 = vmatpush1.bf16.msra.mxu0 0
    %2020 = vmatprep.subr.bf16.mxu0 0
    %2021 = vmatpush1.bf16.msra.mxu0 0
    %2022 = vmatprep.subr.bf16.mxu0 0
    %2023 = vmatpush1.bf16.msra.mxu0 0
    %2024 = vmatprep.subr.bf16.mxu0 0
    %2025 = vmatpush1.bf16.msra.mxu0 0
    %2026 = vmatprep.subr.bf16.mxu0 0
    %2027 = vmatpush1.bf16.msra.mxu0 0
    %2028 = vmatprep.subr.bf16.mxu0 0
    %2029 = vmatpush1.bf16.msra.mxu0 0
    %2030 = vmatprep.subr.bf16.mxu0 0
    %2031 = vmatpush1.bf16.msra.mxu0 0
    %2032 = vmatprep.subr.bf16.mxu0 0
    %2033 = vmatpush1.bf16.msra.mxu0 0
    %2034 = vmatprep.mubr.bf16.mxu0 0
    %2035 = vmatmul.mubr.bf16.gmra.mrb[0].mxu0 %v1931
    %v2036 = vpop.f32.mrb[0].mxu0
    %v2037 = vadd.f32 %v1953, %v2036
    %v2038 = vpop.f32.mrb[0].mxu0
    %v2039 = vpop.f32.mrb[0].mxu0
    %v2040 = vadd.f32 %v1953, %v2039
    %v2041 = vpop.f32.mrb[0].mxu0
    %2042 = vmatprep.mubr.bf16.mxu0 0
    %2043 = vmatmul.mubr.bf16.gmra.mrb[0].mxu0 %v1932
    %v2044 = vpop.f32.mrb[0].mxu0
    %v2045 = vadd.f32 %v1953, %v2044
    %v2046 = vpop.f32.mrb[0].mxu0
    %v2047 = vpop.f32.mrb[0].mxu0
    %v2048 = vadd.f32 %v1953, %v2047
    %v2049 = vpop.f32.mrb[0].mxu0
    %2050 = vmatprep.mubr.bf16.mxu0 0
    %2051 = vmatmul.mubr.bf16.gmra.mrb[0].mxu0 %v1933
    %v2052 = vpop.f32.mrb[0].mxu0
    %v2053 = vadd.f32 %v1953, %v2052
    %v2054 = vpop.f32.mrb[0].mxu0
    %v2055 = vpop.f32.mrb[0].mxu0
    %v2056 = vpop.f32.mrb[0].mxu0
    %2057 = vdwg.mxu0
    %v2058 = vadd.f32 %v1710, %v2037
    %v2059 = vadd.f32 %v1711, %v2040
    %v2060 = vadd.f32 %v1712, %v2045
    %v2061 = vadd.f32 %v1713, %v2048
    %v2062 = vadd.f32 %v1714, %v2053
    %s2063 = scalar_lea.vmem %s7, 8
    %v2064 = vld [vmem:[%s2063] sm:$0xff]
    %v2065 = vsel %vm236, %v2058, 0.0
    %2066 = vadd.xlane.f32.xlu0 %v2065
    %v2067 = vpop.xlane.xlu0 %2066
    %v2068 = vsel %vm236, %v2059, 0.0
    %2069 = vadd.xlane.f32.xlu0 %v2068
    %v2070 = vpop.xlane.xlu0 %2069
    %v2071 = vsel %vm236, %v2060, 0.0
    %2072 = vadd.xlane.f32.xlu0 %v2071
    %v2073 = vpop.xlane.xlu0 %2072
    %v2074 = vsel %vm236, %v2061, 0.0
    %2075 = vadd.xlane.f32.xlu0 %v2074
    %v2076 = vpop.xlane.xlu0 %2075
    %v2077 = vsel %vm249, %v2062, 0.0
    %2078 = vadd.xlane.f32.xlu0 %v2077
    %v2079 = vpop.xlane.xlu0 %2078
    %v2080 = vmul.f32 %v2067, %v253
    %v2081 = vmul.f32 %v2070, %v253
    %v2082 = vmul.f32 %v2073, %v253
    %v2083 = vmul.f32 %v2076, %v253
    %v2084 = vmul.f32 %v2079, %v253
    %v2085 = vsub.f32 %v2058, %v2080
    %v2086 = vsub.f32 %v2059, %v2081
    %v2087 = vsub.f32 %v2060, %v2082
    %v2088 = vsub.f32 %v2061, %v2083
    %v2089 = vsub.f32 %v2062, %v2084
    %v2090 = vmul.f32 %v2085, %v2085
    %v2091 = vmul.f32 %v2086, %v2086
    %v2092 = vmul.f32 %v2087, %v2087
    %v2093 = vmul.f32 %v2088, %v2088
    %v2094 = vmul.f32 %v2089, %v2089
    %v2095 = vsel %vm236, %v2090, 0.0
    %2096 = vadd.xlane.f32.xlu0 %v2095
    %v2097 = vpop.xlane.xlu0 %2096
    %v2098 = vsel %vm236, %v2091, 0.0
    %2099 = vadd.xlane.f32.xlu0 %v2098
    %v2100 = vpop.xlane.xlu0 %2099
    %v2101 = vsel %vm236, %v2092, 0.0
    %2102 = vadd.xlane.f32.xlu0 %v2101
    %v2103 = vpop.xlane.xlu0 %2102
    %v2104 = vsel %vm236, %v2093, 0.0
    %2105 = vadd.xlane.f32.xlu0 %v2104
    %v2106 = vpop.xlane.xlu0 %2105
    %v2107 = vsel %vm249, %v2094, 0.0
    %2108 = vadd.xlane.f32.xlu0 %v2107
    %v2109 = vpop.xlane.xlu0 %2108
    %v2110 = vmul.f32 %v2097, %v253
    %v2111 = vmul.f32 %v2100, %v253
    %v2112 = vmul.f32 %v2103, %v253
    %v2113 = vmul.f32 %v2106, %v253
    %v2114 = vmul.f32 %v2109, %v253
    %v2115 = vadd.f32 %v2110, 1e-06
    %v2116 = vadd.f32 %v2111, 1e-06
    %v2117 = vadd.f32 %v2112, 1e-06
    %v2118 = vadd.f32 %v2113, 1e-06
    %v2119 = vadd.f32 %v2114, 1e-06
    %v2120 = vrsqrt.pop %v2115
    %v2121 = vrsqrt.pop %v2116
    %v2122 = vrsqrt.pop %v2117
    %v2123 = vrsqrt.pop %v2118
    %v2124 = vrsqrt.pop %v2119
    %v2125 = vmul.f32 %v2085, %v2120
    %v2126 = vmul.f32 %v2086, %v2121
    %v2127 = vmul.f32 %v2087, %v2122
    %v2128 = vmul.f32 %v2088, %v2123
    %v2129 = vmul.f32 %v2089, %v2124
    %v2130 = vlaneseq
    %v2131 = vshrl.u32 %v2130, 7
    %v2132 = vsub.s32 0, %v2131
    %v2133 = vrot.slane %v2064, %v2132
    %v2134 = vmul.f32 %v2125, %v2133
    %v2135 = vmul.f32 %v2126, %v2133
    %v2136 = vmul.f32 %v2127, %v2133
    %v2137 = vmul.f32 %v2128, %v2133
    %v2138 = vmul.f32 %v2129, %v2133
    %v2139 = vlaneseq
    %v2140 = vshrl.u32 %v2139, 7
    %v2141 = vsub.s32 1, %v2140
    %v2142 = vrot.slane %v2064, %v2141
    %v2143 = vadd.f32 %v2134, %v2142
    %v2144 = vadd.f32 %v2135, %v2142
    %v2145 = vadd.f32 %v2136, %v2142
    %v2146 = vadd.f32 %v2137, %v2142
    %v2147 = vadd.f32 %v2138, %v2142
    %v2148 = vpack.c.bf16 %v2144, %v2143
    %v2149 = vpack.c.bf16 %v2146, %v2145
    %v2150 = vpack.c.bf16 %v2147, %v2147
    %s2151 = scalar_lea.vmem %s3, 16
    %v2152 = vld [vmem:[%s2151] sm:$0xf]
    %v2153 = vld [vmem:[%s2151 + $0x4] sm:$0xf]
    %v2154 = vld [vmem:[%s2151 + $0x8] sm:$0xf]
    %v2155 = vld [vmem:[%s2151 + $0xc] sm:$0xf]
    %v2156 = vlaneseq
    %v2157 = vshrl.u32 %v2156, 7
    %v2158 = vsub.s32 2, %v2157
    %v2159 = vrot.slane %v2064, %v2158
    %v2164 = vunpack.c.l.b16 %v2152
    %v2165 = vunpack.c.l.b16 %v2153
    %v2166 = vunpack.c.l.b16 %v2154
    %v2167 = vunpack.c.l.b16 %v2155
    %v2168 = vpack.c.b16 %v2165, %v2164
    %v2169 = vpack.c.b16 %v2167, %v2166
    %v2173 = vsel %vm236, %v2148, 0
    %v2176 = vsel %vm236, %v2149, 0
    %v2179 = vsel %vm236, %v2150, 0
    %2181 = vmatprep.subr.bf16.mxu0 0
    %2182 = vmatpush1.bf16.msra.mxu0 %v2168
    %2183 = vmatprep.subr.bf16.mxu0 0
    %2184 = vmatpush1.bf16.msra.mxu0 %v2169
    %2185 = vmatprep.subr.bf16.mxu0 0
    %2186 = vmatpush1.bf16.msra.mxu0 0
    %2187 = vmatprep.subr.bf16.mxu0 0
    %2188 = vmatpush1.bf16.msra.mxu0 0
    %2189 = vmatprep.subr.bf16.mxu0 0
    %2190 = vmatpush1.bf16.msra.mxu0 0
    %2191 = vmatprep.subr.bf16.mxu0 0
    %2192 = vmatpush1.bf16.msra.mxu0 0
    %2193 = vmatprep.subr.bf16.mxu0 0
    %2194 = vmatpush1.bf16.msra.mxu0 0
    %2195 = vmatprep.subr.bf16.mxu0 0
    %2196 = vmatpush1.bf16.msra.mxu0 0
    %2197 = vmatprep.subr.bf16.mxu0 0
    %2198 = vmatpush1.bf16.msra.mxu0 0
    %2199 = vmatprep.subr.bf16.mxu0 0
    %2200 = vmatpush1.bf16.msra.mxu0 0
    %2201 = vmatprep.subr.bf16.mxu0 0
    %2202 = vmatpush1.bf16.msra.mxu0 0
    %2203 = vmatprep.subr.bf16.mxu0 0
    %2204 = vmatpush1.bf16.msra.mxu0 0
    %2205 = vmatprep.subr.bf16.mxu0 0
    %2206 = vmatpush1.bf16.msra.mxu0 0
    %2207 = vmatprep.subr.bf16.mxu0 0
    %2208 = vmatpush1.bf16.msra.mxu0 0
    %2209 = vmatprep.subr.bf16.mxu0 0
    %2210 = vmatpush1.bf16.msra.mxu0 0
    %2211 = vmatprep.subr.bf16.mxu0 0
    %2212 = vmatpush1.bf16.msra.mxu0 0
    %2213 = vmatprep.mubr.bf16.mxu0 0
    %2214 = vmatmul.mubr.bf16.gmra.mrb[0].mxu0 %v2173
    %v2215 = vpop.f32.mrb[0].mxu0
    %v2216 = vadd.f32 %v2159, %v2215
    %v2217 = vpop.f32.mrb[0].mxu0
    %v2218 = vpop.f32.mrb[0].mxu0
    %v2219 = vadd.f32 %v2159, %v2218
    %v2220 = vpop.f32.mrb[0].mxu0
    %2221 = vmatprep.mubr.bf16.mxu0 0
    %2222 = vmatmul.mubr.bf16.gmra.mrb[0].mxu0 %v2176
    %v2223 = vpop.f32.mrb[0].mxu0
    %v2224 = vadd.f32 %v2159, %v2223
    %v2225 = vpop.f32.mrb[0].mxu0
    %v2226 = vpop.f32.mrb[0].mxu0
    %v2227 = vadd.f32 %v2159, %v2226
    %v2228 = vpop.f32.mrb[0].mxu0
    %2229 = vmatprep.mubr.bf16.mxu0 0
    %2230 = vmatmul.mubr.bf16.gmra.mrb[0].mxu0 %v2179
    %v2231 = vpop.f32.mrb[0].mxu0
    %v2232 = vadd.f32 %v2159, %v2231
    %v2233 = vpop.f32.mrb[0].mxu0
    %v2234 = vpop.f32.mrb[0].mxu0
    %v2235 = vpop.f32.mrb[0].mxu0
    %2236 = vdwg.mxu0
    %2242 = vrot.lane.b32.xlu0 %v2216, 96
    %v2243 = vpop.permute.xlu0 %2242
    %2244 = vrot.lane.b32.xlu0 %v2219, 96
    %v2245 = vpop.permute.xlu0 %2244
    %2246 = vrot.lane.b32.xlu0 %v2224, 96
    %v2247 = vpop.permute.xlu0 %2246
    %2248 = vrot.lane.b32.xlu0 %v2227, 96
    %v2249 = vpop.permute.xlu0 %2248
    %2250 = vrot.lane.b32.xlu0 %v2232, 96
    %v2251 = vpop.permute.xlu0 %2250
    %v2252 = vsel %vm425, %v2216, 0
    %v2254 = vsel %vm425, %v2219, 0
    %v2256 = vsel %vm425, %v2224, 0
    %v2258 = vsel %vm425, %v2227, 0
    %v2260 = vsel %vm425, %v2232, 0
    %v2262 = vsel %vm425, %v2243, 0
    %v2264 = vsel %vm425, %v2245, 0
    %v2266 = vsel %vm425, %v2247, 0
    %v2268 = vsel %vm425, %v2249, 0
    %v2270 = vsel %vm425, %v2251, 0
    %2272 = vmatprep.subr.mxu0 0.0
    %2273 = vmatpush1.xpose.msra.mxu0 %v2262
    %2274 = vmatprep.subr.mxu0 0.0
    %2275 = vmatpush1.xpose.msra.mxu0 %v2264
    %2276 = vmatprep.subr.mxu0 0.0
    %2277 = vmatpush1.xpose.msra.mxu0 %v2266
    %2278 = vmatprep.subr.mxu0 0.0
    %2279 = vmatpush1.xpose.msra.mxu0 %v2268
    %2280 = vmatprep.subr.mxu0 0.0
    %2281 = vmatpush1.xpose.msra.mxu0 %v2270
    %2282 = vmatprep.subr.mxu0 0.0
    %2283 = vmatpush1.xpose.msra.mxu0 0.0
    %2284 = vmatprep.subr.mxu0 0.0
    %2285 = vmatpush1.xpose.msra.mxu0 0.0
    %2286 = vmatprep.subr.mxu0 0.0
    %2287 = vmatpush1.xpose.msra.mxu0 0.0
    %2288 = vmatprep.subr.mxu0 0.0
    %2289 = vmatpush1.xpose.msra.mxu0 0.0
    %2290 = vmatprep.subr.mxu0 0.0
    %2291 = vmatpush1.xpose.msra.mxu0 0.0
    %2292 = vmatprep.subr.mxu0 0.0
    %2293 = vmatpush1.xpose.msra.mxu0 0.0
    %2294 = vmatprep.subr.mxu0 0.0
    %2295 = vmatpush1.xpose.msra.mxu0 0.0
    %2296 = vmatprep.subr.mxu0 0.0
    %2297 = vmatpush1.xpose.msra.mxu0 0.0
    %2298 = vmatprep.subr.mxu0 0.0
    %2299 = vmatpush1.xpose.msra.mxu0 0.0
    %2300 = vmatprep.subr.mxu0 0.0
    %2301 = vmatpush1.xpose.msra.mxu0 0.0
    %2302 = vmatprep.subr.mxu0 0.0
    %2303 = vmatpush1.xpose.msra.mxu0 0.0
    %2304 = vmatprep.subr.mxu0 0.0
    %2305 = vmatpush1.xpose.msra.mxu0 0.0
    %2306 = vmatprep.subr.mxu0 0.0
    %2307 = vmatpush1.xpose.msra.mxu0 0.0
    %2308 = vmatprep.subr.mxu0 0.0
    %2309 = vmatpush1.xpose.msra.mxu0 0.0
    %2310 = vmatprep.subr.mxu0 0.0
    %2311 = vmatpush1.xpose.msra.mxu0 0.0
    %2312 = vmatprep.subr.mxu0 0.0
    %2313 = vmatpush1.xpose.msra.mxu0 0.0
    %2314 = vmatprep.subr.mxu0 0.0
    %2315 = vmatpush1.xpose.msra.mxu0 0.0
    %2316 = vmatprep.subr.mxu0 0.0
    %2317 = vmatpush1.xpose.msra.mxu0 0.0
    %2318 = vmatprep.subr.mxu0 0.0
    %2319 = vmatpush1.xpose.msra.mxu0 0.0
    %2320 = vmatprep.subr.mxu0 0.0
    %2321 = vmatpush1.xpose.msra.mxu0 0.0
    %2322 = vmatprep.subr.mxu0 0.0
    %2323 = vmatpush1.xpose.msra.mxu0 0.0
    %2324 = vmatprep.subr.mxu0 0.0
    %2325 = vmatpush1.xpose.msra.mxu0 0.0
    %2326 = vmatprep.subr.mxu0 0.0
    %2327 = vmatpush1.xpose.msra.mxu0 0.0
    %2328 = vmatprep.subr.mxu0 0.0
    %2329 = vmatpush1.xpose.msra.mxu0 0.0
    %2330 = vmatprep.subr.mxu0 0.0
    %2331 = vmatpush1.xpose.msra.mxu0 0.0
    %2332 = vmatprep.subr.mxu0 0.0
    %2333 = vmatpush1.xpose.msra.mxu0 0.0
    %2334 = vmatprep.subr.mxu0 0.0
    %2335 = vmatpush1.xpose.msra.mxu0 0.0
    %2336 = vmatprep.mubr.f32.mxu0 0.0
    %2337 = vmatmul.mubr.f32.gmra.mrb[0].mxu0 %v2252
    %v2338 = vpop.f32.mrb[0].mxu0
    %v2339 = vadd.f32 0.0, %v2338
    %v2340 = vpop.f32.mrb[0].mxu0
    %2341 = vmatprep.mubr.f32.mxu0 0.0
    %2342 = vmatmul.mubr.f32.gmra.mrb[0].mxu0 %v2254
    %v2343 = vpop.f32.mrb[0].mxu0
    %v2344 = vadd.f32 0.0, %v2343
    %v2345 = vpop.f32.mrb[0].mxu0
    %2346 = vmatprep.mubr.f32.mxu0 0.0
    %2347 = vmatmul.mubr.f32.gmra.mrb[0].mxu0 %v2256
    %v2348 = vpop.f32.mrb[0].mxu0
    %v2349 = vadd.f32 0.0, %v2348
    %v2350 = vpop.f32.mrb[0].mxu0
    %2351 = vmatprep.mubr.f32.mxu0 0.0
    %2352 = vmatmul.mubr.f32.gmra.mrb[0].mxu0 %v2258
    %v2353 = vpop.f32.mrb[0].mxu0
    %v2354 = vadd.f32 0.0, %v2353
    %v2355 = vpop.f32.mrb[0].mxu0
    %2356 = vmatprep.mubr.f32.mxu0 0.0
    %2357 = vmatmul.mubr.f32.gmra.mrb[0].mxu0 %v2260
    %v2358 = vpop.f32.mrb[0].mxu0
    %v2359 = vadd.f32 0.0, %v2358
    %v2360 = vpop.f32.mrb[0].mxu0
    %2361 = vdwg.mxu0
    %2362 = vrot.lane.b32.xlu0 %v2216, 120
    %v2363 = vpop.permute.xlu0 %2362
    %2364 = vrot.lane.b32.xlu0 %v2219, 120
    %v2365 = vpop.permute.xlu0 %2364
    %2366 = vrot.lane.b32.xlu0 %v2224, 120
    %v2367 = vpop.permute.xlu0 %2366
    %2368 = vrot.lane.b32.xlu0 %v2227, 120
    %v2369 = vpop.permute.xlu0 %2368
    %2370 = vrot.lane.b32.xlu0 %v2232, 120
    %v2371 = vpop.permute.xlu0 %2370
    %2372 = vrot.lane.b32.xlu0 %v2216, 88
    %v2373 = vpop.permute.xlu0 %2372
    %2374 = vrot.lane.b32.xlu0 %v2219, 88
    %v2375 = vpop.permute.xlu0 %2374
    %2376 = vrot.lane.b32.xlu0 %v2224, 88
    %v2377 = vpop.permute.xlu0 %2376
    %2378 = vrot.lane.b32.xlu0 %v2227, 88
    %v2379 = vpop.permute.xlu0 %2378
    %2380 = vrot.lane.b32.xlu0 %v2232, 88
    %v2381 = vpop.permute.xlu0 %2380
    %v2382 = vsel %vm425, %v2363, 0
    %v2384 = vsel %vm425, %v2365, 0
    %v2386 = vsel %vm425, %v2367, 0
    %v2388 = vsel %vm425, %v2369, 0
    %v2390 = vsel %vm425, %v2371, 0
    %v2392 = vsel %vm425, %v2373, 0
    %v2394 = vsel %vm425, %v2375, 0
    %v2396 = vsel %vm425, %v2377, 0
    %v2398 = vsel %vm425, %v2379, 0
    %v2400 = vsel %vm425, %v2381, 0
    %2402 = vmatprep.subr.mxu0 0.0
    %2403 = vmatpush1.xpose.msra.mxu0 %v2392
    %2404 = vmatprep.subr.mxu0 0.0
    %2405 = vmatpush1.xpose.msra.mxu0 %v2394
    %2406 = vmatprep.subr.mxu0 0.0
    %2407 = vmatpush1.xpose.msra.mxu0 %v2396
    %2408 = vmatprep.subr.mxu0 0.0
    %2409 = vmatpush1.xpose.msra.mxu0 %v2398
    %2410 = vmatprep.subr.mxu0 0.0
    %2411 = vmatpush1.xpose.msra.mxu0 %v2400
    %2412 = vmatprep.subr.mxu0 0.0
    %2413 = vmatpush1.xpose.msra.mxu0 0.0
    %2414 = vmatprep.subr.mxu0 0.0
    %2415 = vmatpush1.xpose.msra.mxu0 0.0
    %2416 = vmatprep.subr.mxu0 0.0
    %2417 = vmatpush1.xpose.msra.mxu0 0.0
    %2418 = vmatprep.subr.mxu0 0.0
    %2419 = vmatpush1.xpose.msra.mxu0 0.0
    %2420 = vmatprep.subr.mxu0 0.0
    %2421 = vmatpush1.xpose.msra.mxu0 0.0
    %2422 = vmatprep.subr.mxu0 0.0
    %2423 = vmatpush1.xpose.msra.mxu0 0.0
    %2424 = vmatprep.subr.mxu0 0.0
    %2425 = vmatpush1.xpose.msra.mxu0 0.0
    %2426 = vmatprep.subr.mxu0 0.0
    %2427 = vmatpush1.xpose.msra.mxu0 0.0
    %2428 = vmatprep.subr.mxu0 0.0
    %2429 = vmatpush1.xpose.msra.mxu0 0.0
    %2430 = vmatprep.subr.mxu0 0.0
    %2431 = vmatpush1.xpose.msra.mxu0 0.0
    %2432 = vmatprep.subr.mxu0 0.0
    %2433 = vmatpush1.xpose.msra.mxu0 0.0
    %2434 = vmatprep.subr.mxu0 0.0
    %2435 = vmatpush1.xpose.msra.mxu0 0.0
    %2436 = vmatprep.subr.mxu0 0.0
    %2437 = vmatpush1.xpose.msra.mxu0 0.0
    %2438 = vmatprep.subr.mxu0 0.0
    %2439 = vmatpush1.xpose.msra.mxu0 0.0
    %2440 = vmatprep.subr.mxu0 0.0
    %2441 = vmatpush1.xpose.msra.mxu0 0.0
    %2442 = vmatprep.subr.mxu0 0.0
    %2443 = vmatpush1.xpose.msra.mxu0 0.0
    %2444 = vmatprep.subr.mxu0 0.0
    %2445 = vmatpush1.xpose.msra.mxu0 0.0
    %2446 = vmatprep.subr.mxu0 0.0
    %2447 = vmatpush1.xpose.msra.mxu0 0.0
    %2448 = vmatprep.subr.mxu0 0.0
    %2449 = vmatpush1.xpose.msra.mxu0 0.0
    %2450 = vmatprep.subr.mxu0 0.0
    %2451 = vmatpush1.xpose.msra.mxu0 0.0
    %2452 = vmatprep.subr.mxu0 0.0
    %2453 = vmatpush1.xpose.msra.mxu0 0.0
    %2454 = vmatprep.subr.mxu0 0.0
    %2455 = vmatpush1.xpose.msra.mxu0 0.0
    %2456 = vmatprep.subr.mxu0 0.0
    %2457 = vmatpush1.xpose.msra.mxu0 0.0
    %2458 = vmatprep.subr.mxu0 0.0
    %2459 = vmatpush1.xpose.msra.mxu0 0.0
    %2460 = vmatprep.subr.mxu0 0.0
    %2461 = vmatpush1.xpose.msra.mxu0 0.0
    %2462 = vmatprep.subr.mxu0 0.0
    %2463 = vmatpush1.xpose.msra.mxu0 0.0
    %2464 = vmatprep.subr.mxu0 0.0
    %2465 = vmatpush1.xpose.msra.mxu0 0.0
    %2466 = vmatprep.mubr.f32.mxu0 0.0
    %2467 = vmatmul.mubr.f32.gmra.mrb[0].mxu0 %v2382
    %v2468 = vpop.f32.mrb[0].mxu0
    %v2469 = vadd.f32 0.0, %v2468
    %v2470 = vpop.f32.mrb[0].mxu0
    %2471 = vmatprep.mubr.f32.mxu0 0.0
    %2472 = vmatmul.mubr.f32.gmra.mrb[0].mxu0 %v2384
    %v2473 = vpop.f32.mrb[0].mxu0
    %v2474 = vadd.f32 0.0, %v2473
    %v2475 = vpop.f32.mrb[0].mxu0
    %2476 = vmatprep.mubr.f32.mxu0 0.0
    %2477 = vmatmul.mubr.f32.gmra.mrb[0].mxu0 %v2386
    %v2478 = vpop.f32.mrb[0].mxu0
    %v2479 = vadd.f32 0.0, %v2478
    %v2480 = vpop.f32.mrb[0].mxu0
    %2481 = vmatprep.mubr.f32.mxu0 0.0
    %2482 = vmatmul.mubr.f32.gmra.mrb[0].mxu0 %v2388
    %v2483 = vpop.f32.mrb[0].mxu0
    %v2484 = vadd.f32 0.0, %v2483
    %v2485 = vpop.f32.mrb[0].mxu0
    %2486 = vmatprep.mubr.f32.mxu0 0.0
    %2487 = vmatmul.mubr.f32.gmra.mrb[0].mxu0 %v2390
    %v2488 = vpop.f32.mrb[0].mxu0
    %v2489 = vadd.f32 0.0, %v2488
    %v2490 = vpop.f32.mrb[0].mxu0
    %2491 = vdwg.mxu0
    %2492 = vrot.lane.b32.xlu0 %v2216, 112
    %v2493 = vpop.permute.xlu0 %2492
    %2494 = vrot.lane.b32.xlu0 %v2219, 112
    %v2495 = vpop.permute.xlu0 %2494
    %2496 = vrot.lane.b32.xlu0 %v2224, 112
    %v2497 = vpop.permute.xlu0 %2496
    %2498 = vrot.lane.b32.xlu0 %v2227, 112
    %v2499 = vpop.permute.xlu0 %2498
    %2500 = vrot.lane.b32.xlu0 %v2232, 112
    %v2501 = vpop.permute.xlu0 %2500
    %2502 = vrot.lane.b32.xlu0 %v2216, 80
    %v2503 = vpop.permute.xlu0 %2502
    %2504 = vrot.lane.b32.xlu0 %v2219, 80
    %v2505 = vpop.permute.xlu0 %2504
    %2506 = vrot.lane.b32.xlu0 %v2224, 80
    %v2507 = vpop.permute.xlu0 %2506
    %2508 = vrot.lane.b32.xlu0 %v2227, 80
    %v2509 = vpop.permute.xlu0 %2508
    %2510 = vrot.lane.b32.xlu0 %v2232, 80
    %v2511 = vpop.permute.xlu0 %2510
    %v2512 = vsel %vm425, %v2493, 0
    %v2514 = vsel %vm425, %v2495, 0
    %v2516 = vsel %vm425, %v2497, 0
    %v2518 = vsel %vm425, %v2499, 0
    %v2520 = vsel %vm425, %v2501, 0
    %v2522 = vsel %vm425, %v2503, 0
    %v2524 = vsel %vm425, %v2505, 0
    %v2526 = vsel %vm425, %v2507, 0
    %v2528 = vsel %vm425, %v2509, 0
    %v2530 = vsel %vm425, %v2511, 0
    %2532 = vmatprep.subr.mxu0 0.0
    %2533 = vmatpush1.xpose.msra.mxu0 %v2522
    %2534 = vmatprep.subr.mxu0 0.0
    %2535 = vmatpush1.xpose.msra.mxu0 %v2524
    %2536 = vmatprep.subr.mxu0 0.0
    %2537 = vmatpush1.xpose.msra.mxu0 %v2526
    %2538 = vmatprep.subr.mxu0 0.0
    %2539 = vmatpush1.xpose.msra.mxu0 %v2528
    %2540 = vmatprep.subr.mxu0 0.0
    %2541 = vmatpush1.xpose.msra.mxu0 %v2530
    %2542 = vmatprep.subr.mxu0 0.0
    %2543 = vmatpush1.xpose.msra.mxu0 0.0
    %2544 = vmatprep.subr.mxu0 0.0
    %2545 = vmatpush1.xpose.msra.mxu0 0.0
    %2546 = vmatprep.subr.mxu0 0.0
    %2547 = vmatpush1.xpose.msra.mxu0 0.0
    %2548 = vmatprep.subr.mxu0 0.0
    %2549 = vmatpush1.xpose.msra.mxu0 0.0
    %2550 = vmatprep.subr.mxu0 0.0
    %2551 = vmatpush1.xpose.msra.mxu0 0.0
    %2552 = vmatprep.subr.mxu0 0.0
    %2553 = vmatpush1.xpose.msra.mxu0 0.0
    %2554 = vmatprep.subr.mxu0 0.0
    %2555 = vmatpush1.xpose.msra.mxu0 0.0
    %2556 = vmatprep.subr.mxu0 0.0
    %2557 = vmatpush1.xpose.msra.mxu0 0.0
    %2558 = vmatprep.subr.mxu0 0.0
    %2559 = vmatpush1.xpose.msra.mxu0 0.0
    %2560 = vmatprep.subr.mxu0 0.0
    %2561 = vmatpush1.xpose.msra.mxu0 0.0
    %2562 = vmatprep.subr.mxu0 0.0
    %2563 = vmatpush1.xpose.msra.mxu0 0.0
    %2564 = vmatprep.subr.mxu0 0.0
    %2565 = vmatpush1.xpose.msra.mxu0 0.0
    %2566 = vmatprep.subr.mxu0 0.0
    %2567 = vmatpush1.xpose.msra.mxu0 0.0
    %2568 = vmatprep.subr.mxu0 0.0
    %2569 = vmatpush1.xpose.msra.mxu0 0.0
    %2570 = vmatprep.subr.mxu0 0.0
    %2571 = vmatpush1.xpose.msra.mxu0 0.0
    %2572 = vmatprep.subr.mxu0 0.0
    %2573 = vmatpush1.xpose.msra.mxu0 0.0
    %2574 = vmatprep.subr.mxu0 0.0
    %2575 = vmatpush1.xpose.msra.mxu0 0.0
    %2576 = vmatprep.subr.mxu0 0.0
    %2577 = vmatpush1.xpose.msra.mxu0 0.0
    %2578 = vmatprep.subr.mxu0 0.0
    %2579 = vmatpush1.xpose.msra.mxu0 0.0
    %2580 = vmatprep.subr.mxu0 0.0
    %2581 = vmatpush1.xpose.msra.mxu0 0.0
    %2582 = vmatprep.subr.mxu0 0.0
    %2583 = vmatpush1.xpose.msra.mxu0 0.0
    %2584 = vmatprep.subr.mxu0 0.0
    %2585 = vmatpush1.xpose.msra.mxu0 0.0
    %2586 = vmatprep.subr.mxu0 0.0
    %2587 = vmatpush1.xpose.msra.mxu0 0.0
    %2588 = vmatprep.subr.mxu0 0.0
    %2589 = vmatpush1.xpose.msra.mxu0 0.0
    %2590 = vmatprep.subr.mxu0 0.0
    %2591 = vmatpush1.xpose.msra.mxu0 0.0
    %2592 = vmatprep.subr.mxu0 0.0
    %2593 = vmatpush1.xpose.msra.mxu0 0.0
    %2594 = vmatprep.subr.mxu0 0.0
    %2595 = vmatpush1.xpose.msra.mxu0 0.0
    %2596 = vmatprep.mubr.f32.mxu0 0.0
    %2597 = vmatmul.mubr.f32.gmra.mrb[0].mxu0 %v2512
    %v2598 = vpop.f32.mrb[0].mxu0
    %v2599 = vadd.f32 0.0, %v2598
    %v2600 = vpop.f32.mrb[0].mxu0
    %2601 = vmatprep.mubr.f32.mxu0 0.0
    %2602 = vmatmul.mubr.f32.gmra.mrb[0].mxu0 %v2514
    %v2603 = vpop.f32.mrb[0].mxu0
    %v2604 = vadd.f32 0.0, %v2603
    %v2605 = vpop.f32.mrb[0].mxu0
    %2606 = vmatprep.mubr.f32.mxu0 0.0
    %2607 = vmatmul.mubr.f32.gmra.mrb[0].mxu0 %v2516
    %v2608 = vpop.f32.mrb[0].mxu0
    %v2609 = vadd.f32 0.0, %v2608
    %v2610 = vpop.f32.mrb[0].mxu0
    %2611 = vmatprep.mubr.f32.mxu0 0.0
    %2612 = vmatmul.mubr.f32.gmra.mrb[0].mxu0 %v2518
    %v2613 = vpop.f32.mrb[0].mxu0
    %v2614 = vadd.f32 0.0, %v2613
    %v2615 = vpop.f32.mrb[0].mxu0
    %2616 = vmatprep.mubr.f32.mxu0 0.0
    %2617 = vmatmul.mubr.f32.gmra.mrb[0].mxu0 %v2520
    %v2618 = vpop.f32.mrb[0].mxu0
    %v2619 = vadd.f32 0.0, %v2618
    %v2620 = vpop.f32.mrb[0].mxu0
    %2621 = vdwg.mxu0
    %2622 = vrot.lane.b32.xlu0 %v2216, 104
    %v2623 = vpop.permute.xlu0 %2622
    %2624 = vrot.lane.b32.xlu0 %v2219, 104
    %v2625 = vpop.permute.xlu0 %2624
    %2626 = vrot.lane.b32.xlu0 %v2224, 104
    %v2627 = vpop.permute.xlu0 %2626
    %2628 = vrot.lane.b32.xlu0 %v2227, 104
    %v2629 = vpop.permute.xlu0 %2628
    %2630 = vrot.lane.b32.xlu0 %v2232, 104
    %v2631 = vpop.permute.xlu0 %2630
    %2632 = vrot.lane.b32.xlu0 %v2216, 72
    %v2633 = vpop.permute.xlu0 %2632
    %2634 = vrot.lane.b32.xlu0 %v2219, 72
    %v2635 = vpop.permute.xlu0 %2634
    %2636 = vrot.lane.b32.xlu0 %v2224, 72
    %v2637 = vpop.permute.xlu0 %2636
    %2638 = vrot.lane.b32.xlu0 %v2227, 72
    %v2639 = vpop.permute.xlu0 %2638
    %2640 = vrot.lane.b32.xlu0 %v2232, 72
    %v2641 = vpop.permute.xlu0 %2640
    %v2642 = vsel %vm425, %v2623, 0
    %v2644 = vsel %vm425, %v2625, 0
    %v2646 = vsel %vm425, %v2627, 0
    %v2648 = vsel %vm425, %v2629, 0
    %v2650 = vsel %vm425, %v2631, 0
    %v2652 = vsel %vm425, %v2633, 0
    %v2654 = vsel %vm425, %v2635, 0
    %v2656 = vsel %vm425, %v2637, 0
    %v2658 = vsel %vm425, %v2639, 0
    %v2660 = vsel %vm425, %v2641, 0
    %2662 = vmatprep.subr.mxu0 0.0
    %2663 = vmatpush1.xpose.msra.mxu0 %v2652
    %2664 = vmatprep.subr.mxu0 0.0
    %2665 = vmatpush1.xpose.msra.mxu0 %v2654
    %2666 = vmatprep.subr.mxu0 0.0
    %2667 = vmatpush1.xpose.msra.mxu0 %v2656
    %2668 = vmatprep.subr.mxu0 0.0
    %2669 = vmatpush1.xpose.msra.mxu0 %v2658
    %2670 = vmatprep.subr.mxu0 0.0
    %2671 = vmatpush1.xpose.msra.mxu0 %v2660
    %2672 = vmatprep.subr.mxu0 0.0
    %2673 = vmatpush1.xpose.msra.mxu0 0.0
    %2674 = vmatprep.subr.mxu0 0.0
    %2675 = vmatpush1.xpose.msra.mxu0 0.0
    %2676 = vmatprep.subr.mxu0 0.0
    %2677 = vmatpush1.xpose.msra.mxu0 0.0
    %2678 = vmatprep.subr.mxu0 0.0
    %2679 = vmatpush1.xpose.msra.mxu0 0.0
    %2680 = vmatprep.subr.mxu0 0.0
    %2681 = vmatpush1.xpose.msra.mxu0 0.0
    %2682 = vmatprep.subr.mxu0 0.0
    %2683 = vmatpush1.xpose.msra.mxu0 0.0
    %2684 = vmatprep.subr.mxu0 0.0
    %2685 = vmatpush1.xpose.msra.mxu0 0.0
    %2686 = vmatprep.subr.mxu0 0.0
    %2687 = vmatpush1.xpose.msra.mxu0 0.0
    %2688 = vmatprep.subr.mxu0 0.0
    %2689 = vmatpush1.xpose.msra.mxu0 0.0
    %2690 = vmatprep.subr.mxu0 0.0
    %2691 = vmatpush1.xpose.msra.mxu0 0.0
    %2692 = vmatprep.subr.mxu0 0.0
    %2693 = vmatpush1.xpose.msra.mxu0 0.0
    %2694 = vmatprep.subr.mxu0 0.0
    %2695 = vmatpush1.xpose.msra.mxu0 0.0
    %2696 = vmatprep.subr.mxu0 0.0
    %2697 = vmatpush1.xpose.msra.mxu0 0.0
    %2698 = vmatprep.subr.mxu0 0.0
    %2699 = vmatpush1.xpose.msra.mxu0 0.0
    %2700 = vmatprep.subr.mxu0 0.0
    %2701 = vmatpush1.xpose.msra.mxu0 0.0
    %2702 = vmatprep.subr.mxu0 0.0
    %2703 = vmatpush1.xpose.msra.mxu0 0.0
    %2704 = vmatprep.subr.mxu0 0.0
    %2705 = vmatpush1.xpose.msra.mxu0 0.0
    %2706 = vmatprep.subr.mxu0 0.0
    %2707 = vmatpush1.xpose.msra.mxu0 0.0
    %2708 = vmatprep.subr.mxu0 0.0
    %2709 = vmatpush1.xpose.msra.mxu0 0.0
    %2710 = vmatprep.subr.mxu0 0.0
    %2711 = vmatpush1.xpose.msra.mxu0 0.0
    %2712 = vmatprep.subr.mxu0 0.0
    %2713 = vmatpush1.xpose.msra.mxu0 0.0
    %2714 = vmatprep.subr.mxu0 0.0
    %2715 = vmatpush1.xpose.msra.mxu0 0.0
    %2716 = vmatprep.subr.mxu0 0.0
    %2717 = vmatpush1.xpose.msra.mxu0 0.0
    %2718 = vmatprep.subr.mxu0 0.0
    %2719 = vmatpush1.xpose.msra.mxu0 0.0
    %2720 = vmatprep.subr.mxu0 0.0
    %2721 = vmatpush1.xpose.msra.mxu0 0.0
    %2722 = vmatprep.subr.mxu0 0.0
    %2723 = vmatpush1.xpose.msra.mxu0 0.0
    %2724 = vmatprep.subr.mxu0 0.0
    %2725 = vmatpush1.xpose.msra.mxu0 0.0
    %2726 = vmatprep.mubr.f32.mxu0 0.0
    %2727 = vmatmul.mubr.f32.gmra.mrb[0].mxu0 %v2642
    %v2728 = vpop.f32.mrb[0].mxu0
    %v2729 = vadd.f32 0.0, %v2728
    %v2730 = vpop.f32.mrb[0].mxu0
    %2731 = vmatprep.mubr.f32.mxu0 0.0
    %2732 = vmatmul.mubr.f32.gmra.mrb[0].mxu0 %v2644
    %v2733 = vpop.f32.mrb[0].mxu0
    %v2734 = vadd.f32 0.0, %v2733
    %v2735 = vpop.f32.mrb[0].mxu0
    %2736 = vmatprep.mubr.f32.mxu0 0.0
    %2737 = vmatmul.mubr.f32.gmra.mrb[0].mxu0 %v2646
    %v2738 = vpop.f32.mrb[0].mxu0
    %v2739 = vadd.f32 0.0, %v2738
    %v2740 = vpop.f32.mrb[0].mxu0
    %2741 = vmatprep.mubr.f32.mxu0 0.0
    %2742 = vmatmul.mubr.f32.gmra.mrb[0].mxu0 %v2648
    %v2743 = vpop.f32.mrb[0].mxu0
    %v2744 = vadd.f32 0.0, %v2743
    %v2745 = vpop.f32.mrb[0].mxu0
    %2746 = vmatprep.mubr.f32.mxu0 0.0
    %2747 = vmatmul.mubr.f32.gmra.mrb[0].mxu0 %v2650
    %v2748 = vpop.f32.mrb[0].mxu0
    %v2749 = vadd.f32 0.0, %v2748
    %v2750 = vpop.f32.mrb[0].mxu0
    %2751 = vdwg.mxu0
    %v2757 = vrot.slane %v2469, 6
    %v2758 = vrot.slane %v2474, 6
    %v2759 = vsel %vm71, %v2757, %v2758
    %v2760 = vrot.slane %v2479, 6
    %v2761 = vsel %vm71, %v2758, %v2760
    %v2762 = vrot.slane %v2484, 6
    %v2763 = vsel %vm71, %v2760, %v2762
    %v2764 = vrot.slane %v2489, 6
    %v2765 = vsel %vm71, %v2762, %v2764
    %v2776 = vrot.slane %v2599, 4
    %v2777 = vrot.slane %v2604, 4
    %v2778 = vsel %vm86, %v2776, %v2777
    %v2779 = vrot.slane %v2609, 4
    %v2780 = vsel %vm86, %v2777, %v2779
    %v2781 = vrot.slane %v2614, 4
    %v2782 = vsel %vm86, %v2779, %v2781
    %v2783 = vrot.slane %v2619, 4
    %v2784 = vsel %vm86, %v2781, %v2783
    %v2795 = vrot.slane %v2729, 2
    %v2796 = vrot.slane %v2734, 2
    %v2797 = vsel %vm101, %v2795, %v2796
    %v2798 = vrot.slane %v2739, 2
    %v2799 = vsel %vm101, %v2796, %v2798
    %v2800 = vrot.slane %v2744, 2
    %v2801 = vsel %vm101, %v2798, %v2800
    %v2802 = vrot.slane %v2749, 2
    %v2803 = vsel %vm101, %v2800, %v2802
    %v2809 = vsel %vm71, %v2359, %v2757
    %v2810 = vsel %vm86, %v2765, %v2776
    %v2811 = vsel %vm101, %v2784, %v2795
    %v2812 = vadd.f32 %v2339, %v61
    %v2813 = vadd.f32 %v2344, %v62
    %v2814 = vadd.f32 %v2349, %v63
    %v2815 = vadd.f32 %v2354, %v64
    %v2816 = vadd.f32 %v2809, %v116
    %v2817 = vadd.f32 %v2759, %v74
    %v2818 = vadd.f32 %v2761, %v76
    %v2819 = vadd.f32 %v2763, %v78
    %v2820 = vadd.f32 %v2810, %v117
    %v2821 = vadd.f32 %v2778, %v89
    %v2822 = vadd.f32 %v2780, %v91
    %v2823 = vadd.f32 %v2782, %v93
    %v2824 = vadd.f32 %v2811, %v118
    %v2825 = vadd.f32 %v2797, %v104
    %v2826 = vadd.f32 %v2799, %v106
    %v2827 = vadd.f32 %v2801, %v108
    %v2828 = vadd.f32 %v2803, %v110
    %v2829 = vsel %vm1003, %v2812, -inf
    %2830 = vmax.xlane.f32.xlu0 %v2829
    %v2831 = vpop.xlane.xlu0 %2830
    %v2832 = vsel %vm1003, %v2813, -inf
    %2833 = vmax.xlane.f32.xlu0 %v2832
    %v2834 = vpop.xlane.xlu0 %2833
    %v2835 = vsel %vm1003, %v2814, -inf
    %2836 = vmax.xlane.f32.xlu0 %v2835
    %v2837 = vpop.xlane.xlu0 %2836
    %v2838 = vsel %vm1003, %v2815, -inf
    %2839 = vmax.xlane.f32.xlu0 %v2838
    %v2840 = vpop.xlane.xlu0 %2839
    %v2841 = vsel %vm1003, %v2816, -inf
    %2842 = vmax.xlane.f32.xlu0 %v2841
    %v2843 = vpop.xlane.xlu0 %2842
    %v2844 = vsel %vm1003, %v2817, -inf
    %2845 = vmax.xlane.f32.xlu0 %v2844
    %v2846 = vpop.xlane.xlu0 %2845
    %v2847 = vsel %vm1003, %v2818, -inf
    %2848 = vmax.xlane.f32.xlu0 %v2847
    %v2849 = vpop.xlane.xlu0 %2848
    %v2850 = vsel %vm1003, %v2819, -inf
    %2851 = vmax.xlane.f32.xlu0 %v2850
    %v2852 = vpop.xlane.xlu0 %2851
    %v2853 = vsel %vm1003, %v2820, -inf
    %2854 = vmax.xlane.f32.xlu0 %v2853
    %v2855 = vpop.xlane.xlu0 %2854
    %v2856 = vsel %vm1003, %v2821, -inf
    %2857 = vmax.xlane.f32.xlu0 %v2856
    %v2858 = vpop.xlane.xlu0 %2857
    %v2859 = vsel %vm1003, %v2822, -inf
    %2860 = vmax.xlane.f32.xlu0 %v2859
    %v2861 = vpop.xlane.xlu0 %2860
    %v2862 = vsel %vm1003, %v2823, -inf
    %2863 = vmax.xlane.f32.xlu0 %v2862
    %v2864 = vpop.xlane.xlu0 %2863
    %v2865 = vsel %vm1003, %v2824, -inf
    %2866 = vmax.xlane.f32.xlu0 %v2865
    %v2867 = vpop.xlane.xlu0 %2866
    %v2868 = vsel %vm1003, %v2825, -inf
    %2869 = vmax.xlane.f32.xlu0 %v2868
    %v2870 = vpop.xlane.xlu0 %2869
    %v2871 = vsel %vm1003, %v2826, -inf
    %2872 = vmax.xlane.f32.xlu0 %v2871
    %v2873 = vpop.xlane.xlu0 %2872
    %v2874 = vsel %vm1003, %v2827, -inf
    %2875 = vmax.xlane.f32.xlu0 %v2874
    %v2876 = vpop.xlane.xlu0 %2875
    %v2877 = vsel %vm1003, %v2828, -inf
    %2878 = vmax.xlane.f32.xlu0 %v2877
    %v2879 = vpop.xlane.xlu0 %2878
    %v2880 = vsub.f32 %v2812, %v2831
    %v2881 = vsub.f32 %v2813, %v2834
    %v2882 = vsub.f32 %v2814, %v2837
    %v2883 = vsub.f32 %v2815, %v2840
    %v2884 = vsub.f32 %v2816, %v2843
    %v2885 = vsub.f32 %v2817, %v2846
    %v2886 = vsub.f32 %v2818, %v2849
    %v2887 = vsub.f32 %v2819, %v2852
    %v2888 = vsub.f32 %v2820, %v2855
    %v2889 = vsub.f32 %v2821, %v2858
    %v2890 = vsub.f32 %v2822, %v2861
    %v2891 = vsub.f32 %v2823, %v2864
    %v2892 = vsub.f32 %v2824, %v2867
    %v2893 = vsub.f32 %v2825, %v2870
    %v2894 = vsub.f32 %v2826, %v2873
    %v2895 = vsub.f32 %v2827, %v2876
    %v2896 = vsub.f32 %v2828, %v2879
    %v2897 = vmul.f32 %v2880, 1.442695
    %v2898 = vpow.pop %v2897
    %v2899 = vmul.f32 %v2881, 1.442695
    %v2900 = vpow.pop %v2899
    %v2901 = vmul.f32 %v2882, 1.442695
    %v2902 = vpow.pop %v2901
    %v2903 = vmul.f32 %v2883, 1.442695
    %v2904 = vpow.pop %v2903
    %v2905 = vmul.f32 %v2884, 1.442695
    %v2906 = vpow.pop %v2905
    %v2907 = vmul.f32 %v2885, 1.442695
    %v2908 = vpow.pop %v2907
    %v2909 = vmul.f32 %v2886, 1.442695
    %v2910 = vpow.pop %v2909
    %v2911 = vmul.f32 %v2887, 1.442695
    %v2912 = vpow.pop %v2911
    %v2913 = vmul.f32 %v2888, 1.442695
    %v2914 = vpow.pop %v2913
    %v2915 = vmul.f32 %v2889, 1.442695
    %v2916 = vpow.pop %v2915
    %v2917 = vmul.f32 %v2890, 1.442695
    %v2918 = vpow.pop %v2917
    %v2919 = vmul.f32 %v2891, 1.442695
    %v2920 = vpow.pop %v2919
    %v2921 = vmul.f32 %v2892, 1.442695
    %v2922 = vpow.pop %v2921
    %v2923 = vmul.f32 %v2893, 1.442695
    %v2924 = vpow.pop %v2923
    %v2925 = vmul.f32 %v2894, 1.442695
    %v2926 = vpow.pop %v2925
    %v2927 = vmul.f32 %v2895, 1.442695
    %v2928 = vpow.pop %v2927
    %v2929 = vmul.f32 %v2896, 1.442695
    %v2930 = vpow.pop %v2929
    %v2931 = vsel %vm1003, %v2898, 0.0
    %2932 = vadd.xlane.f32.xlu0 %v2931
    %v2933 = vpop.xlane.xlu0 %2932
    %v2934 = vsel %vm1003, %v2900, 0.0
    %2935 = vadd.xlane.f32.xlu0 %v2934
    %v2936 = vpop.xlane.xlu0 %2935
    %v2937 = vsel %vm1003, %v2902, 0.0
    %2938 = vadd.xlane.f32.xlu0 %v2937
    %v2939 = vpop.xlane.xlu0 %2938
    %v2940 = vsel %vm1003, %v2904, 0.0
    %2941 = vadd.xlane.f32.xlu0 %v2940
    %v2942 = vpop.xlane.xlu0 %2941
    %v2943 = vsel %vm1003, %v2906, 0.0
    %2944 = vadd.xlane.f32.xlu0 %v2943
    %v2945 = vpop.xlane.xlu0 %2944
    %v2946 = vsel %vm1003, %v2908, 0.0
    %2947 = vadd.xlane.f32.xlu0 %v2946
    %v2948 = vpop.xlane.xlu0 %2947
    %v2949 = vsel %vm1003, %v2910, 0.0
    %2950 = vadd.xlane.f32.xlu0 %v2949
    %v2951 = vpop.xlane.xlu0 %2950
    %v2952 = vsel %vm1003, %v2912, 0.0
    %2953 = vadd.xlane.f32.xlu0 %v2952
    %v2954 = vpop.xlane.xlu0 %2953
    %v2955 = vsel %vm1003, %v2914, 0.0
    %2956 = vadd.xlane.f32.xlu0 %v2955
    %v2957 = vpop.xlane.xlu0 %2956
    %v2958 = vsel %vm1003, %v2916, 0.0
    %2959 = vadd.xlane.f32.xlu0 %v2958
    %v2960 = vpop.xlane.xlu0 %2959
    %v2961 = vsel %vm1003, %v2918, 0.0
    %2962 = vadd.xlane.f32.xlu0 %v2961
    %v2963 = vpop.xlane.xlu0 %2962
    %v2964 = vsel %vm1003, %v2920, 0.0
    %2965 = vadd.xlane.f32.xlu0 %v2964
    %v2966 = vpop.xlane.xlu0 %2965
    %v2967 = vsel %vm1003, %v2922, 0.0
    %2968 = vadd.xlane.f32.xlu0 %v2967
    %v2969 = vpop.xlane.xlu0 %2968
    %v2970 = vsel %vm1003, %v2924, 0.0
    %2971 = vadd.xlane.f32.xlu0 %v2970
    %v2972 = vpop.xlane.xlu0 %2971
    %v2973 = vsel %vm1003, %v2926, 0.0
    %2974 = vadd.xlane.f32.xlu0 %v2973
    %v2975 = vpop.xlane.xlu0 %2974
    %v2976 = vsel %vm1003, %v2928, 0.0
    %2977 = vadd.xlane.f32.xlu0 %v2976
    %v2978 = vpop.xlane.xlu0 %2977
    %v2979 = vsel %vm1003, %v2930, 0.0
    %2980 = vadd.xlane.f32.xlu0 %v2979
    %v2981 = vpop.xlane.xlu0 %2980
    %v2982 = vrcp.pop %v2933
    %v2983 = vrcp.pop %v2936
    %v2984 = vrcp.pop %v2939
    %v2985 = vrcp.pop %v2942
    %v2986 = vrcp.pop %v2945
    %v2987 = vrcp.pop %v2948
    %v2988 = vrcp.pop %v2951
    %v2989 = vrcp.pop %v2954
    %v2990 = vrcp.pop %v2957
    %v2991 = vrcp.pop %v2960
    %v2992 = vrcp.pop %v2963
    %v2993 = vrcp.pop %v2966
    %v2994 = vrcp.pop %v2969
    %v2995 = vrcp.pop %v2972
    %v2996 = vrcp.pop %v2975
    %v2997 = vrcp.pop %v2978
    %v2998 = vrcp.pop %v2981
    %v2999 = vmul.f32 %v2898, %v2982
    %v3000 = vmul.f32 %v2900, %v2983
    %v3001 = vmul.f32 %v2902, %v2984
    %v3002 = vmul.f32 %v2904, %v2985
    %v3003 = vmul.f32 %v2906, %v2986
    %v3004 = vmul.f32 %v2908, %v2987
    %v3005 = vmul.f32 %v2910, %v2988
    %v3006 = vmul.f32 %v2912, %v2989
    %v3007 = vmul.f32 %v2914, %v2990
    %v3008 = vmul.f32 %v2916, %v2991
    %v3009 = vmul.f32 %v2918, %v2992
    %v3010 = vmul.f32 %v2920, %v2993
    %v3011 = vmul.f32 %v2922, %v2994
    %v3012 = vmul.f32 %v2924, %v2995
    %v3013 = vmul.f32 %v2926, %v2996
    %v3014 = vmul.f32 %v2928, %v2997
    %v3015 = vmul.f32 %v2930, %v2998
    %v3016 = vpack.c.bf16 %v3000, %v2999
    %v3017 = vpack.c.bf16 %v3002, %v3001
    %v3018 = vpack.c.bf16 %v3003, %v3003
    %v3019 = vpack.c.bf16 %v2219, %v2216
    %v3020 = vpack.c.bf16 %v2227, %v2224
    %v3021 = vpack.c.bf16 %v2232, %v2232
    %3025 = vrot.lane.b32.xlu0 %v3019, 64
    %v3026 = vpop.permute.xlu0 %3025
    %3027 = vrot.lane.b32.xlu0 %v3020, 64
    %v3028 = vpop.permute.xlu0 %3027
    %3029 = vrot.lane.b32.xlu0 %v3021, 64
    %v3030 = vpop.permute.xlu0 %3029
    %v3034 = vsel %vm1003, %v3016, 0
    %v3037 = vsel %vm1003, %v3017, 0
    %v3040 = vsel %vm1003, %v3018, 0
    %v3043 = vsel %vm207, %v3030, 0
    %3045 = vmatprep.subr.bf16.mxu0 0
    %3046 = vmatpush1.bf16.msra.mxu0 %v3026
    %3047 = vmatprep.subr.bf16.mxu0 0
    %3048 = vmatpush1.bf16.msra.mxu0 %v3028
    %3049 = vmatprep.subr.bf16.mxu0 0
    %3050 = vmatpush1.bf16.msra.mxu0 %v3043
    %3051 = vmatprep.subr.bf16.mxu0 0
    %3052 = vmatpush1.bf16.msra.mxu0 0
    %3053 = vmatprep.subr.bf16.mxu0 0
    %3054 = vmatpush1.bf16.msra.mxu0 0
    %3055 = vmatprep.subr.bf16.mxu0 0
    %3056 = vmatpush1.bf16.msra.mxu0 0
    %3057 = vmatprep.subr.bf16.mxu0 0
    %3058 = vmatpush1.bf16.msra.mxu0 0
    %3059 = vmatprep.subr.bf16.mxu0 0
    %3060 = vmatpush1.bf16.msra.mxu0 0
    %3061 = vmatprep.subr.bf16.mxu0 0
    %3062 = vmatpush1.bf16.msra.mxu0 0
    %3063 = vmatprep.subr.bf16.mxu0 0
    %3064 = vmatpush1.bf16.msra.mxu0 0
    %3065 = vmatprep.subr.bf16.mxu0 0
    %3066 = vmatpush1.bf16.msra.mxu0 0
    %3067 = vmatprep.subr.bf16.mxu0 0
    %3068 = vmatpush1.bf16.msra.mxu0 0
    %3069 = vmatprep.subr.bf16.mxu0 0
    %3070 = vmatpush1.bf16.msra.mxu0 0
    %3071 = vmatprep.subr.bf16.mxu0 0
    %3072 = vmatpush1.bf16.msra.mxu0 0
    %3073 = vmatprep.subr.bf16.mxu0 0
    %3074 = vmatpush1.bf16.msra.mxu0 0
    %3075 = vmatprep.subr.bf16.mxu0 0
    %3076 = vmatpush1.bf16.msra.mxu0 0
    %3077 = vmatprep.mubr.bf16.mxu0 0
    %3078 = vmatmul.mubr.bf16.gmra.mrb[0].mxu0 %v3034
    %v3079 = vpop.f32.mrb[0].mxu0
    %v3080 = vadd.f32 0.0, %v3079
    %v3081 = vpop.f32.mrb[0].mxu0
    %v3082 = vpop.f32.mrb[0].mxu0
    %v3083 = vadd.f32 0.0, %v3082
    %v3084 = vpop.f32.mrb[0].mxu0
    %3085 = vmatprep.mubr.bf16.mxu0 0
    %3086 = vmatmul.mubr.bf16.gmra.mrb[0].mxu0 %v3037
    %v3087 = vpop.f32.mrb[0].mxu0
    %v3088 = vadd.f32 0.0, %v3087
    %v3089 = vpop.f32.mrb[0].mxu0
    %v3090 = vpop.f32.mrb[0].mxu0
    %v3091 = vadd.f32 0.0, %v3090
    %v3092 = vpop.f32.mrb[0].mxu0
    %3093 = vmatprep.mubr.bf16.mxu0 0
    %3094 = vmatmul.mubr.bf16.gmra.mrb[0].mxu0 %v3040
    %v3095 = vpop.f32.mrb[0].mxu0
    %v3096 = vadd.f32 0.0, %v3095
    %v3097 = vpop.f32.mrb[0].mxu0
    %v3098 = vpop.f32.mrb[0].mxu0
    %v3099 = vpop.f32.mrb[0].mxu0
    %3100 = vdwg.mxu0
    %v3101 = vpack.c.bf16 %v3004, %v3003
    %v3102 = vpack.c.bf16 %v3006, %v3005
    %v3103 = vpack.c.bf16 %v3007, %v3007
    %v3107 = vrot.slane %v3101, 1
    %v3108 = vrot.slane %v3102, 1
    %v3109 = vsel %vm1282, %v3107, %v3108
    %v3110 = vrot.slane %v3103, 1
    %v3111 = vsel %vm1282, %v3108, %v3110
    %3112 = vrot.lane.b32.xlu0 %v3019, 56
    %v3113 = vpop.permute.xlu0 %3112
    %3114 = vrot.lane.b32.xlu0 %v3020, 56
    %v3115 = vpop.permute.xlu0 %3114
    %3116 = vrot.lane.b32.xlu0 %v3021, 56
    %v3117 = vpop.permute.xlu0 %3116
    %v3121 = vsel %vm1003, %v3109, 0
    %v3124 = vsel %vm1003, %v3111, 0
    %v3127 = vsel %vm1003, %v3110, 0
    %v3130 = vsel %vm207, %v3117, 0
    %3132 = vmatprep.subr.bf16.mxu0 0
    %3133 = vmatpush1.bf16.msra.mxu0 %v3113
    %3134 = vmatprep.subr.bf16.mxu0 0
    %3135 = vmatpush1.bf16.msra.mxu0 %v3115
    %3136 = vmatprep.subr.bf16.mxu0 0
    %3137 = vmatpush1.bf16.msra.mxu0 %v3130
    %3138 = vmatprep.subr.bf16.mxu0 0
    %3139 = vmatpush1.bf16.msra.mxu0 0
    %3140 = vmatprep.subr.bf16.mxu0 0
    %3141 = vmatpush1.bf16.msra.mxu0 0
    %3142 = vmatprep.subr.bf16.mxu0 0
    %3143 = vmatpush1.bf16.msra.mxu0 0
    %3144 = vmatprep.subr.bf16.mxu0 0
    %3145 = vmatpush1.bf16.msra.mxu0 0
    %3146 = vmatprep.subr.bf16.mxu0 0
    %3147 = vmatpush1.bf16.msra.mxu0 0
    %3148 = vmatprep.subr.bf16.mxu0 0
    %3149 = vmatpush1.bf16.msra.mxu0 0
    %3150 = vmatprep.subr.bf16.mxu0 0
    %3151 = vmatpush1.bf16.msra.mxu0 0
    %3152 = vmatprep.subr.bf16.mxu0 0
    %3153 = vmatpush1.bf16.msra.mxu0 0
    %3154 = vmatprep.subr.bf16.mxu0 0
    %3155 = vmatpush1.bf16.msra.mxu0 0
    %3156 = vmatprep.subr.bf16.mxu0 0
    %3157 = vmatpush1.bf16.msra.mxu0 0
    %3158 = vmatprep.subr.bf16.mxu0 0
    %3159 = vmatpush1.bf16.msra.mxu0 0
    %3160 = vmatprep.subr.bf16.mxu0 0
    %3161 = vmatpush1.bf16.msra.mxu0 0
    %3162 = vmatprep.subr.bf16.mxu0 0
    %3163 = vmatpush1.bf16.msra.mxu0 0
    %3164 = vmatprep.mubr.bf16.mxu0 0
    %3165 = vmatmul.mubr.bf16.gmra.mrb[0].mxu0 %v3121
    %v3166 = vpop.f32.mrb[0].mxu0
    %v3167 = vadd.f32 0.0, %v3166
    %v3168 = vpop.f32.mrb[0].mxu0
    %v3169 = vpop.f32.mrb[0].mxu0
    %v3170 = vadd.f32 0.0, %v3169
    %v3171 = vpop.f32.mrb[0].mxu0
    %3172 = vmatprep.mubr.bf16.mxu0 0
    %3173 = vmatmul.mubr.bf16.gmra.mrb[0].mxu0 %v3124
    %v3174 = vpop.f32.mrb[0].mxu0
    %v3175 = vadd.f32 0.0, %v3174
    %v3176 = vpop.f32.mrb[0].mxu0
    %v3177 = vpop.f32.mrb[0].mxu0
    %v3178 = vadd.f32 0.0, %v3177
    %v3179 = vpop.f32.mrb[0].mxu0
    %3180 = vmatprep.mubr.bf16.mxu0 0
    %3181 = vmatmul.mubr.bf16.gmra.mrb[0].mxu0 %v3127
    %v3182 = vpop.f32.mrb[0].mxu0
    %v3183 = vadd.f32 0.0, %v3182
    %v3184 = vpop.f32.mrb[0].mxu0
    %v3185 = vpop.f32.mrb[0].mxu0
    %v3186 = vpop.f32.mrb[0].mxu0
    %3187 = vdwg.mxu0
    %v3188 = vpack.c.bf16 %v3008, %v3007
    %v3189 = vpack.c.bf16 %v3010, %v3009
    %v3190 = vpack.c.bf16 %v3011, %v3011
    %v3194 = vrot.slane %v3188, 2
    %v3195 = vrot.slane %v3189, 2
    %v3196 = vsel %vm1370, %v3194, %v3195
    %v3197 = vrot.slane %v3190, 2
    %v3198 = vsel %vm1370, %v3195, %v3197
    %3199 = vrot.lane.b32.xlu0 %v3019, 48
    %v3200 = vpop.permute.xlu0 %3199
    %3201 = vrot.lane.b32.xlu0 %v3020, 48
    %v3202 = vpop.permute.xlu0 %3201
    %3203 = vrot.lane.b32.xlu0 %v3021, 48
    %v3204 = vpop.permute.xlu0 %3203
    %v3208 = vsel %vm1003, %v3196, 0
    %v3211 = vsel %vm1003, %v3198, 0
    %v3214 = vsel %vm1003, %v3197, 0
    %v3217 = vsel %vm207, %v3204, 0
    %3219 = vmatprep.subr.bf16.mxu0 0
    %3220 = vmatpush1.bf16.msra.mxu0 %v3200
    %3221 = vmatprep.subr.bf16.mxu0 0
    %3222 = vmatpush1.bf16.msra.mxu0 %v3202
    %3223 = vmatprep.subr.bf16.mxu0 0
    %3224 = vmatpush1.bf16.msra.mxu0 %v3217
    %3225 = vmatprep.subr.bf16.mxu0 0
    %3226 = vmatpush1.bf16.msra.mxu0 0
    %3227 = vmatprep.subr.bf16.mxu0 0
    %3228 = vmatpush1.bf16.msra.mxu0 0
    %3229 = vmatprep.subr.bf16.mxu0 0
    %3230 = vmatpush1.bf16.msra.mxu0 0
    %3231 = vmatprep.subr.bf16.mxu0 0
    %3232 = vmatpush1.bf16.msra.mxu0 0
    %3233 = vmatprep.subr.bf16.mxu0 0
    %3234 = vmatpush1.bf16.msra.mxu0 0
    %3235 = vmatprep.subr.bf16.mxu0 0
    %3236 = vmatpush1.bf16.msra.mxu0 0
    %3237 = vmatprep.subr.bf16.mxu0 0
    %3238 = vmatpush1.bf16.msra.mxu0 0
    %3239 = vmatprep.subr.bf16.mxu0 0
    %3240 = vmatpush1.bf16.msra.mxu0 0
    %3241 = vmatprep.subr.bf16.mxu0 0
    %3242 = vmatpush1.bf16.msra.mxu0 0
    %3243 = vmatprep.subr.bf16.mxu0 0
    %3244 = vmatpush1.bf16.msra.mxu0 0
    %3245 = vmatprep.subr.bf16.mxu0 0
    %3246 = vmatpush1.bf16.msra.mxu0 0
    %3247 = vmatprep.subr.bf16.mxu0 0
    %3248 = vmatpush1.bf16.msra.mxu0 0
    %3249 = vmatprep.subr.bf16.mxu0 0
    %3250 = vmatpush1.bf16.msra.mxu0 0
    %3251 = vmatprep.mubr.bf16.mxu0 0
    %3252 = vmatmul.mubr.bf16.gmra.mrb[0].mxu0 %v3208
    %v3253 = vpop.f32.mrb[0].mxu0
    %v3254 = vadd.f32 0.0, %v3253
    %v3255 = vpop.f32.mrb[0].mxu0
    %v3256 = vpop.f32.mrb[0].mxu0
    %v3257 = vadd.f32 0.0, %v3256
    %v3258 = vpop.f32.mrb[0].mxu0
    %3259 = vmatprep.mubr.bf16.mxu0 0
    %3260 = vmatmul.mubr.bf16.gmra.mrb[0].mxu0 %v3211
    %v3261 = vpop.f32.mrb[0].mxu0
    %v3262 = vadd.f32 0.0, %v3261
    %v3263 = vpop.f32.mrb[0].mxu0
    %v3264 = vpop.f32.mrb[0].mxu0
    %v3265 = vadd.f32 0.0, %v3264
    %v3266 = vpop.f32.mrb[0].mxu0
    %3267 = vmatprep.mubr.bf16.mxu0 0
    %3268 = vmatmul.mubr.bf16.gmra.mrb[0].mxu0 %v3214
    %v3269 = vpop.f32.mrb[0].mxu0
    %v3270 = vadd.f32 0.0, %v3269
    %v3271 = vpop.f32.mrb[0].mxu0
    %v3272 = vpop.f32.mrb[0].mxu0
    %v3273 = vpop.f32.mrb[0].mxu0
    %3274 = vdwg.mxu0
    %v3275 = vpack.c.bf16 %v3012, %v3011
    %v3276 = vpack.c.bf16 %v3014, %v3013
    %v3277 = vpack.c.bf16 %v3015, %v3015
    %v3281 = vrot.slane %v3275, 3
    %v3282 = vrot.slane %v3276, 3
    %v3283 = vsel %vm1458, %v3281, %v3282
    %v3284 = vrot.slane %v3277, 3
    %v3285 = vsel %vm1458, %v3282, %v3284
    %3286 = vrot.lane.b32.xlu0 %v3019, 40
    %v3287 = vpop.permute.xlu0 %3286
    %3288 = vrot.lane.b32.xlu0 %v3020, 40
    %v3289 = vpop.permute.xlu0 %3288
    %3290 = vrot.lane.b32.xlu0 %v3021, 40
    %v3291 = vpop.permute.xlu0 %3290
    %v3295 = vsel %vm1003, %v3283, 0
    %v3298 = vsel %vm1003, %v3285, 0
    %v3301 = vsel %vm1003, %v3284, 0
    %v3304 = vsel %vm207, %v3291, 0
    %3306 = vmatprep.subr.bf16.mxu0 0
    %3307 = vmatpush1.bf16.msra.mxu0 %v3287
    %3308 = vmatprep.subr.bf16.mxu0 0
    %3309 = vmatpush1.bf16.msra.mxu0 %v3289
    %3310 = vmatprep.subr.bf16.mxu0 0
    %3311 = vmatpush1.bf16.msra.mxu0 %v3304
    %3312 = vmatprep.subr.bf16.mxu0 0
    %3313 = vmatpush1.bf16.msra.mxu0 0
    %3314 = vmatprep.subr.bf16.mxu0 0
    %3315 = vmatpush1.bf16.msra.mxu0 0
    %3316 = vmatprep.subr.bf16.mxu0 0
    %3317 = vmatpush1.bf16.msra.mxu0 0
    %3318 = vmatprep.subr.bf16.mxu0 0
    %3319 = vmatpush1.bf16.msra.mxu0 0
    %3320 = vmatprep.subr.bf16.mxu0 0
    %3321 = vmatpush1.bf16.msra.mxu0 0
    %3322 = vmatprep.subr.bf16.mxu0 0
    %3323 = vmatpush1.bf16.msra.mxu0 0
    %3324 = vmatprep.subr.bf16.mxu0 0
    %3325 = vmatpush1.bf16.msra.mxu0 0
    %3326 = vmatprep.subr.bf16.mxu0 0
    %3327 = vmatpush1.bf16.msra.mxu0 0
    %3328 = vmatprep.subr.bf16.mxu0 0
    %3329 = vmatpush1.bf16.msra.mxu0 0
    %3330 = vmatprep.subr.bf16.mxu0 0
    %3331 = vmatpush1.bf16.msra.mxu0 0
    %3332 = vmatprep.subr.bf16.mxu0 0
    %3333 = vmatpush1.bf16.msra.mxu0 0
    %3334 = vmatprep.subr.bf16.mxu0 0
    %3335 = vmatpush1.bf16.msra.mxu0 0
    %3336 = vmatprep.subr.bf16.mxu0 0
    %3337 = vmatpush1.bf16.msra.mxu0 0
    %3338 = vmatprep.mubr.bf16.mxu0 0
    %3339 = vmatmul.mubr.bf16.gmra.mrb[0].mxu0 %v3295
    %v3340 = vpop.f32.mrb[0].mxu0
    %v3341 = vadd.f32 0.0, %v3340
    %v3342 = vpop.f32.mrb[0].mxu0
    %v3343 = vpop.f32.mrb[0].mxu0
    %v3344 = vadd.f32 0.0, %v3343
    %v3345 = vpop.f32.mrb[0].mxu0
    %3346 = vmatprep.mubr.bf16.mxu0 0
    %3347 = vmatmul.mubr.bf16.gmra.mrb[0].mxu0 %v3298
    %v3348 = vpop.f32.mrb[0].mxu0
    %v3349 = vadd.f32 0.0, %v3348
    %v3350 = vpop.f32.mrb[0].mxu0
    %v3351 = vpop.f32.mrb[0].mxu0
    %v3352 = vadd.f32 0.0, %v3351
    %v3353 = vpop.f32.mrb[0].mxu0
    %3354 = vmatprep.mubr.bf16.mxu0 0
    %3355 = vmatmul.mubr.bf16.gmra.mrb[0].mxu0 %v3301
    %v3356 = vpop.f32.mrb[0].mxu0
    %v3357 = vadd.f32 0.0, %v3356
    %v3358 = vpop.f32.mrb[0].mxu0
    %v3359 = vpop.f32.mrb[0].mxu0
    %v3360 = vpop.f32.mrb[0].mxu0
    %3361 = vdwg.mxu0
    %3367 = vrot.lane.b32.xlu0 %v3167, 8
    %v3368 = vpop.permute.xlu0 %3367
    %3369 = vrot.lane.b32.xlu0 %v3170, 8
    %v3370 = vpop.permute.xlu0 %3369
    %3371 = vrot.lane.b32.xlu0 %v3175, 8
    %v3372 = vpop.permute.xlu0 %3371
    %3373 = vrot.lane.b32.xlu0 %v3178, 8
    %v3374 = vpop.permute.xlu0 %3373
    %3375 = vrot.lane.b32.xlu0 %v3183, 8
    %v3376 = vpop.permute.xlu0 %3375
    %3387 = vrot.lane.b32.xlu0 %v3254, 16
    %v3388 = vpop.permute.xlu0 %3387
    %3389 = vrot.lane.b32.xlu0 %v3257, 16
    %v3390 = vpop.permute.xlu0 %3389
    %3391 = vrot.lane.b32.xlu0 %v3262, 16
    %v3392 = vpop.permute.xlu0 %3391
    %3393 = vrot.lane.b32.xlu0 %v3265, 16
    %v3394 = vpop.permute.xlu0 %3393
    %3395 = vrot.lane.b32.xlu0 %v3270, 16
    %v3396 = vpop.permute.xlu0 %3395
    %3407 = vrot.lane.b32.xlu0 %v3341, 24
    %v3408 = vpop.permute.xlu0 %3407
    %3409 = vrot.lane.b32.xlu0 %v3344, 24
    %v3410 = vpop.permute.xlu0 %3409
    %3411 = vrot.lane.b32.xlu0 %v3349, 24
    %v3412 = vpop.permute.xlu0 %3411
    %3413 = vrot.lane.b32.xlu0 %v3352, 24
    %v3414 = vpop.permute.xlu0 %3413
    %3415 = vrot.lane.b32.xlu0 %v3357, 24
    %v3416 = vpop.permute.xlu0 %3415
    %v3422 = vsel %vm425, %v3080, %v3368
    %v3423 = vsel %vm425, %v3083, %v3370
    %v3424 = vsel %vm425, %v3088, %v3372
    %v3425 = vsel %vm425, %v3091, %v3374
    %v3426 = vsel %vm425, %v3096, %v3376
    %v3427 = vsel %vm1605, %v3422, %v3388
    %v3428 = vsel %vm1605, %v3423, %v3390
    %v3429 = vsel %vm1605, %v3424, %v3392
    %v3430 = vsel %vm1605, %v3425, %v3394
    %v3431 = vsel %vm1605, %v3426, %v3396
    %v3432 = vsel %vm1611, %v3427, %v3408
    %v3433 = vsel %vm1611, %v3428, %v3410
    %v3434 = vsel %vm1611, %v3429, %v3412
    %v3435 = vsel %vm1611, %v3430, %v3414
    %v3436 = vsel %vm1611, %v3431, %v3416
    %v3437 = vpack.c.bf16 %v3433, %v3432
    %v3438 = vpack.c.bf16 %v3435, %v3434
    %v3439 = vpack.c.bf16 %v3436, %v3436
    %s3440 = scalar_lea.vmem %s4, 16
    %v3441 = vld [vmem:[%s3440] sm:$0xf]
    %v3442 = vld [vmem:[%s3440 + $0x4] sm:$0xf]
    %v3443 = vld [vmem:[%s3440 + $0x8] sm:$0xf]
    %v3444 = vld [vmem:[%s3440 + $0xc] sm:$0xf]
    %v3449 = vunpack.c.l.b16 %v3441
    %v3450 = vunpack.c.l.b16 %v3442
    %v3451 = vunpack.c.l.b16 %v3443
    %v3452 = vunpack.c.l.b16 %v3444
    %v3453 = vpack.c.b16 %v3450, %v3449
    %v3454 = vpack.c.b16 %v3452, %v3451
    %v3458 = vsel %vm236, %v3437, 0
    %v3461 = vsel %vm236, %v3438, 0
    %v3464 = vsel %vm236, %v3439, 0
    %3466 = vmatprep.subr.bf16.mxu0 0
    %3467 = vmatpush1.bf16.msra.mxu0 %v3453
    %3468 = vmatprep.subr.bf16.mxu0 0
    %3469 = vmatpush1.bf16.msra.mxu0 %v3454
    %3470 = vmatprep.subr.bf16.mxu0 0
    %3471 = vmatpush1.bf16.msra.mxu0 0
    %3472 = vmatprep.subr.bf16.mxu0 0
    %3473 = vmatpush1.bf16.msra.mxu0 0
    %3474 = vmatprep.subr.bf16.mxu0 0
    %3475 = vmatpush1.bf16.msra.mxu0 0
    %3476 = vmatprep.subr.bf16.mxu0 0
    %3477 = vmatpush1.bf16.msra.mxu0 0
    %3478 = vmatprep.subr.bf16.mxu0 0
    %3479 = vmatpush1.bf16.msra.mxu0 0
    %3480 = vmatprep.subr.bf16.mxu0 0
    %3481 = vmatpush1.bf16.msra.mxu0 0
    %3482 = vmatprep.subr.bf16.mxu0 0
    %3483 = vmatpush1.bf16.msra.mxu0 0
    %3484 = vmatprep.subr.bf16.mxu0 0
    %3485 = vmatpush1.bf16.msra.mxu0 0
    %3486 = vmatprep.subr.bf16.mxu0 0
    %3487 = vmatpush1.bf16.msra.mxu0 0
    %3488 = vmatprep.subr.bf16.mxu0 0
    %3489 = vmatpush1.bf16.msra.mxu0 0
    %3490 = vmatprep.subr.bf16.mxu0 0
    %3491 = vmatpush1.bf16.msra.mxu0 0
    %3492 = vmatprep.subr.bf16.mxu0 0
    %3493 = vmatpush1.bf16.msra.mxu0 0
    %3494 = vmatprep.subr.bf16.mxu0 0
    %3495 = vmatpush1.bf16.msra.mxu0 0
    %3496 = vmatprep.subr.bf16.mxu0 0
    %3497 = vmatpush1.bf16.msra.mxu0 0
    %3498 = vmatprep.mubr.bf16.mxu0 0
    %3499 = vmatmul.mubr.bf16.gmra.mrb[0].mxu0 %v3458
    %v3500 = vpop.f32.mrb[0].mxu0
    %v3501 = vadd.f32 0.0, %v3500
    %v3502 = vpop.f32.mrb[0].mxu0
    %v3503 = vpop.f32.mrb[0].mxu0
    %v3504 = vadd.f32 0.0, %v3503
    %v3505 = vpop.f32.mrb[0].mxu0
    %3506 = vmatprep.mubr.bf16.mxu0 0
    %3507 = vmatmul.mubr.bf16.gmra.mrb[0].mxu0 %v3461
    %v3508 = vpop.f32.mrb[0].mxu0
    %v3509 = vadd.f32 0.0, %v3508
    %v3510 = vpop.f32.mrb[0].mxu0
    %v3511 = vpop.f32.mrb[0].mxu0
    %v3512 = vadd.f32 0.0, %v3511
    %v3513 = vpop.f32.mrb[0].mxu0
    %3514 = vmatprep.mubr.bf16.mxu0 0
    %3515 = vmatmul.mubr.bf16.gmra.mrb[0].mxu0 %v3464
    %v3516 = vpop.f32.mrb[0].mxu0
    %v3517 = vadd.f32 0.0, %v3516
    %v3518 = vpop.f32.mrb[0].mxu0
    %v3519 = vpop.f32.mrb[0].mxu0
    %v3520 = vpop.f32.mrb[0].mxu0
    %3521 = vdwg.mxu0
    %v3522 = vadd.f32 %v2058, %v3501
    %v3523 = vadd.f32 %v2059, %v3504
    %v3524 = vadd.f32 %v2060, %v3509
    %v3525 = vadd.f32 %v2061, %v3512
    %v3526 = vadd.f32 %v2062, %v3517
    %v3527 = vlaneseq
    %v3528 = vshrl.u32 %v3527, 7
    %v3529 = vsub.s32 3, %v3528
    %v3530 = vrot.slane %v2064, %v3529
    %v3531 = vadd.f32 %v3522, %v3530
    %v3532 = vadd.f32 %v3523, %v3530
    %v3533 = vadd.f32 %v3524, %v3530
    %v3534 = vadd.f32 %v3525, %v3530
    %v3535 = vadd.f32 %v3526, %v3530
    %v3536 = vsel %vm236, %v3531, 0.0
    %3537 = vadd.xlane.f32.xlu0 %v3536
    %v3538 = vpop.xlane.xlu0 %3537
    %v3539 = vsel %vm236, %v3532, 0.0
    %3540 = vadd.xlane.f32.xlu0 %v3539
    %v3541 = vpop.xlane.xlu0 %3540
    %v3542 = vsel %vm236, %v3533, 0.0
    %3543 = vadd.xlane.f32.xlu0 %v3542
    %v3544 = vpop.xlane.xlu0 %3543
    %v3545 = vsel %vm236, %v3534, 0.0
    %3546 = vadd.xlane.f32.xlu0 %v3545
    %v3547 = vpop.xlane.xlu0 %3546
    %v3548 = vsel %vm249, %v3535, 0.0
    %3549 = vadd.xlane.f32.xlu0 %v3548
    %v3550 = vpop.xlane.xlu0 %3549
    %v3551 = vmul.f32 %v3538, %v253
    %v3552 = vmul.f32 %v3541, %v253
    %v3553 = vmul.f32 %v3544, %v253
    %v3554 = vmul.f32 %v3547, %v253
    %v3555 = vmul.f32 %v3550, %v253
    %v3556 = vsub.f32 %v3531, %v3551
    %v3557 = vsub.f32 %v3532, %v3552
    %v3558 = vsub.f32 %v3533, %v3553
    %v3559 = vsub.f32 %v3534, %v3554
    %v3560 = vsub.f32 %v3535, %v3555
    %v3561 = vmul.f32 %v3556, %v3556
    %v3562 = vmul.f32 %v3557, %v3557
    %v3563 = vmul.f32 %v3558, %v3558
    %v3564 = vmul.f32 %v3559, %v3559
    %v3565 = vmul.f32 %v3560, %v3560
    %v3566 = vsel %vm236, %v3561, 0.0
    %3567 = vadd.xlane.f32.xlu0 %v3566
    %v3568 = vpop.xlane.xlu0 %3567
    %v3569 = vsel %vm236, %v3562, 0.0
    %3570 = vadd.xlane.f32.xlu0 %v3569
    %v3571 = vpop.xlane.xlu0 %3570
    %v3572 = vsel %vm236, %v3563, 0.0
    %3573 = vadd.xlane.f32.xlu0 %v3572
    %v3574 = vpop.xlane.xlu0 %3573
    %v3575 = vsel %vm236, %v3564, 0.0
    %3576 = vadd.xlane.f32.xlu0 %v3575
    %v3577 = vpop.xlane.xlu0 %3576
    %v3578 = vsel %vm249, %v3565, 0.0
    %3579 = vadd.xlane.f32.xlu0 %v3578
    %v3580 = vpop.xlane.xlu0 %3579
    %v3581 = vmul.f32 %v3568, %v253
    %v3582 = vmul.f32 %v3571, %v253
    %v3583 = vmul.f32 %v3574, %v253
    %v3584 = vmul.f32 %v3577, %v253
    %v3585 = vmul.f32 %v3580, %v253
    %v3586 = vadd.f32 %v3581, 1e-06
    %v3587 = vadd.f32 %v3582, 1e-06
    %v3588 = vadd.f32 %v3583, 1e-06
    %v3589 = vadd.f32 %v3584, 1e-06
    %v3590 = vadd.f32 %v3585, 1e-06
    %v3591 = vrsqrt.pop %v3586
    %v3592 = vrsqrt.pop %v3587
    %v3593 = vrsqrt.pop %v3588
    %v3594 = vrsqrt.pop %v3589
    %v3595 = vrsqrt.pop %v3590
    %v3596 = vmul.f32 %v3556, %v3591
    %v3597 = vmul.f32 %v3557, %v3592
    %v3598 = vmul.f32 %v3558, %v3593
    %v3599 = vmul.f32 %v3559, %v3594
    %v3600 = vmul.f32 %v3560, %v3595
    %v3601 = vlaneseq
    %v3602 = vshrl.u32 %v3601, 7
    %v3603 = vsub.s32 4, %v3602
    %v3604 = vrot.slane %v2064, %v3603
    %v3605 = vmul.f32 %v3596, %v3604
    %v3606 = vmul.f32 %v3597, %v3604
    %v3607 = vmul.f32 %v3598, %v3604
    %v3608 = vmul.f32 %v3599, %v3604
    %v3609 = vmul.f32 %v3600, %v3604
    %v3610 = vlaneseq
    %v3611 = vshrl.u32 %v3610, 7
    %v3612 = vsub.s32 5, %v3611
    %v3613 = vrot.slane %v2064, %v3612
    %v3614 = vadd.f32 %v3605, %v3613
    %v3615 = vadd.f32 %v3606, %v3613
    %v3616 = vadd.f32 %v3607, %v3613
    %v3617 = vadd.f32 %v3608, %v3613
    %v3618 = vadd.f32 %v3609, %v3613
    %v3619 = vpack.c.bf16 %v3615, %v3614
    %v3620 = vpack.c.bf16 %v3617, %v3616
    %v3621 = vpack.c.bf16 %v3618, %v3618
    %s3622 = scalar_lea.vmem %s5, 16
    %v3623 = vld [vmem:[%s3622] sm:$0xf]
    %v3624 = vld [vmem:[%s3622 + $0x4] sm:$0xf]
    %v3625 = vld [vmem:[%s3622 + $0x8] sm:$0xf]
    %v3626 = vld [vmem:[%s3622 + $0xc] sm:$0xf]
    %v3627 = vlaneseq
    %v3628 = vshrl.u32 %v3627, 7
    %v3629 = vsub.s32 6, %v3628
    %v3630 = vrot.slane %v2064, %v3629
    %v3635 = vunpack.c.l.b16 %v3623
    %v3636 = vunpack.c.l.b16 %v3624
    %v3637 = vunpack.c.l.b16 %v3625
    %v3638 = vunpack.c.l.b16 %v3626
    %v3639 = vpack.c.b16 %v3636, %v3635
    %v3640 = vpack.c.b16 %v3638, %v3637
    %v3644 = vsel %vm236, %v3619, 0
    %v3647 = vsel %vm236, %v3620, 0
    %v3650 = vsel %vm236, %v3621, 0
    %3652 = vmatprep.subr.bf16.mxu0 0
    %3653 = vmatpush1.bf16.msra.mxu0 %v3639
    %3654 = vmatprep.subr.bf16.mxu0 0
    %3655 = vmatpush1.bf16.msra.mxu0 %v3640
    %3656 = vmatprep.subr.bf16.mxu0 0
    %3657 = vmatpush1.bf16.msra.mxu0 0
    %3658 = vmatprep.subr.bf16.mxu0 0
    %3659 = vmatpush1.bf16.msra.mxu0 0
    %3660 = vmatprep.subr.bf16.mxu0 0
    %3661 = vmatpush1.bf16.msra.mxu0 0
    %3662 = vmatprep.subr.bf16.mxu0 0
    %3663 = vmatpush1.bf16.msra.mxu0 0
    %3664 = vmatprep.subr.bf16.mxu0 0
    %3665 = vmatpush1.bf16.msra.mxu0 0
    %3666 = vmatprep.subr.bf16.mxu0 0
    %3667 = vmatpush1.bf16.msra.mxu0 0
    %3668 = vmatprep.subr.bf16.mxu0 0
    %3669 = vmatpush1.bf16.msra.mxu0 0
    %3670 = vmatprep.subr.bf16.mxu0 0
    %3671 = vmatpush1.bf16.msra.mxu0 0
    %3672 = vmatprep.subr.bf16.mxu0 0
    %3673 = vmatpush1.bf16.msra.mxu0 0
    %3674 = vmatprep.subr.bf16.mxu0 0
    %3675 = vmatpush1.bf16.msra.mxu0 0
    %3676 = vmatprep.subr.bf16.mxu0 0
    %3677 = vmatpush1.bf16.msra.mxu0 0
    %3678 = vmatprep.subr.bf16.mxu0 0
    %3679 = vmatpush1.bf16.msra.mxu0 0
    %3680 = vmatprep.subr.bf16.mxu0 0
    %3681 = vmatpush1.bf16.msra.mxu0 0
    %3682 = vmatprep.subr.bf16.mxu0 0
    %3683 = vmatpush1.bf16.msra.mxu0 0
    %3684 = vmatprep.mubr.bf16.mxu0 0
    %3685 = vmatmul.mubr.bf16.gmra.mrb[0].mxu0 %v3644
    %v3686 = vpop.f32.mrb[0].mxu0
    %v3687 = vadd.f32 %v3630, %v3686
    %v3688 = vpop.f32.mrb[0].mxu0
    %v3689 = vpop.f32.mrb[0].mxu0
    %v3690 = vadd.f32 %v3630, %v3689
    %v3691 = vpop.f32.mrb[0].mxu0
    %3692 = vmatprep.mubr.bf16.mxu0 0
    %3693 = vmatmul.mubr.bf16.gmra.mrb[0].mxu0 %v3647
    %v3694 = vpop.f32.mrb[0].mxu0
    %v3695 = vadd.f32 %v3630, %v3694
    %v3696 = vpop.f32.mrb[0].mxu0
    %v3697 = vpop.f32.mrb[0].mxu0
    %v3698 = vadd.f32 %v3630, %v3697
    %v3699 = vpop.f32.mrb[0].mxu0
    %3700 = vmatprep.mubr.bf16.mxu0 0
    %3701 = vmatmul.mubr.bf16.gmra.mrb[0].mxu0 %v3650
    %v3702 = vpop.f32.mrb[0].mxu0
    %v3703 = vadd.f32 %v3630, %v3702
    %v3704 = vpop.f32.mrb[0].mxu0
    %v3705 = vpop.f32.mrb[0].mxu0
    %v3706 = vpop.f32.mrb[0].mxu0
    %3707 = vdwg.mxu0
    %v3708 = vmul.f32 %v3687, %v3687
    %v3709 = vmul.f32 %v3690, %v3690
    %v3710 = vmul.f32 %v3695, %v3695
    %v3711 = vmul.f32 %v3698, %v3698
    %v3712 = vmul.f32 %v3703, %v3703
    %v3713 = vmul.f32 %v3687, %v3708
    %v3714 = vmul.f32 %v3690, %v3709
    %v3715 = vmul.f32 %v3695, %v3710
    %v3716 = vmul.f32 %v3698, %v3711
    %v3717 = vmul.f32 %v3703, %v3712
    %v3718 = vmul.f32 %v3713, 0.044715
    %v3719 = vmul.f32 %v3714, 0.044715
    %v3720 = vmul.f32 %v3715, 0.044715
    %v3721 = vmul.f32 %v3716, 0.044715
    %v3722 = vmul.f32 %v3717, 0.044715
    %v3723 = vadd.f32 %v3687, %v3718
    %v3724 = vadd.f32 %v3690, %v3719
    %v3725 = vadd.f32 %v3695, %v3720
    %v3726 = vadd.f32 %v3698, %v3721
    %v3727 = vadd.f32 %v3703, %v3722
    %v3728 = vmul.f32 %v3723, 0.7978846
    %v3729 = vmul.f32 %v3724, 0.7978846
    %v3730 = vmul.f32 %v3725, 0.7978846
    %v3731 = vmul.f32 %v3726, 0.7978846
    %v3732 = vmul.f32 %v3727, 0.7978846
    %v3733 = vtanh.pop %v3728
    %v3734 = vtanh.pop %v3729
    %v3735 = vtanh.pop %v3730
    %v3736 = vtanh.pop %v3731
    %v3737 = vtanh.pop %v3732
    %v3738 = vadd.f32 %v3733, 1.0
    %v3739 = vadd.f32 %v3734, 1.0
    %v3740 = vadd.f32 %v3735, 1.0
    %v3741 = vadd.f32 %v3736, 1.0
    %v3742 = vadd.f32 %v3737, 1.0
    %v3743 = vmul.f32 %v3738, 0.5
    %v3744 = vmul.f32 %v3739, 0.5
    %v3745 = vmul.f32 %v3740, 0.5
    %v3746 = vmul.f32 %v3741, 0.5
    %v3747 = vmul.f32 %v3742, 0.5
    %v3748 = vmul.f32 %v3687, %v3743
    %v3749 = vmul.f32 %v3690, %v3744
    %v3750 = vmul.f32 %v3695, %v3745
    %v3751 = vmul.f32 %v3698, %v3746
    %v3752 = vmul.f32 %v3703, %v3747
    %v3753 = vpack.c.bf16 %v3749, %v3748
    %v3754 = vpack.c.bf16 %v3751, %v3750
    %v3755 = vpack.c.bf16 %v3752, %v3752
    %s3756 = scalar_lea.vmem %s6, 64
    %v3757 = vld [vmem:[%s3756] sm:$0xf]
    %v3758 = vld [vmem:[%s3756 + $0x4] sm:$0xf]
    %v3759 = vld [vmem:[%s3756 + $0x8] sm:$0xf]
    %v3760 = vld [vmem:[%s3756 + $0xc] sm:$0xf]
    %v3761 = vld [vmem:[%s3756 + $0x10] sm:$0xf]
    %v3762 = vld [vmem:[%s3756 + $0x14] sm:$0xf]
    %v3763 = vld [vmem:[%s3756 + $0x18] sm:$0xf]
    %v3764 = vld [vmem:[%s3756 + $0x1c] sm:$0xf]
    %v3765 = vld [vmem:[%s3756 + $0x20] sm:$0xf]
    %v3766 = vld [vmem:[%s3756 + $0x24] sm:$0xf]
    %v3767 = vld [vmem:[%s3756 + $0x28] sm:$0xf]
    %v3768 = vld [vmem:[%s3756 + $0x2c] sm:$0xf]
    %v3769 = vld [vmem:[%s3756 + $0x30] sm:$0xf]
    %v3770 = vld [vmem:[%s3756 + $0x34] sm:$0xf]
    %v3771 = vld [vmem:[%s3756 + $0x38] sm:$0xf]
    %v3772 = vld [vmem:[%s3756 + $0x3c] sm:$0xf]
    %v3773 = vlaneseq
    %v3774 = vshrl.u32 %v3773, 7
    %v3775 = vsub.s32 7, %v3774
    %v3776 = vrot.slane %v2064, %v3775
    %v3793 = vunpack.c.l.b16 %v3757
    %v3794 = vunpack.c.l.b16 %v3758
    %v3795 = vunpack.c.l.b16 %v3759
    %v3796 = vunpack.c.l.b16 %v3760
    %v3797 = vunpack.c.l.b16 %v3761
    %v3798 = vunpack.c.l.b16 %v3762
    %v3799 = vunpack.c.l.b16 %v3763
    %v3800 = vunpack.c.l.b16 %v3764
    %v3801 = vunpack.c.l.b16 %v3765
    %v3802 = vunpack.c.l.b16 %v3766
    %v3803 = vunpack.c.l.b16 %v3767
    %v3804 = vunpack.c.l.b16 %v3768
    %v3805 = vunpack.c.l.b16 %v3769
    %v3806 = vunpack.c.l.b16 %v3770
    %v3807 = vunpack.c.l.b16 %v3771
    %v3808 = vunpack.c.l.b16 %v3772
    %v3809 = vpack.c.b16 %v3794, %v3793
    %v3810 = vpack.c.b16 %v3796, %v3795
    %v3811 = vpack.c.b16 %v3798, %v3797
    %v3812 = vpack.c.b16 %v3800, %v3799
    %v3813 = vpack.c.b16 %v3802, %v3801
    %v3814 = vpack.c.b16 %v3804, %v3803
    %v3815 = vpack.c.b16 %v3806, %v3805
    %v3816 = vpack.c.b16 %v3808, %v3807
    %3825 = vmatprep.subr.bf16.mxu0 0
    %3826 = vmatpush1.bf16.msra.mxu0 %v3809
    %3827 = vmatprep.subr.bf16.mxu0 0
    %3828 = vmatpush1.bf16.msra.mxu0 %v3810
    %3829 = vmatprep.subr.bf16.mxu0 0
    %3830 = vmatpush1.bf16.msra.mxu0 %v3811
    %3831 = vmatprep.subr.bf16.mxu0 0
    %3832 = vmatpush1.bf16.msra.mxu0 %v3812
    %3833 = vmatprep.subr.bf16.mxu0 0
    %3834 = vmatpush1.bf16.msra.mxu0 %v3813
    %3835 = vmatprep.subr.bf16.mxu0 0
    %3836 = vmatpush1.bf16.msra.mxu0 %v3814
    %3837 = vmatprep.subr.bf16.mxu0 0
    %3838 = vmatpush1.bf16.msra.mxu0 %v3815
    %3839 = vmatprep.subr.bf16.mxu0 0
    %3840 = vmatpush1.bf16.msra.mxu0 %v3816
    %3841 = vmatprep.subr.bf16.mxu0 0
    %3842 = vmatpush1.bf16.msra.mxu0 0
    %3843 = vmatprep.subr.bf16.mxu0 0
    %3844 = vmatpush1.bf16.msra.mxu0 0
    %3845 = vmatprep.subr.bf16.mxu0 0
    %3846 = vmatpush1.bf16.msra.mxu0 0
    %3847 = vmatprep.subr.bf16.mxu0 0
    %3848 = vmatpush1.bf16.msra.mxu0 0
    %3849 = vmatprep.subr.bf16.mxu0 0
    %3850 = vmatpush1.bf16.msra.mxu0 0
    %3851 = vmatprep.subr.bf16.mxu0 0
    %3852 = vmatpush1.bf16.msra.mxu0 0
    %3853 = vmatprep.subr.bf16.mxu0 0
    %3854 = vmatpush1.bf16.msra.mxu0 0
    %3855 = vmatprep.subr.bf16.mxu0 0
    %3856 = vmatpush1.bf16.msra.mxu0 0
    %3857 = vmatprep.mubr.bf16.mxu0 0
    %3858 = vmatmul.mubr.bf16.gmra.mrb[0].mxu0 %v3753
    %v3859 = vpop.f32.mrb[0].mxu0
    %v3860 = vadd.f32 %v3776, %v3859
    %v3861 = vpop.f32.mrb[0].mxu0
    %v3862 = vpop.f32.mrb[0].mxu0
    %v3863 = vpop.f32.mrb[0].mxu0
    %3864 = vmatprep.mubr.bf16.mxu0 0
    %3865 = vmatmul.mubr.bf16.gmra.mrb[0].mxu0 %v3754
    %v3866 = vpop.f32.mrb[0].mxu0
    %v3867 = vadd.f32 %v3776, %v3866
    %v3868 = vpop.f32.mrb[0].mxu0
    %v3869 = vpop.f32.mrb[0].mxu0
    %v3870 = vpop.f32.mrb[0].mxu0
    %3871 = vmatprep.mubr.bf16.mxu0 0
    %3872 = vmatmul.mubr.bf16.gmra.mrb[0].mxu0 %v3755
    %v3873 = vpop.f32.mrb[0].mxu0
    %v3874 = vpop.f32.mrb[0].mxu0
    %v3875 = vpop.f32.mrb[0].mxu0
    %v3876 = vpop.f32.mrb[0].mxu0
    %3877 = vdwg.mxu0
    %v3878 = vadd.f32 %v3531, %v3860
    %v3879 = vadd.f32 %v3533, %v3867
    %v3880 = vld [vmem:[%s9] sm:$0x1]
    %v3881 = vld [vmem:[%s9 + $0x1] sm:$0x1]
    %v3882 = vld [vmem:[%s9 + $0x2] sm:$0x1]
    %v3883 = vsel %vm207, %v3878, %v3879
    %v3884 = vsel %vm249, %v3883, 0.0
    %3885 = vadd.xlane.f32.xlu0 %v3884
    %v3886 = vpop.xlane.xlu0 %3885
    %v3887 = vmul.f32 %v3886, %v253
    %v3888 = vsub.f32 %v3883, %v3887
    %v3889 = vmul.f32 %v3888, %v3888
    %v3890 = vsel %vm249, %v3889, 0.0
    %3891 = vadd.xlane.f32.xlu0 %v3890
    %v3892 = vpop.xlane.xlu0 %3891
    %v3893 = vmul.f32 %v3892, %v253
    %v3894 = vadd.f32 %v3893, 1e-06
    %v3895 = vrsqrt.pop %v3894
    %v3896 = vmul.f32 %v3888, %v3895
    %v3897 = vlaneseq
    %v3898 = vshrl.u32 %v3897, 7
    %v3899 = vsub.s32 0, %v3898
    %v3900 = vrot.slane %v3880, %v3899
    %v3901 = vmul.f32 %v3896, %v3900
    %v3902 = vlaneseq
    %v3903 = vshrl.u32 %v3902, 7
    %v3904 = vsub.s32 0, %v3903
    %v3905 = vrot.slane %v3881, %v3904
    %v3906 = vadd.f32 %v3901, %v3905
    %v3907 = vpack.c.bf16 %v3906, %v3906
    %v3908 = vld [vmem:[%s8] sm:$0xf]
    %v3909 = vld [vmem:[%s8 + $0x4] sm:$0xf]
    %v3910 = vld [vmem:[%s8 + $0x8] sm:$0xf]
    %v3911 = vld [vmem:[%s8 + $0xc] sm:$0xf]
    %v3912 = vlaneseq
    %v3913 = vshrl.u32 %v3912, 7
    %v3914 = vsub.s32 0, %v3913
    %v3915 = vrot.slane %v3882, %v3914
    %v3920 = vunpack.c.l.b16 %v3908
    %v3921 = vunpack.c.l.b16 %v3909
    %v3922 = vunpack.c.l.b16 %v3910
    %v3923 = vunpack.c.l.b16 %v3911
    %v3924 = vpack.c.b16 %v3921, %v3920
    %v3925 = vpack.c.b16 %v3923, %v3922
    %v3929 = vsel %vm236, %v3907, 0
    %3931 = vmatprep.subr.bf16.mxu0 0
    %3932 = vmatpush1.bf16.msra.mxu0 %v3924
    %3933 = vmatprep.subr.bf16.mxu0 0
    %3934 = vmatpush1.bf16.msra.mxu0 %v3925
    %3935 = vmatprep.subr.bf16.mxu0 0
    %3936 = vmatpush1.bf16.msra.mxu0 0
    %3937 = vmatprep.subr.bf16.mxu0 0
    %3938 = vmatpush1.bf16.msra.mxu0 0
    %3939 = vmatprep.subr.bf16.mxu0 0
    %3940 = vmatpush1.bf16.msra.mxu0 0
    %3941 = vmatprep.subr.bf16.mxu0 0
    %3942 = vmatpush1.bf16.msra.mxu0 0
    %3943 = vmatprep.subr.bf16.mxu0 0
    %3944 = vmatpush1.bf16.msra.mxu0 0
    %3945 = vmatprep.subr.bf16.mxu0 0
    %3946 = vmatpush1.bf16.msra.mxu0 0
    %3947 = vmatprep.subr.bf16.mxu0 0
    %3948 = vmatpush1.bf16.msra.mxu0 0
    %3949 = vmatprep.subr.bf16.mxu0 0
    %3950 = vmatpush1.bf16.msra.mxu0 0
    %3951 = vmatprep.subr.bf16.mxu0 0
    %3952 = vmatpush1.bf16.msra.mxu0 0
    %3953 = vmatprep.subr.bf16.mxu0 0
    %3954 = vmatpush1.bf16.msra.mxu0 0
    %3955 = vmatprep.subr.bf16.mxu0 0
    %3956 = vmatpush1.bf16.msra.mxu0 0
    %3957 = vmatprep.subr.bf16.mxu0 0
    %3958 = vmatpush1.bf16.msra.mxu0 0
    %3959 = vmatprep.subr.bf16.mxu0 0
    %3960 = vmatpush1.bf16.msra.mxu0 0
    %3961 = vmatprep.subr.bf16.mxu0 0
    %3962 = vmatpush1.bf16.msra.mxu0 0
    %3963 = vmatprep.mubr.bf16.mxu0 0
    %3964 = vmatmul.mubr.bf16.gmra.mrb[0].mxu0 %v3929
    %v3965 = vpop.f32.mrb[0].mxu0
    %v3966 = vadd.f32 %v3915, %v3965
    %v3967 = vpop.f32.mrb[0].mxu0
    %v3968 = vpop.f32.mrb[0].mxu0
    %v3969 = vpop.f32.mrb[0].mxu0
    %3970 = vdwg.mxu0
    %3971 = vst [vmem:[#allocation2] sm:$0x3] %v3966
    // Predicated region
    $region42: #{vit_forward.1} parent=1 // pred_check
      _
    $region43: #{vit_forward.1} parent=1 // pred_check_branch
      %3973 = sbr.rel (0) target = $region45
    $region44: #{vit_forward.1} parent=1 // pred_region
      %s3975 = ssub.s32 32, 32
      %3976 = vsyncadd [#allocation3], %s3975
      %s3978 = sshll.u32 [#allocation2], 4
      %s3979 = int_to_ptr.vmem [resolvable:$true] %s3978
      %3981 = dma.vmem_to_hbm [thread:$0]  %s3979, 32, %s10, [#allocation3]
    $region45: #{vit_forward.1} parent=1 // pred_fallthru
      _
    // Predicated region
    $region46: #{vit_forward.1} parent=1 // pred_check
      _
    $region47: #{vit_forward.1} parent=1 // pred_check_branch
      %3983 = sbr.rel (0) target = $region49
    $region48: #{vit_forward.1} parent=1 // pred_region
      %3984 = dma.done [#allocation3], 32
    $region49: #{vit_forward.1} parent=1 // pred_fallthru
      _
    %3985 = vsyncpa [#allocation3], 1

</llo_original>
